<compile_context>
chip_gen: v6e
topology: v6e:2x2x1
jax: 0.10.0
libtpu: 0.0.40
codegen_flags: <defaults>
</compile_context>

<pallas_src>
import functools

import jax
import jax.numpy as jnp
from jax.experimental import pallas as pl
from jax.experimental.pallas import tpu as pltpu


def _swish(z):
    return z * jax.nn.sigmoid(z)


def _round_up(v, mult):
    return ((v + mult - 1) // mult) * mult


def _device_kind():
    try:
        return jax.devices()[0].device_kind.lower()
    except Exception:
        return ""


def default_compute_dtype():
    """bf16 element-wise path on chips with a bf16 VPU/EUP (v6e/v7x), f32 otherwise."""
    kind = _device_kind()
    return jnp.bfloat16 if ("v6" in kind or "v7" in kind) else jnp.float32


def _vmem_limit_bytes():
    """Per-generation scoped-VMEM limit (review item: don't use one constant)."""
    kind = _device_kind()
    if "v7" in kind:
        return 48 * 1024 * 1024          # headroom under v7x's 64 MiB physical VMEM
    if "v5 lite" in kind or "v5e" in kind or "v6" in kind:
        return 64 * 1024 * 1024          # 128 MiB physical on v5e / v6e
    return 32 * 1024 * 1024


def _resnet_swish_kernel(x_ref,
                         w1_ref, b1_ref, w2_ref, b2_ref, w3_ref, b3_ref,
                         w4_ref, b4_ref, w5_ref, b5_ref, w6_ref, b6_ref,
                         wout_ref, o_ref, s_ref, *, boundary):
    cdt = s_ref.dtype                                  # compute dtype (f32 or bf16)
    x = x_ref[...]                                     # (TN, dim_p) f32, zero-padded cols

    # Residual shortcut s = [x | 0]: one zero-fill of the VMEM scratch + one masked
    # store of x into its first dim_p lanes (replaces the per-column select loop and
    # its (TN, m_pad) iota).  Re-zeroed every step: safe under megacore sharding.
    s_ref[...] = jnp.zeros_like(s_ref)
    s_ref[:, 0:x.shape[1]] = x.astype(cdt)

    def lin(y, w_ref, b_ref):
        # bf16 x bf16 MXU matmul, result emitted in the compute dtype.  When
        # cdt == bf16 the astype is a no-op, so there is no per-layer cast pass.
        return jnp.dot(y.astype(jnp.bfloat16), w_ref[...],
                       preferred_element_type=cdt) + b_ref[...]

    # fc1 on the MXU (K = dim_p is tiny and the MXU is otherwise idle; cost does not
    # grow with dim the way the old rank-1 VPU loop did).
    y = _swish(lin(x, w1_ref, b1_ref))
    # block 1
    y = _swish(lin(y, w2_ref, b2_ref)) + s_ref[...]
    s = y
    # block 2
    y = _swish(lin(y, w3_ref, b3_ref))
    y = _swish(lin(y, w4_ref, b4_ref)) + s
    s = y
    # block 3
    y = _swish(lin(y, w5_ref, b5_ref))
    y = _swish(lin(y, w6_ref, b6_ref)) + s

    # outlayer (m_pad -> 1, no bias): VPU multiply + lane reduction.  wout is f32, so
    # the reduction accumulates in f32 even on the bf16 element-wise path.
    r = jnp.sum(y * wout_ref[...], axis=-1, keepdims=True)        # (TN, 1) f32

    if boundary == 'none':
        out = r
    elif boundary == 'net_v':
        x0 = x[:, 0:1]
        x1 = x[:, 1:2]
        out = jnp.cos(jnp.pi / 2 * x0) * jnp.cos(jnp.pi / 2 * x1) * r
    elif boundary == 'net_u':
        x0 = x[:, 0:1]
        x1 = x[:, 1:2]
        # Padded feature columns are exactly 0, so summing x[:, 2:dim_p] equals the
        # torch sum over x[:, 2:dim] (and equals 0 for dim == 2).
        sum_w_2 = jnp.sum(x[:, 2:], axis=1, keepdims=True) ** 2
        # NOTE: exp(2*x0) may overflow to +inf for large x0; inf > 0 still yields
        # base = 1.0, matching torch's g(., if_cuda=True).  Do not clamp.
        arg = jnp.exp(2.0 * x0) - 4.0 * x1 * (1.0 + jnp.exp(-sum_w_2))
        base = jnp.where(arg > 0, 1.0, 0.0)
        ss = jnp.sin(jnp.pi / 2 * x0) * jnp.sin(jnp.pi / 2 * x1)
        out = ss * r + base * (1.0 - ss)
    else:
        raise NotImplementedError("boundary_control_type='cube' returns None in PyTorch")
    o_ref[...] = out.astype(o_ref.dtype)


def init_params(key, m, dim, compute_dtype=None):
    """PyTorch-style nn.Linear init U(-1/sqrt(fan_in), 1/sqrt(fan_in)), packed for the kernel.

    * hidden width m is zero-padded to a multiple of 128 lanes (exact: padded
      columns stay identically 0 through every layer),
    * the input dim is zero-padded to a multiple of 16 so fc1 is a clean MXU dot,
    * all weight matrices are pre-transposed (in_features, out_features) and stored
      in bfloat16 (MXU-native), biases in `compute_dtype`, wout as an f32 row.
    compute_dtype: jnp.float32 (safe everywhere, default on v5e / unknown chips) or
    jnp.bfloat16 (recommended on v6e/v7x which have a bf16 VPU/EUP path).
    """
    if compute_dtype is None:
        compute_dtype = default_compute_dtype()
    cdt = compute_dtype
    m_pad = _round_up(m, 128)
    dim_p = _round_up(dim, 16)
    keys = jax.random.split(key, 14)

    def linear(kw, kb, fan_in, fan_out, bias=True):
        bound = float(fan_in) ** -0.5
        w = jax.random.uniform(kw, (fan_in, fan_out), jnp.float32, -bound, bound)
        b = (jax.random.uniform(kb, (1, fan_out), jnp.float32, -bound, bound)
             if bias else None)
        return w, b

    def pad2(a, rows, cols):
        return jnp.zeros((rows, cols), a.dtype).at[:a.shape[0], :a.shape[1]].set(a)

    params = {}
    w1, b1 = linear(keys[0], keys[1], dim, m)
    params['w1'] = pad2(w1, dim_p, m_pad).astype(jnp.bfloat16)     # MXU operand
    params['b1'] = pad2(b1, 1, m_pad).astype(cdt)
    for i in range(2, 7):
        w, b = linear(keys[2 * i - 2], keys[2 * i - 1], m, m)
        params[f'w{i}'] = pad2(w, m_pad, m_pad).astype(jnp.bfloat16)
        params[f'b{i}'] = pad2(b, 1, m_pad).astype(cdt)
    wout, _ = linear(keys[12], keys[13], m, 1, bias=False)          # (m, 1)
    params['wout'] = pad2(wout.T, 1, m_pad)                         # f32 row, f32 reduce
    return params


def resnet_swish_forward(x, params, boundary_control_type='none', *, tn=512):
    if boundary_control_type not in ('none', 'net_u', 'net_v'):
        # TODO(synk): boundary_control_type='cube' falls through every branch of the
        # PyTorch forward and returns None; there is no output to emit.
        raise NotImplementedError(
            "boundary_control_type='cube' returns None in the PyTorch forward")
    n, dim = x.shape
    dim_p, m_pad = params['w1'].shape
    cdt = params['b1'].dtype
    assert dim <= dim_p

    n_tiles = pl.cdiv(n, tn)
    n_pad = n_tiles * tn
    # Zero-pad batch rows to a tile multiple and features to dim_p lanes (exact).
    x = jnp.pad(x, ((0, n_pad - n), (0, dim_p - dim)))

    operands = (x,
                params['w1'], params['b1'], params['w2'], params['b2'],
                params['w3'], params['b3'], params['w4'], params['b4'],
                params['w5'], params['b5'], params['w6'], params['b6'],
                params['wout'])

    x_spec = pl.BlockSpec((tn, dim_p), lambda i: (i, 0))
    # Full-array weight blocks with a constant index_map -> fetched once, VMEM-resident.
    w_specs = [pl.BlockSpec(op.shape, lambda i: (0, 0)) for op in operands[1:]]
    # Narrow (tn, 1) output kept: writeback is ~0.1% of per-row work; a lane-dense
    # (1, tn) layout would need an in-kernel column->row relayout.
    out_spec = pl.BlockSpec((tn, 1), lambda i: (i, 0))

    flops = 2 * n_pad * (dim_p * m_pad + 5 * m_pad * m_pad + m_pad)
    transcendentals = 6 * n_pad * m_pad + 4 * n_pad
    bytes_accessed = sum(int(op.size) * op.dtype.itemsize for op in operands) + n_pad * 4

    kernel = functools.partial(_resnet_swish_kernel, boundary=boundary_control_type)
    out = pl.pallas_call(
        kernel,
        out_shape=jax.ShapeDtypeStruct((n_pad, 1), jnp.float32),
        grid=(n_tiles,),
        in_specs=[x_spec] + w_specs,
        out_specs=out_spec,
        scratch_shapes=[pltpu.VMEM((tn, m_pad), cdt)],     # shortcut s = [x | 0]
        compiler_params=pltpu.CompilerParams(
            # On v7x keep n_tiles >= 2 (ideally even) so both TensorCores get work.
            dimension_semantics=("parallel",),
            vmem_limit_bytes=_vmem_limit_bytes()),
        cost_estimate=pl.CostEstimate(
            flops=flops,
            transcendentals=transcendentals,
            bytes_accessed=bytes_accessed),
    )(*operands)
    return out[:n, 0]                                      # matches torch .squeeze(1)


def resnet_swish_reference(x, params, boundary_control_type='none'):
    """Plain-JAX mirror of the kernel math (same dtypes / padding) for correctness checks."""
    dim_p, m_pad = params['w1'].shape
    n, dim = x.shape
    cdt = params['b1'].dtype
    xp = jnp.pad(x, ((0, 0), (0, dim_p - dim)))
    s = jnp.pad(x, ((0, 0), (0, m_pad - dim))).astype(cdt)

    def lin(y, w, b):
        return jnp.dot(y.astype(jnp.bfloat16), w, preferred_element_type=cdt) + b

    y = _swish(lin(xp, params['w1'], params['b1']))
    y = _swish(lin(y, params['w2'], params['b2'])) + s
    s = y
    y = _swish(lin(y, params['w3'], params['b3']))
    y = _swish(lin(y, params['w4'], params['b4'])) + s
    s = y
    y = _swish(lin(y, params['w5'], params['b5']))
    y = _swish(lin(y, params['w6'], params['b6'])) + s
    r = jnp.sum(y * params['wout'], axis=-1)               # (N,) f32

    if boundary_control_type == 'none':
        return r
    x0, x1 = x[:, 0], x[:, 1]
    if boundary_control_type == 'net_v':
        return jnp.cos(jnp.pi / 2 * x0) * jnp.cos(jnp.pi / 2 * x1) * r
    if boundary_control_type == 'net_u':
        sw2 = jnp.sum(x[:, 2:], axis=1) ** 2               # empty slice -> 0 (torch semantics)
        base = jnp.where(jnp.exp(2 * x0) - 4 * x1 * (1 + jnp.exp(-sw2)) > 0, 1.0, 0.0)
        ss = jnp.sin(jnp.pi / 2 * x0) * jnp.sin(jnp.pi / 2 * x1)
        return ss * r + base * (1 - ss)
    raise NotImplementedError


if __name__ == "__main__":
    ok = True
    # (m, dim, batch, compute_dtype): small shapes exercising
    #   - multi-tile grid + dim=2 (empty net_u sum term) ......... (32, 2, 600, f32)
    #   - dim > 2 net_u sum term, batch padding, m_pad=256 ....... (160, 6, 40, f32)
    #   - bf16 element-wise path (recommended on v6e/v7x) ........ (64, 16, 600, bf16)
    configs = [(32, 2, 600, jnp.float32),
               (160, 6, 40, jnp.float32),
               (64, 16, 600, jnp.bfloat16)]
    for (m, dim, batch, cdt) in configs:
        key = jax.random.PRNGKey(0)
        pkey, xkey = jax.random.split(key)
        params = init_params(pkey, m, dim, compute_dtype=cdt)
        x = jax.random.normal(xkey, (batch, dim), jnp.float32)
        for btype in ('none', 'net_u', 'net_v'):
            out = jax.block_until_ready(
                resnet_swish_forward(x, params, boundary_control_type=btype))
            ref = resnet_swish_reference(x, params, boundary_control_type=btype)
            assert out.shape == (batch,)
            if cdt == jnp.float32:
                good = bool(jnp.allclose(out, ref, atol=5e-3, rtol=5e-3))
            else:
                # bf16 element-wise path: Mosaic vs XLA bf16 transcendentals differ by a
                # few ulps; a relative-L2 gate still catches any wiring/layout bug.
                err = jnp.linalg.norm(out - ref) / (jnp.linalg.norm(ref) + 1e-6)
                good = bool(err < 5e-2)
            ok = ok and good

    print("KERNEL_OK" if ok else "MISMATCH")
</pallas_src>

<mosaic_0001>
module attributes {stable_mosaic.version = 11 : i64} {
  func.func @_resnet_swish_kernel(%arg0: i32, %arg1: memref<512x16xf32, #tpu.memory_space<vmem>>, %arg2: memref<16x128xbf16, #tpu.memory_space<vmem>>, %arg3: memref<1x128xf32, #tpu.memory_space<vmem>>, %arg4: memref<128x128xbf16, #tpu.memory_space<vmem>>, %arg5: memref<1x128xf32, #tpu.memory_space<vmem>>, %arg6: memref<128x128xbf16, #tpu.memory_space<vmem>>, %arg7: memref<1x128xf32, #tpu.memory_space<vmem>>, %arg8: memref<128x128xbf16, #tpu.memory_space<vmem>>, %arg9: memref<1x128xf32, #tpu.memory_space<vmem>>, %arg10: memref<128x128xbf16, #tpu.memory_space<vmem>>, %arg11: memref<1x128xf32, #tpu.memory_space<vmem>>, %arg12: memref<128x128xbf16, #tpu.memory_space<vmem>>, %arg13: memref<1x128xf32, #tpu.memory_space<vmem>>, %arg14: memref<1x128xf32, #tpu.memory_space<vmem>>, %arg15: memref<512x1xf32, #tpu.memory_space<vmem>>, %arg16: memref<512x128xf32, #tpu.memory_space<vmem>>) attributes {dimension_semantics = [#tpu.dimension_semantics<parallel>], iteration_bounds = array<i64: 2>, scalar_prefetch = 0 : i64, scratch_operands = 1 : i64, tpu.core_type = #tpu.core_type<tc>, window_params = [{transform_indices = @transform_0, window_bounds = array<i64: 512, 16>}, {pipeline_mode = #tpu.pipeline_mode<synchronous>, transform_indices = @transform_1, window_bounds = array<i64: 16, 128>}, {pipeline_mode = #tpu.pipeline_mode<synchronous>, transform_indices = @transform_2, window_bounds = array<i64: 1, 128>}, {pipeline_mode = #tpu.pipeline_mode<synchronous>, transform_indices = @transform_3, window_bounds = array<i64: 128, 128>}, {pipeline_mode = #tpu.pipeline_mode<synchronous>, transform_indices = @transform_4, window_bounds = array<i64: 1, 128>}, {pipeline_mode = #tpu.pipeline_mode<synchronous>, transform_indices = @transform_5, window_bounds = array<i64: 128, 128>}, {pipeline_mode = #tpu.pipeline_mode<synchronous>, transform_indices = @transform_6, window_bounds = array<i64: 1, 128>}, {pipeline_mode = #tpu.pipeline_mode<synchronous>, transform_indices = @transform_7, window_bounds = array<i64: 128, 128>}, {pipeline_mode = #tpu.pipeline_mode<synchronous>, transform_indices = @transform_8, window_bounds = array<i64: 1, 128>}, {pipeline_mode = #tpu.pipeline_mode<synchronous>, transform_indices = @transform_9, window_bounds = array<i64: 128, 128>}, {pipeline_mode = #tpu.pipeline_mode<synchronous>, transform_indices = @transform_10, window_bounds = array<i64: 1, 128>}, {pipeline_mode = #tpu.pipeline_mode<synchronous>, transform_indices = @transform_11, window_bounds = array<i64: 128, 128>}, {pipeline_mode = #tpu.pipeline_mode<synchronous>, transform_indices = @transform_12, window_bounds = array<i64: 1, 128>}, {pipeline_mode = #tpu.pipeline_mode<synchronous>, transform_indices = @transform_13, window_bounds = array<i64: 1, 128>}, {transform_indices = @transform_14, window_bounds = array<i64: 512, 1>}]} {
    %c0 = arith.constant 0 : index
    %c0_0 = arith.constant 0 : index
    %0 = vector.load %arg1[%c0, %c0_0] : memref<512x16xf32, #tpu.memory_space<vmem>>, vector<512x16xf32>
    %cst = arith.constant 0.000000e+00 : f32
    %1 = vector.broadcast %cst : f32 to vector<512x128xf32>
    %c0_1 = arith.constant 0 : index
    %c0_2 = arith.constant 0 : index
    %2 = vector.load %arg16[%c0_1, %c0_2] : memref<512x128xf32, #tpu.memory_space<vmem>>, vector<512x128xf32>
    tpu.vector_store %arg16[%c0_1, %c0_2], %1 {strides = array<i32>} : memref<512x128xf32, #tpu.memory_space<vmem>>, vector<512x128xf32>,
    %c0_3 = arith.constant 0 : index
    %c0_4 = arith.constant 0 : index
    %3 = vector.load %arg16[%c0_3, %c0_4] : memref<512x128xf32, #tpu.memory_space<vmem>>, vector<512x16xf32>
    tpu.vector_store %arg16[%c0_3, %c0_4], %0 {strides = array<i32>} : memref<512x128xf32, #tpu.memory_space<vmem>>, vector<512x16xf32>,
    %4 = arith.truncf %0 : vector<512x16xf32> to vector<512x16xbf16>
    %c0_5 = arith.constant 0 : index
    %c0_6 = arith.constant 0 : index
    %5 = vector.load %arg2[%c0_5, %c0_6] : memref<16x128xbf16, #tpu.memory_space<vmem>>, vector<16x128xbf16>
    %cst_7 = arith.constant dense<0.000000e+00> : vector<512x128xf32>
    %6 = tpu.matmul %4, %5, %cst_7 {dimension_numbers = #tpu.dot_dimension_numbers<[1], [0], [0], [1], [0, 0, 1, 1], [], []>} : vector<512x16xbf16>, vector<16x128xbf16>, vector<512x128xf32> -> vector<512x128xf32>
    %c0_8 = arith.constant 0 : index
    %c0_9 = arith.constant 0 : index
    %7 = vector.load %arg3[%c0_8, %c0_9] : memref<1x128xf32, #tpu.memory_space<vmem>>, vector<1x128xf32>
    %8 = vector.broadcast %7 : vector<1x128xf32> to vector<512x128xf32>
    %9 = arith.addf %6, %8 : vector<512x128xf32>
    %10 = arith.negf %9 : vector<512x128xf32>
    %11 = math.exp %10 : vector<512x128xf32>
    %cst_10 = arith.constant 1.000000e+00 : f32
    %12 = vector.broadcast %cst_10 : f32 to vector<512x128xf32>
    %13 = arith.addf %12, %11 : vector<512x128xf32>
    %14 = arith.divf %12, %13 : vector<512x128xf32>
    %15 = arith.mulf %9, %14 : vector<512x128xf32>
    %16 = arith.truncf %15 : vector<512x128xf32> to vector<512x128xbf16>
    %c0_11 = arith.constant 0 : index
    %c0_12 = arith.constant 0 : index
    %17 = vector.load %arg4[%c0_11, %c0_12] : memref<128x128xbf16, #tpu.memory_space<vmem>>, vector<128x128xbf16>
    %cst_13 = arith.constant dense<0.000000e+00> : vector<512x128xf32>
    %18 = tpu.matmul %16, %17, %cst_13 {dimension_numbers = #tpu.dot_dimension_numbers<[1], [0], [0], [1], [0, 0, 1, 1], [], []>} : vector<512x128xbf16>, vector<128x128xbf16>, vector<512x128xf32> -> vector<512x128xf32>
    %c0_14 = arith.constant 0 : index
    %c0_15 = arith.constant 0 : index
    %19 = vector.load %arg5[%c0_14, %c0_15] : memref<1x128xf32, #tpu.memory_space<vmem>>, vector<1x128xf32>
    %20 = vector.broadcast %19 : vector<1x128xf32> to vector<512x128xf32>
    %21 = arith.addf %18, %20 : vector<512x128xf32>
    %22 = arith.negf %21 : vector<512x128xf32>
    %23 = math.exp %22 : vector<512x128xf32>
    %cst_16 = arith.constant 1.000000e+00 : f32
    %24 = vector.broadcast %cst_16 : f32 to vector<512x128xf32>
    %25 = arith.addf %24, %23 : vector<512x128xf32>
    %26 = arith.divf %24, %25 : vector<512x128xf32>
    %27 = arith.mulf %21, %26 : vector<512x128xf32>
    %c0_17 = arith.constant 0 : index
    %c0_18 = arith.constant 0 : index
    %28 = vector.load %arg16[%c0_17, %c0_18] : memref<512x128xf32, #tpu.memory_space<vmem>>, vector<512x128xf32>
    %29 = arith.addf %27, %28 : vector<512x128xf32>
    %30 = arith.truncf %29 : vector<512x128xf32> to vector<512x128xbf16>
    %c0_19 = arith.constant 0 : index
    %c0_20 = arith.constant 0 : index
    %31 = vector.load %arg6[%c0_19, %c0_20] : memref<128x128xbf16, #tpu.memory_space<vmem>>, vector<128x128xbf16>
    %cst_21 = arith.constant dense<0.000000e+00> : vector<512x128xf32>
    %32 = tpu.matmul %30, %31, %cst_21 {dimension_numbers = #tpu.dot_dimension_numbers<[1], [0], [0], [1], [0, 0, 1, 1], [], []>} : vector<512x128xbf16>, vector<128x128xbf16>, vector<512x128xf32> -> vector<512x128xf32>
    %c0_22 = arith.constant 0 : index
    %c0_23 = arith.constant 0 : index
    %33 = vector.load %arg7[%c0_22, %c0_23] : memref<1x128xf32, #tpu.memory_space<vmem>>, vector<1x128xf32>
    %34 = vector.broadcast %33 : vector<1x128xf32> to vector<512x128xf32>
    %35 = arith.addf %32, %34 : vector<512x128xf32>
    %36 = arith.negf %35 : vector<512x128xf32>
    %37 = math.exp %36 : vector<512x128xf32>
    %cst_24 = arith.constant 1.000000e+00 : f32
    %38 = vector.broadcast %cst_24 : f32 to vector<512x128xf32>
    %39 = arith.addf %38, %37 : vector<512x128xf32>
    %40 = arith.divf %38, %39 : vector<512x128xf32>
    %41 = arith.mulf %35, %40 : vector<512x128xf32>
    %42 = arith.truncf %41 : vector<512x128xf32> to vector<512x128xbf16>
    %c0_25 = arith.constant 0 : index
    %c0_26 = arith.constant 0 : index
    %43 = vector.load %arg8[%c0_25, %c0_26] : memref<128x128xbf16, #tpu.memory_space<vmem>>, vector<128x128xbf16>
    %cst_27 = arith.constant dense<0.000000e+00> : vector<512x128xf32>
    %44 = tpu.matmul %42, %43, %cst_27 {dimension_numbers = #tpu.dot_dimension_numbers<[1], [0], [0], [1], [0, 0, 1, 1], [], []>} : vector<512x128xbf16>, vector<128x128xbf16>, vector<512x128xf32> -> vector<512x128xf32>
    %c0_28 = arith.constant 0 : index
    %c0_29 = arith.constant 0 : index
    %45 = vector.load %arg9[%c0_28, %c0_29] : memref<1x128xf32, #tpu.memory_space<vmem>>, vector<1x128xf32>
    %46 = vector.broadcast %45 : vector<1x128xf32> to vector<512x128xf32>
    %47 = arith.addf %44, %46 : vector<512x128xf32>
    %48 = arith.negf %47 : vector<512x128xf32>
    %49 = math.exp %48 : vector<512x128xf32>
    %cst_30 = arith.constant 1.000000e+00 : f32
    %50 = vector.broadcast %cst_30 : f32 to vector<512x128xf32>
    %51 = arith.addf %50, %49 : vector<512x128xf32>
    %52 = arith.divf %50, %51 : vector<512x128xf32>
    %53 = arith.mulf %47, %52 : vector<512x128xf32>
    %54 = arith.addf %53, %29 : vector<512x128xf32>
    %55 = arith.truncf %54 : vector<512x128xf32> to vector<512x128xbf16>
    %c0_31 = arith.constant 0 : index
    %c0_32 = arith.constant 0 : index
    %56 = vector.load %arg10[%c0_31, %c0_32] : memref<128x128xbf16, #tpu.memory_space<vmem>>, vector<128x128xbf16>
    %cst_33 = arith.constant dense<0.000000e+00> : vector<512x128xf32>
    %57 = tpu.matmul %55, %56, %cst_33 {dimension_numbers = #tpu.dot_dimension_numbers<[1], [0], [0], [1], [0, 0, 1, 1], [], []>} : vector<512x128xbf16>, vector<128x128xbf16>, vector<512x128xf32> -> vector<512x128xf32>
    %c0_34 = arith.constant 0 : index
    %c0_35 = arith.constant 0 : index
    %58 = vector.load %arg11[%c0_34, %c0_35] : memref<1x128xf32, #tpu.memory_space<vmem>>, vector<1x128xf32>
    %59 = vector.broadcast %58 : vector<1x128xf32> to vector<512x128xf32>
    %60 = arith.addf %57, %59 : vector<512x128xf32>
    %61 = arith.negf %60 : vector<512x128xf32>
    %62 = math.exp %61 : vector<512x128xf32>
    %cst_36 = arith.constant 1.000000e+00 : f32
    %63 = vector.broadcast %cst_36 : f32 to vector<512x128xf32>
    %64 = arith.addf %63, %62 : vector<512x128xf32>
    %65 = arith.divf %63, %64 : vector<512x128xf32>
    %66 = arith.mulf %60, %65 : vector<512x128xf32>
    %67 = arith.truncf %66 : vector<512x128xf32> to vector<512x128xbf16>
    %c0_37 = arith.constant 0 : index
    %c0_38 = arith.constant 0 : index
    %68 = vector.load %arg12[%c0_37, %c0_38] : memref<128x128xbf16, #tpu.memory_space<vmem>>, vector<128x128xbf16>
    %cst_39 = arith.constant dense<0.000000e+00> : vector<512x128xf32>
    %69 = tpu.matmul %67, %68, %cst_39 {dimension_numbers = #tpu.dot_dimension_numbers<[1], [0], [0], [1], [0, 0, 1, 1], [], []>} : vector<512x128xbf16>, vector<128x128xbf16>, vector<512x128xf32> -> vector<512x128xf32>
    %c0_40 = arith.constant 0 : index
    %c0_41 = arith.constant 0 : index
    %70 = vector.load %arg13[%c0_40, %c0_41] : memref<1x128xf32, #tpu.memory_space<vmem>>, vector<1x128xf32>
    %71 = vector.broadcast %70 : vector<1x128xf32> to vector<512x128xf32>
    %72 = arith.addf %69, %71 : vector<512x128xf32>
    %73 = arith.negf %72 : vector<512x128xf32>
    %74 = math.exp %73 : vector<512x128xf32>
    %cst_42 = arith.constant 1.000000e+00 : f32
    %75 = vector.broadcast %cst_42 : f32 to vector<512x128xf32>
    %76 = arith.addf %75, %74 : vector<512x128xf32>
    %77 = arith.divf %75, %76 : vector<512x128xf32>
    %78 = arith.mulf %72, %77 : vector<512x128xf32>
    %79 = arith.addf %78, %54 : vector<512x128xf32>
    %c0_43 = arith.constant 0 : index
    %c0_44 = arith.constant 0 : index
    %80 = vector.load %arg14[%c0_43, %c0_44] : memref<1x128xf32, #tpu.memory_space<vmem>>, vector<1x128xf32>
    %81 = vector.broadcast %80 : vector<1x128xf32> to vector<512x128xf32>
    %82 = arith.mulf %79, %81 : vector<512x128xf32>
    %cst_45 = arith.constant dense<0.000000e+00> : vector<512xf32>
    %83 = vector.multi_reduction <add>, %82, %cst_45 [1] : vector<512x128xf32> to vector<512xf32>
    %84 = vector.shape_cast %83 : vector<512xf32> to vector<512x1xf32>
    %c0_46 = arith.constant 0 : index
    %c0_47 = arith.constant 0 : index
    %85 = vector.load %arg15[%c0_46, %c0_47] : memref<512x1xf32, #tpu.memory_space<vmem>>, vector<512x1xf32>
    tpu.vector_store %arg15[%c0_46, %c0_47], %84 {strides = array<i32>} : memref<512x1xf32, #tpu.memory_space<vmem>>, vector<512x1xf32>,
    return
  }
  func.func @transform_0(%arg0: i32) -> (i32, i32) {
    %c0_i32 = arith.constant 0 : i32
    %c0_i32_0 = arith.constant 0 : i32
    return %arg0, %c0_i32 : i32, i32
  }
  func.func @transform_1(%arg0: i32) -> (i32, i32) {
    %c0_i32 = arith.constant 0 : i32
    %c0_i32_0 = arith.constant 0 : i32
    %c0_i32_1 = arith.constant 0 : i32
    return %c0_i32, %c0_i32_0 : i32, i32
  }
  func.func @transform_2(%arg0: i32) -> (i32, i32) {
    %c0_i32 = arith.constant 0 : i32
    %c0_i32_0 = arith.constant 0 : i32
    %c0_i32_1 = arith.constant 0 : i32
    return %c0_i32, %c0_i32_0 : i32, i32
  }
  func.func @transform_3(%arg0: i32) -> (i32, i32) {
    %c0_i32 = arith.constant 0 : i32
    %c0_i32_0 = arith.constant 0 : i32
    %c0_i32_1 = arith.constant 0 : i32
    return %c0_i32, %c0_i32_0 : i32, i32
  }
  func.func @transform_4(%arg0: i32) -> (i32, i32) {
    %c0_i32 = arith.constant 0 : i32
    %c0_i32_0 = arith.constant 0 : i32
    %c0_i32_1 = arith.constant 0 : i32
    return %c0_i32, %c0_i32_0 : i32, i32
  }
  func.func @transform_5(%arg0: i32) -> (i32, i32) {
    %c0_i32 = arith.constant 0 : i32
    %c0_i32_0 = arith.constant 0 : i32
    %c0_i32_1 = arith.constant 0 : i32
    return %c0_i32, %c0_i32_0 : i32, i32
  }
  func.func @transform_6(%arg0: i32) -> (i32, i32) {
    %c0_i32 = arith.constant 0 : i32
    %c0_i32_0 = arith.constant 0 : i32
    %c0_i32_1 = arith.constant 0 : i32
    return %c0_i32, %c0_i32_0 : i32, i32
  }
  func.func @transform_7(%arg0: i32) -> (i32, i32) {
    %c0_i32 = arith.constant 0 : i32
    %c0_i32_0 = arith.constant 0 : i32
    %c0_i32_1 = arith.constant 0 : i32
    return %c0_i32, %c0_i32_0 : i32, i32
  }
  func.func @transform_8(%arg0: i32) -> (i32, i32) {
    %c0_i32 = arith.constant 0 : i32
    %c0_i32_0 = arith.constant 0 : i32
    %c0_i32_1 = arith.constant 0 : i32
    return %c0_i32, %c0_i32_0 : i32, i32
  }
  func.func @transform_9(%arg0: i32) -> (i32, i32) {
    %c0_i32 = arith.constant 0 : i32
    %c0_i32_0 = arith.constant 0 : i32
    %c0_i32_1 = arith.constant 0 : i32
    return %c0_i32, %c0_i32_0 : i32, i32
  }
  func.func @transform_10(%arg0: i32) -> (i32, i32) {
    %c0_i32 = arith.constant 0 : i32
    %c0_i32_0 = arith.constant 0 : i32
    %c0_i32_1 = arith.constant 0 : i32
    return %c0_i32, %c0_i32_0 : i32, i32
  }
  func.func @transform_11(%arg0: i32) -> (i32, i32) {
    %c0_i32 = arith.constant 0 : i32
    %c0_i32_0 = arith.constant 0 : i32
    %c0_i32_1 = arith.constant 0 : i32
    return %c0_i32, %c0_i32_0 : i32, i32
  }
  func.func @transform_12(%arg0: i32) -> (i32, i32) {
    %c0_i32 = arith.constant 0 : i32
    %c0_i32_0 = arith.constant 0 : i32
    %c0_i32_1 = arith.constant 0 : i32
    return %c0_i32, %c0_i32_0 : i32, i32
  }
  func.func @transform_13(%arg0: i32) -> (i32, i32) {
    %c0_i32 = arith.constant 0 : i32
    %c0_i32_0 = arith.constant 0 : i32
    %c0_i32_1 = arith.constant 0 : i32
    return %c0_i32, %c0_i32_0 : i32, i32
  }
  func.func @transform_14(%arg0: i32) -> (i32, i32) {
    %c0_i32 = arith.constant 0 : i32
    %c0_i32_0 = arith.constant 0 : i32
    return %arg0, %c0_i32 : i32, i32
  }
}

</mosaic_0001>

<llo_original>
// kernel: tpu_custom_call.1
$region0: #{tpu_custom_call.1}
  #allocation0 [shape = 'u32[]', space=smem, size = 0x4, offset = 0x4, fixed_abs, tag = 'smem constant byte address 0x4 - core index']
  #allocation1 [shape = 'u32[144,128]{1,0:T(1,128)}', space=vmem, size = 0x12000, scoped, tag = 'internal scratch']
  #allocation2 [shape = 'f32[512,128]{1,0:T(8,128)}', space=vmem, size = 0x40000, scoped, tag = 'scratch operand']
  %s0 = inlined_call_operand.vmem [shape: f32[1024,16], index: 0, kind: input, shape index: {}]
  %s1 = inlined_call_operand.vmem [shape: bf16[16,128], index: 1, kind: input, shape index: {}]
  %s2 = inlined_call_operand.vmem [shape: f32[1,128], index: 2, kind: input, shape index: {}]
  %s3 = inlined_call_operand.vmem [shape: bf16[128,128], index: 3, kind: input, shape index: {}]
  %s4 = inlined_call_operand.vmem [shape: f32[1,128], index: 4, kind: input, shape index: {}]
  %s5 = inlined_call_operand.vmem [shape: bf16[128,128], index: 5, kind: input, shape index: {}]
  %s6 = inlined_call_operand.vmem [shape: f32[1,128], index: 6, kind: input, shape index: {}]
  %s7 = inlined_call_operand.vmem [shape: bf16[128,128], index: 7, kind: input, shape index: {}]
  %s8 = inlined_call_operand.vmem [shape: f32[1,128], index: 8, kind: input, shape index: {}]
  %s9 = inlined_call_operand.vmem [shape: bf16[128,128], index: 9, kind: input, shape index: {}]
  %s10 = inlined_call_operand.vmem [shape: f32[1,128], index: 10, kind: input, shape index: {}]
  %s11 = inlined_call_operand.vmem [shape: bf16[128,128], index: 11, kind: input, shape index: {}]
  %s12 = inlined_call_operand.vmem [shape: f32[1,128], index: 12, kind: input, shape index: {}]
  %s13 = inlined_call_operand.vmem [shape: f32[1,128], index: 13, kind: input, shape index: {}]
  %s14 = inlined_call_operand.vmem [shape: f32[1024,1], index: 14, kind: output, shape index: {}]
  %s15 = sld [smem:[#allocation0]]
  $region89: #{tpu_custom_call.1} parent=0
    _
  %s17 = ssub.s32 1, %s15
  %s18 = scalar_select 0, %s17, %s15
  loop: start=0, step=1, limit=4
  $region2: #{tpu_custom_call.1} parent=0 // loop_pre_header
    _
  $region3: #{tpu_custom_call.1} parent=0 // loop_header
    %s20 = sphi 0, %s24
    %p21 = scmp.ge.s32.totalorder %s20, 4
    %s30 = sphi 0, %s32
    %s33 = sphi 0, %s30
    %s34 = sphi 0, %s33
    %s50 = sphi 0, %s34
    %s54 = sphi 0, %s54
    %s56 = sphi 0, %s54
    %s57 = sphi 0, %s56
    %s71 = sphi 0, %s57
    %s75 = sphi 0, %s75
    %s77 = sphi 0, %s75
    %s78 = sphi 0, %s77
    %s92 = sphi 0, %s78
    %s96 = sphi 0, %s96
    %s98 = sphi 0, %s96
    %s99 = sphi 0, %s98
    %s113 = sphi 0, %s99
    %s117 = sphi 0, %s117
    %s119 = sphi 0, %s117
    %s120 = sphi 0, %s119
    %s134 = sphi 0, %s120
    %s138 = sphi 0, %s138
    %s140 = sphi 0, %s138
    %s141 = sphi 0, %s140
    %s155 = sphi 0, %s141
    %s159 = sphi 0, %s159
    %s161 = sphi 0, %s159
    %s162 = sphi 0, %s161
    %s176 = sphi 0, %s162
    %s180 = sphi 0, %s180
    %s182 = sphi 0, %s180
    %s183 = sphi 0, %s182
    %s197 = sphi 0, %s183
    %s201 = sphi 0, %s201
    %s203 = sphi 0, %s201
    %s204 = sphi 0, %s203
    %s218 = sphi 0, %s204
    %s222 = sphi 0, %s222
    %s224 = sphi 0, %s222
    %s225 = sphi 0, %s224
    %s239 = sphi 0, %s225
    %s243 = sphi 0, %s243
    %s245 = sphi 0, %s243
    %s246 = sphi 0, %s245
    %s260 = sphi 0, %s246
    %s264 = sphi 0, %s264
    %s266 = sphi 0, %s264
    %s267 = sphi 0, %s266
    %s281 = sphi 0, %s267
    %s285 = sphi 0, %s285
    %s287 = sphi 0, %s285
    %s288 = sphi 0, %s287
    %s302 = sphi 0, %s288
    %s306 = sphi 0, %s306
    %s308 = sphi 0, %s306
    %s309 = sphi 0, %s308
    %s323 = sphi 0, %s309
    %s329 = sphi 0, %s331
    %s332 = sphi 0, %s329
    %s333 = sphi 0, %s332
    %s349 = sphi 0, %s333
  $region4: #{tpu_custom_call.1} parent=0 // loop_header_branch
    %23 = sbr.rel (%p21) target = $region8
  $region5: #{tpu_custom_call.1} parent=0 // loop_body
    %s25 = ssub.s32 %s20, 1
    %s26 = ssub.s32 %s20, 2
    %s27 = sadd.s32 %s20, 1
    %s28 = ssub.s32 %s20, %s27
    %p29 = scmp.eq.s32.totalorder %s28, 0
    %s31 = sadd.s32 %s30, 1
    %s32 = scalar_select %p29, %s30, %s31
    %p35 = pneg %p29
    %p36 = scmp.eq.s32.totalorder %s20, 1
    %p37 = por %p35, %p36
    %p38 = scmp.ne.s32.totalorder %s30, %s33
    %p39 = scmp.eq.s32.totalorder %s20, 0
    %p40 = por %p38, %p39
    %p41 = scmp.ne.s32.totalorder %s30, %s33
    %p42 = scmp.eq.s32.totalorder %s25, 1
    %p43 = por %p41, %p42
    %p44 = scmp.ne.s32.totalorder %s33, %s34
    %p45 = scmp.eq.s32.totalorder %s25, 0
    %p46 = por %p44, %p45
    %p47 = scmp.ne.s32.totalorder %s33, %s34
    %p48 = scmp.eq.s32.totalorder %s26, 1
    %p49 = por %p47, %p48
    %p51 = scmp.ne.s32.totalorder %s34, %s50
    %p52 = scmp.eq.s32.totalorder %s26, 0
    %p53 = por %p51, %p52
    %s55 = sadd.s32 %s54, 1
    %p58 = scmp.eq.s32.totalorder %s20, 1
    %p59 = scmp.ne.s32.totalorder %s54, %s56
    %p60 = scmp.eq.s32.totalorder %s20, 0
    %p61 = por %p59, %p60
    %p62 = scmp.ne.s32.totalorder %s54, %s56
    %p63 = scmp.eq.s32.totalorder %s25, 1
    %p64 = por %p62, %p63
    %p65 = scmp.ne.s32.totalorder %s56, %s57
    %p66 = scmp.eq.s32.totalorder %s25, 0
    %p67 = por %p65, %p66
    %p68 = scmp.ne.s32.totalorder %s56, %s57
    %p69 = scmp.eq.s32.totalorder %s26, 1
    %p70 = por %p68, %p69
    %p72 = scmp.ne.s32.totalorder %s57, %s71
    %p73 = scmp.eq.s32.totalorder %s26, 0
    %p74 = por %p72, %p73
    %s76 = sadd.s32 %s75, 1
    %p79 = scmp.eq.s32.totalorder %s20, 1
    %p80 = scmp.ne.s32.totalorder %s75, %s77
    %p81 = scmp.eq.s32.totalorder %s20, 0
    %p82 = por %p80, %p81
    %p83 = scmp.ne.s32.totalorder %s75, %s77
    %p84 = scmp.eq.s32.totalorder %s25, 1
    %p85 = por %p83, %p84
    %p86 = scmp.ne.s32.totalorder %s77, %s78
    %p87 = scmp.eq.s32.totalorder %s25, 0
    %p88 = por %p86, %p87
    %p89 = scmp.ne.s32.totalorder %s77, %s78
    %p90 = scmp.eq.s32.totalorder %s26, 1
    %p91 = por %p89, %p90
    %p93 = scmp.ne.s32.totalorder %s78, %s92
    %p94 = scmp.eq.s32.totalorder %s26, 0
    %p95 = por %p93, %p94
    %s97 = sadd.s32 %s96, 1
    %p100 = scmp.eq.s32.totalorder %s20, 1
    %p101 = scmp.ne.s32.totalorder %s96, %s98
    %p102 = scmp.eq.s32.totalorder %s20, 0
    %p103 = por %p101, %p102
    %p104 = scmp.ne.s32.totalorder %s96, %s98
    %p105 = scmp.eq.s32.totalorder %s25, 1
    %p106 = por %p104, %p105
    %p107 = scmp.ne.s32.totalorder %s98, %s99
    %p108 = scmp.eq.s32.totalorder %s25, 0
    %p109 = por %p107, %p108
    %p110 = scmp.ne.s32.totalorder %s98, %s99
    %p111 = scmp.eq.s32.totalorder %s26, 1
    %p112 = por %p110, %p111
    %p114 = scmp.ne.s32.totalorder %s99, %s113
    %p115 = scmp.eq.s32.totalorder %s26, 0
    %p116 = por %p114, %p115
    %s118 = sadd.s32 %s117, 1
    %p121 = scmp.eq.s32.totalorder %s20, 1
    %p122 = scmp.ne.s32.totalorder %s117, %s119
    %p123 = scmp.eq.s32.totalorder %s20, 0
    %p124 = por %p122, %p123
    %p125 = scmp.ne.s32.totalorder %s117, %s119
    %p126 = scmp.eq.s32.totalorder %s25, 1
    %p127 = por %p125, %p126
    %p128 = scmp.ne.s32.totalorder %s119, %s120
    %p129 = scmp.eq.s32.totalorder %s25, 0
    %p130 = por %p128, %p129
    %p131 = scmp.ne.s32.totalorder %s119, %s120
    %p132 = scmp.eq.s32.totalorder %s26, 1
    %p133 = por %p131, %p132
    %p135 = scmp.ne.s32.totalorder %s120, %s134
    %p136 = scmp.eq.s32.totalorder %s26, 0
    %p137 = por %p135, %p136
    %s139 = sadd.s32 %s138, 1
    %p142 = scmp.eq.s32.totalorder %s20, 1
    %p143 = scmp.ne.s32.totalorder %s138, %s140
    %p144 = scmp.eq.s32.totalorder %s20, 0
    %p145 = por %p143, %p144
    %p146 = scmp.ne.s32.totalorder %s138, %s140
    %p147 = scmp.eq.s32.totalorder %s25, 1
    %p148 = por %p146, %p147
    %p149 = scmp.ne.s32.totalorder %s140, %s141
    %p150 = scmp.eq.s32.totalorder %s25, 0
    %p151 = por %p149, %p150
    %p152 = scmp.ne.s32.totalorder %s140, %s141
    %p153 = scmp.eq.s32.totalorder %s26, 1
    %p154 = por %p152, %p153
    %p156 = scmp.ne.s32.totalorder %s141, %s155
    %p157 = scmp.eq.s32.totalorder %s26, 0
    %p158 = por %p156, %p157
    %s160 = sadd.s32 %s159, 1
    %p163 = scmp.eq.s32.totalorder %s20, 1
    %p164 = scmp.ne.s32.totalorder %s159, %s161
    %p165 = scmp.eq.s32.totalorder %s20, 0
    %p166 = por %p164, %p165
    %p167 = scmp.ne.s32.totalorder %s159, %s161
    %p168 = scmp.eq.s32.totalorder %s25, 1
    %p169 = por %p167, %p168
    %p170 = scmp.ne.s32.totalorder %s161, %s162
    %p171 = scmp.eq.s32.totalorder %s25, 0
    %p172 = por %p170, %p171
    %p173 = scmp.ne.s32.totalorder %s161, %s162
    %p174 = scmp.eq.s32.totalorder %s26, 1
    %p175 = por %p173, %p174
    %p177 = scmp.ne.s32.totalorder %s162, %s176
    %p178 = scmp.eq.s32.totalorder %s26, 0
    %p179 = por %p177, %p178
    %s181 = sadd.s32 %s180, 1
    %p184 = scmp.eq.s32.totalorder %s20, 1
    %p185 = scmp.ne.s32.totalorder %s180, %s182
    %p186 = scmp.eq.s32.totalorder %s20, 0
    %p187 = por %p185, %p186
    %p188 = scmp.ne.s32.totalorder %s180, %s182
    %p189 = scmp.eq.s32.totalorder %s25, 1
    %p190 = por %p188, %p189
    %p191 = scmp.ne.s32.totalorder %s182, %s183
    %p192 = scmp.eq.s32.totalorder %s25, 0
    %p193 = por %p191, %p192
    %p194 = scmp.ne.s32.totalorder %s182, %s183
    %p195 = scmp.eq.s32.totalorder %s26, 1
    %p196 = por %p194, %p195
    %p198 = scmp.ne.s32.totalorder %s183, %s197
    %p199 = scmp.eq.s32.totalorder %s26, 0
    %p200 = por %p198, %p199
    %s202 = sadd.s32 %s201, 1
    %p205 = scmp.eq.s32.totalorder %s20, 1
    %p206 = scmp.ne.s32.totalorder %s201, %s203
    %p207 = scmp.eq.s32.totalorder %s20, 0
    %p208 = por %p206, %p207
    %p209 = scmp.ne.s32.totalorder %s201, %s203
    %p210 = scmp.eq.s32.totalorder %s25, 1
    %p211 = por %p209, %p210
    %p212 = scmp.ne.s32.totalorder %s203, %s204
    %p213 = scmp.eq.s32.totalorder %s25, 0
    %p214 = por %p212, %p213
    %p215 = scmp.ne.s32.totalorder %s203, %s204
    %p216 = scmp.eq.s32.totalorder %s26, 1
    %p217 = por %p215, %p216
    %p219 = scmp.ne.s32.totalorder %s204, %s218
    %p220 = scmp.eq.s32.totalorder %s26, 0
    %p221 = por %p219, %p220
    %s223 = sadd.s32 %s222, 1
    %p226 = scmp.eq.s32.totalorder %s20, 1
    %p227 = scmp.ne.s32.totalorder %s222, %s224
    %p228 = scmp.eq.s32.totalorder %s20, 0
    %p229 = por %p227, %p228
    %p230 = scmp.ne.s32.totalorder %s222, %s224
    %p231 = scmp.eq.s32.totalorder %s25, 1
    %p232 = por %p230, %p231
    %p233 = scmp.ne.s32.totalorder %s224, %s225
    %p234 = scmp.eq.s32.totalorder %s25, 0
    %p235 = por %p233, %p234
    %p236 = scmp.ne.s32.totalorder %s224, %s225
    %p237 = scmp.eq.s32.totalorder %s26, 1
    %p238 = por %p236, %p237
    %p240 = scmp.ne.s32.totalorder %s225, %s239
    %p241 = scmp.eq.s32.totalorder %s26, 0
    %p242 = por %p240, %p241
    %s244 = sadd.s32 %s243, 1
    %p247 = scmp.eq.s32.totalorder %s20, 1
    %p248 = scmp.ne.s32.totalorder %s243, %s245
    %p249 = scmp.eq.s32.totalorder %s20, 0
    %p250 = por %p248, %p249
    %p251 = scmp.ne.s32.totalorder %s243, %s245
    %p252 = scmp.eq.s32.totalorder %s25, 1
    %p253 = por %p251, %p252
    %p254 = scmp.ne.s32.totalorder %s245, %s246
    %p255 = scmp.eq.s32.totalorder %s25, 0
    %p256 = por %p254, %p255
    %p257 = scmp.ne.s32.totalorder %s245, %s246
    %p258 = scmp.eq.s32.totalorder %s26, 1
    %p259 = por %p257, %p258
    %p261 = scmp.ne.s32.totalorder %s246, %s260
    %p262 = scmp.eq.s32.totalorder %s26, 0
    %p263 = por %p261, %p262
    %s265 = sadd.s32 %s264, 1
    %p268 = scmp.eq.s32.totalorder %s20, 1
    %p269 = scmp.ne.s32.totalorder %s264, %s266
    %p270 = scmp.eq.s32.totalorder %s20, 0
    %p271 = por %p269, %p270
    %p272 = scmp.ne.s32.totalorder %s264, %s266
    %p273 = scmp.eq.s32.totalorder %s25, 1
    %p274 = por %p272, %p273
    %p275 = scmp.ne.s32.totalorder %s266, %s267
    %p276 = scmp.eq.s32.totalorder %s25, 0
    %p277 = por %p275, %p276
    %p278 = scmp.ne.s32.totalorder %s266, %s267
    %p279 = scmp.eq.s32.totalorder %s26, 1
    %p280 = por %p278, %p279
    %p282 = scmp.ne.s32.totalorder %s267, %s281
    %p283 = scmp.eq.s32.totalorder %s26, 0
    %p284 = por %p282, %p283
    %s286 = sadd.s32 %s285, 1
    %p289 = scmp.eq.s32.totalorder %s20, 1
    %p290 = scmp.ne.s32.totalorder %s285, %s287
    %p291 = scmp.eq.s32.totalorder %s20, 0
    %p292 = por %p290, %p291
    %p293 = scmp.ne.s32.totalorder %s285, %s287
    %p294 = scmp.eq.s32.totalorder %s25, 1
    %p295 = por %p293, %p294
    %p296 = scmp.ne.s32.totalorder %s287, %s288
    %p297 = scmp.eq.s32.totalorder %s25, 0
    %p298 = por %p296, %p297
    %p299 = scmp.ne.s32.totalorder %s287, %s288
    %p300 = scmp.eq.s32.totalorder %s26, 1
    %p301 = por %p299, %p300
    %p303 = scmp.ne.s32.totalorder %s288, %s302
    %p304 = scmp.eq.s32.totalorder %s26, 0
    %p305 = por %p303, %p304
    %s307 = sadd.s32 %s306, 1
    %p310 = scmp.eq.s32.totalorder %s20, 1
    %p311 = scmp.ne.s32.totalorder %s306, %s308
    %p312 = scmp.eq.s32.totalorder %s20, 0
    %p313 = por %p311, %p312
    %p314 = scmp.ne.s32.totalorder %s306, %s308
    %p315 = scmp.eq.s32.totalorder %s25, 1
    %p316 = por %p314, %p315
    %p317 = scmp.ne.s32.totalorder %s308, %s309
    %p318 = scmp.eq.s32.totalorder %s25, 0
    %p319 = por %p317, %p318
    %p320 = scmp.ne.s32.totalorder %s308, %s309
    %p321 = scmp.eq.s32.totalorder %s26, 1
    %p322 = por %p320, %p321
    %p324 = scmp.ne.s32.totalorder %s309, %s323
    %p325 = scmp.eq.s32.totalorder %s26, 0
    %p326 = por %p324, %p325
    %s327 = ssub.s32 %s20, %s27
    %p328 = scmp.eq.s32.totalorder %s327, 0
    %s330 = sadd.s32 %s329, 1
    %s331 = scalar_select %p328, %s329, %s330
    %p334 = pneg %p328
    %p335 = scmp.eq.s32.totalorder %s20, 1
    %p336 = por %p334, %p335
    %p337 = scmp.ne.s32.totalorder %s329, %s332
    %p338 = scmp.eq.s32.totalorder %s20, 0
    %p339 = por %p337, %p338
    %p340 = scmp.ne.s32.totalorder %s329, %s332
    %p341 = scmp.eq.s32.totalorder %s25, 1
    %p342 = por %p340, %p341
    %p343 = scmp.ne.s32.totalorder %s332, %s333
    %p344 = scmp.eq.s32.totalorder %s25, 0
    %p345 = por %p343, %p344
    %p346 = scmp.ne.s32.totalorder %s332, %s333
    %p347 = scmp.eq.s32.totalorder %s26, 1
    %p348 = por %p346, %p347
    %p350 = scmp.ne.s32.totalorder %s333, %s349
    %p351 = scmp.eq.s32.totalorder %s26, 0
    %p352 = por %p350, %p351
    %p353 = scmp.le.s32.totalorder 1, %s20
    %p354 = scmp.lt.s32.totalorder %s20, 3
    %p355 = pnand %p353, %p354
    %p356 = pneg %p355
    // Predicated region
    $region9: #{tpu_custom_call.1} parent=5 // pred_check
      _
    $region10: #{tpu_custom_call.1} parent=5 // pred_check_branch
      %358 = sbr.rel (%p355) target = $region12
    $region11: #{tpu_custom_call.1} parent=5 // pred_region
      %s359 = ssub.s32 %s20, 1
      // Predicated region
      $region13: #{tpu_custom_call.1} parent=11 // pred_check
        %p360 = pneg %p67
      $region14: #{tpu_custom_call.1} parent=11 // pred_check_branch
        %362 = sbr.rel (%p360) target = $region16
      $region15: #{tpu_custom_call.1} parent=11 // pred_region
        _
      $region16: #{tpu_custom_call.1} parent=11 // pred_fallthru
        _
      // Predicated region
      $region17: #{tpu_custom_call.1} parent=11 // pred_check
        %p363 = pneg %p88
      $region18: #{tpu_custom_call.1} parent=11 // pred_check_branch
        %365 = sbr.rel (%p363) target = $region20
      $region19: #{tpu_custom_call.1} parent=11 // pred_region
        _
      $region20: #{tpu_custom_call.1} parent=11 // pred_fallthru
        _
      // Predicated region
      $region21: #{tpu_custom_call.1} parent=11 // pred_check
        %p366 = pneg %p109
      $region22: #{tpu_custom_call.1} parent=11 // pred_check_branch
        %368 = sbr.rel (%p366) target = $region24
      $region23: #{tpu_custom_call.1} parent=11 // pred_region
        _
      $region24: #{tpu_custom_call.1} parent=11 // pred_fallthru
        _
      // Predicated region
      $region25: #{tpu_custom_call.1} parent=11 // pred_check
        %p369 = pneg %p130
      $region26: #{tpu_custom_call.1} parent=11 // pred_check_branch
        %371 = sbr.rel (%p369) target = $region28
      $region27: #{tpu_custom_call.1} parent=11 // pred_region
        _
      $region28: #{tpu_custom_call.1} parent=11 // pred_fallthru
        _
      // Predicated region
      $region29: #{tpu_custom_call.1} parent=11 // pred_check
        %p372 = pneg %p151
      $region30: #{tpu_custom_call.1} parent=11 // pred_check_branch
        %374 = sbr.rel (%p372) target = $region32
      $region31: #{tpu_custom_call.1} parent=11 // pred_region
        _
      $region32: #{tpu_custom_call.1} parent=11 // pred_fallthru
        _
      // Predicated region
      $region33: #{tpu_custom_call.1} parent=11 // pred_check
        %p375 = pneg %p172
      $region34: #{tpu_custom_call.1} parent=11 // pred_check_branch
        %377 = sbr.rel (%p375) target = $region36
      $region35: #{tpu_custom_call.1} parent=11 // pred_region
        _
      $region36: #{tpu_custom_call.1} parent=11 // pred_fallthru
        _
      // Predicated region
      $region37: #{tpu_custom_call.1} parent=11 // pred_check
        %p378 = pneg %p193
      $region38: #{tpu_custom_call.1} parent=11 // pred_check_branch
        %380 = sbr.rel (%p378) target = $region40
      $region39: #{tpu_custom_call.1} parent=11 // pred_region
        _
      $region40: #{tpu_custom_call.1} parent=11 // pred_fallthru
        _
      // Predicated region
      $region41: #{tpu_custom_call.1} parent=11 // pred_check
        %p381 = pneg %p214
      $region42: #{tpu_custom_call.1} parent=11 // pred_check_branch
        %383 = sbr.rel (%p381) target = $region44
      $region43: #{tpu_custom_call.1} parent=11 // pred_region
        _
      $region44: #{tpu_custom_call.1} parent=11 // pred_fallthru
        _
      // Predicated region
      $region45: #{tpu_custom_call.1} parent=11 // pred_check
        %p384 = pneg %p235
      $region46: #{tpu_custom_call.1} parent=11 // pred_check_branch
        %386 = sbr.rel (%p384) target = $region48
      $region47: #{tpu_custom_call.1} parent=11 // pred_region
        _
      $region48: #{tpu_custom_call.1} parent=11 // pred_fallthru
        _
      // Predicated region
      $region49: #{tpu_custom_call.1} parent=11 // pred_check
        %p387 = pneg %p256
      $region50: #{tpu_custom_call.1} parent=11 // pred_check_branch
        %389 = sbr.rel (%p387) target = $region52
      $region51: #{tpu_custom_call.1} parent=11 // pred_region
        _
      $region52: #{tpu_custom_call.1} parent=11 // pred_fallthru
        _
      // Predicated region
      $region53: #{tpu_custom_call.1} parent=11 // pred_check
        %p390 = pneg %p277
      $region54: #{tpu_custom_call.1} parent=11 // pred_check_branch
        %392 = sbr.rel (%p390) target = $region56
      $region55: #{tpu_custom_call.1} parent=11 // pred_region
        _
      $region56: #{tpu_custom_call.1} parent=11 // pred_fallthru
        _
      // Predicated region
      $region57: #{tpu_custom_call.1} parent=11 // pred_check
        %p393 = pneg %p298
      $region58: #{tpu_custom_call.1} parent=11 // pred_check_branch
        %395 = sbr.rel (%p393) target = $region60
      $region59: #{tpu_custom_call.1} parent=11 // pred_region
        _
      $region60: #{tpu_custom_call.1} parent=11 // pred_fallthru
        _
      // Predicated region
      $region61: #{tpu_custom_call.1} parent=11 // pred_check
        %p396 = pneg %p319
      $region62: #{tpu_custom_call.1} parent=11 // pred_check_branch
        %398 = sbr.rel (%p396) target = $region64
      $region63: #{tpu_custom_call.1} parent=11 // pred_region
        _
      $region64: #{tpu_custom_call.1} parent=11 // pred_fallthru
        _
    $region12: #{tpu_custom_call.1} parent=5 // pred_fallthru
      _
    %p399 = scmp.lt.s32.totalorder %s20, 2
    // Predicated region
    $region65: #{tpu_custom_call.1} parent=5 // pred_check
      %p400 = pneg %p399
    $region66: #{tpu_custom_call.1} parent=5 // pred_check_branch
      %402 = sbr.rel (%p400) target = $region68
    $region67: #{tpu_custom_call.1} parent=5 // pred_region
      // Predicated region
      $region69: #{tpu_custom_call.1} parent=67 // pred_check
        %p403 = pneg %p40
      $region70: #{tpu_custom_call.1} parent=67 // pred_check_branch
        %405 = sbr.rel (%p403) target = $region72
      $region71: #{tpu_custom_call.1} parent=67 // pred_region
        %s406 = smul.u32 64, %s20
        %p407 = scmp.lt.s32.totalorder %s406, 127
        %s408 = scalar_select %p407, %s406, 127
        %s409 = smul.addr %s408, 8
        %s410 = scalar_lea.vmem %s0, %s409
        %s411 = smul.u32 64, %s20
      $region72: #{tpu_custom_call.1} parent=67 // pred_fallthru
        _
    $region68: #{tpu_custom_call.1} parent=5 // pred_fallthru
      _
    %p412 = scmp.le.s32.totalorder 1, %s20
    %p413 = scmp.lt.s32.totalorder %s20, 3
    %p414 = pnand %p412, %p413
    %p415 = pneg %p414
    // Predicated region
    $region73: #{tpu_custom_call.1} parent=5 // pred_check
      _
    $region74: #{tpu_custom_call.1} parent=5 // pred_check_branch
      %417 = sbr.rel (%p414) target = $region76
    $region75: #{tpu_custom_call.1} parent=5 // pred_region
      %s418 = ssub.s32 %s20, 1
      %s419 = smul.u32 64, %s25
      %p420 = scmp.lt.s32.totalorder %s419, 127
      %s421 = scalar_select %p420, %s419, 127
      %s422 = smul.addr %s421, 8
      %s423 = scalar_lea.vmem %s0, %s422
      %p424 = pneg %p46
      %p425 = pneg %p43
      %p426 = pneg %p67
      %p427 = pneg %p64
      %p428 = pneg %p88
      %p429 = pneg %p85
      %p430 = pneg %p109
      %p431 = pneg %p106
      %p432 = pneg %p130
      %p433 = pneg %p127
      %p434 = pneg %p151
      %p435 = pneg %p148
      %p436 = pneg %p172
      %p437 = pneg %p169
      %p438 = pneg %p193
      %p439 = pneg %p190
      %p440 = pneg %p214
      %p441 = pneg %p211
      %p442 = pneg %p235
      %p443 = pneg %p232
      %p444 = pneg %p256
      %p445 = pneg %p253
      %p446 = pneg %p277
      %p447 = pneg %p274
      %p448 = pneg %p298
      %p449 = pneg %p295
      %p450 = pneg %p319
      %p451 = pneg %p316
      %p452 = pneg %p345
      %p453 = pneg %p342
      %s454 = smul.u32 64, %s25
      %p455 = scmp.lt.s32.totalorder %s454, 127
      %s456 = scalar_select %p455, %s454, 127
      %s457 = smul.addr %s456, 8
      %s458 = scalar_lea.vmem %s14, %s457
      %s459 = smul.u32 64, %s25
      %p460 = scmp.lt.s32.totalorder %s459, 127
      %s461 = scalar_select %p460, %s459, 127
      %s462 = smul.addr %s461, 8
      %s463 = scalar_lea.vmem %s0, %s462
      %s464 = smul.u32 64, %s25
      %s465 = smul.u32 64, %s25
      %p466 = scmp.lt.s32.totalorder %s465, 127
      %s467 = scalar_select %p466, %s465, 127
      %s468 = smul.addr %s467, 8
      %s469 = scalar_lea.vmem %s14, %s468
      %s470 = smul.u32 64, %s25
      %v472 = vld [vmem:[%s463] sm:$0xff]
      %v473 = vld [vmem:[%s463 + $0x8] sm:$0xff]
      %v474 = vld [vmem:[%s463 + $0x10] sm:$0xff]
      %v475 = vld [vmem:[%s463 + $0x18] sm:$0xff]
      %v476 = vld [vmem:[%s463 + $0x20] sm:$0xff]
      %v477 = vld [vmem:[%s463 + $0x28] sm:$0xff]
      %v478 = vld [vmem:[%s463 + $0x30] sm:$0xff]
      %v479 = vld [vmem:[%s463 + $0x38] sm:$0xff]
      %v480 = vld [vmem:[%s463 + $0x40] sm:$0xff]
      %v481 = vld [vmem:[%s463 + $0x48] sm:$0xff]
      %v482 = vld [vmem:[%s463 + $0x50] sm:$0xff]
      %v483 = vld [vmem:[%s463 + $0x58] sm:$0xff]
      %v484 = vld [vmem:[%s463 + $0x60] sm:$0xff]
      %v485 = vld [vmem:[%s463 + $0x68] sm:$0xff]
      %v486 = vld [vmem:[%s463 + $0x70] sm:$0xff]
      %v487 = vld [vmem:[%s463 + $0x78] sm:$0xff]
      %v488 = vld [vmem:[%s463 + $0x80] sm:$0xff]
      %v489 = vld [vmem:[%s463 + $0x88] sm:$0xff]
      %v490 = vld [vmem:[%s463 + $0x90] sm:$0xff]
      %v491 = vld [vmem:[%s463 + $0x98] sm:$0xff]
      %v492 = vld [vmem:[%s463 + $0xa0] sm:$0xff]
      %v493 = vld [vmem:[%s463 + $0xa8] sm:$0xff]
      %v494 = vld [vmem:[%s463 + $0xb0] sm:$0xff]
      %v495 = vld [vmem:[%s463 + $0xb8] sm:$0xff]
      %v496 = vld [vmem:[%s463 + $0xc0] sm:$0xff]
      %v497 = vld [vmem:[%s463 + $0xc8] sm:$0xff]
      %v498 = vld [vmem:[%s463 + $0xd0] sm:$0xff]
      %v499 = vld [vmem:[%s463 + $0xd8] sm:$0xff]
      %v500 = vld [vmem:[%s463 + $0xe0] sm:$0xff]
      %v501 = vld [vmem:[%s463 + $0xe8] sm:$0xff]
      %v502 = vld [vmem:[%s463 + $0xf0] sm:$0xff]
      %v503 = vld [vmem:[%s463 + $0xf8] sm:$0xff]
      %v504 = vld [vmem:[%s463 + $0x100] sm:$0xff]
      %v505 = vld [vmem:[%s463 + $0x108] sm:$0xff]
      %v506 = vld [vmem:[%s463 + $0x110] sm:$0xff]
      %v507 = vld [vmem:[%s463 + $0x118] sm:$0xff]
      %v508 = vld [vmem:[%s463 + $0x120] sm:$0xff]
      %v509 = vld [vmem:[%s463 + $0x128] sm:$0xff]
      %v510 = vld [vmem:[%s463 + $0x130] sm:$0xff]
      %v511 = vld [vmem:[%s463 + $0x138] sm:$0xff]
      %v512 = vld [vmem:[%s463 + $0x140] sm:$0xff]
      %v513 = vld [vmem:[%s463 + $0x148] sm:$0xff]
      %v514 = vld [vmem:[%s463 + $0x150] sm:$0xff]
      %v515 = vld [vmem:[%s463 + $0x158] sm:$0xff]
      %v516 = vld [vmem:[%s463 + $0x160] sm:$0xff]
      %v517 = vld [vmem:[%s463 + $0x168] sm:$0xff]
      %v518 = vld [vmem:[%s463 + $0x170] sm:$0xff]
      %v519 = vld [vmem:[%s463 + $0x178] sm:$0xff]
      %v520 = vld [vmem:[%s463 + $0x180] sm:$0xff]
      %v521 = vld [vmem:[%s463 + $0x188] sm:$0xff]
      %v522 = vld [vmem:[%s463 + $0x190] sm:$0xff]
      %v523 = vld [vmem:[%s463 + $0x198] sm:$0xff]
      %v524 = vld [vmem:[%s463 + $0x1a0] sm:$0xff]
      %v525 = vld [vmem:[%s463 + $0x1a8] sm:$0xff]
      %v526 = vld [vmem:[%s463 + $0x1b0] sm:$0xff]
      %v527 = vld [vmem:[%s463 + $0x1b8] sm:$0xff]
      %v528 = vld [vmem:[%s463 + $0x1c0] sm:$0xff]
      %v529 = vld [vmem:[%s463 + $0x1c8] sm:$0xff]
      %v530 = vld [vmem:[%s463 + $0x1d0] sm:$0xff]
      %v531 = vld [vmem:[%s463 + $0x1d8] sm:$0xff]
      %v532 = vld [vmem:[%s463 + $0x1e0] sm:$0xff]
      %v533 = vld [vmem:[%s463 + $0x1e8] sm:$0xff]
      %v534 = vld [vmem:[%s463 + $0x1f0] sm:$0xff]
      %v535 = vld [vmem:[%s463 + $0x1f8] sm:$0xff]
      %536 = vst [vmem:[#allocation2] sm:$0xff] 0.0
      %537 = vst [vmem:[#allocation2 + $0x8] sm:$0xff] 0.0
      %538 = vst [vmem:[#allocation2 + $0x10] sm:$0xff] 0.0
      %539 = vst [vmem:[#allocation2 + $0x18] sm:$0xff] 0.0
      %540 = vst [vmem:[#allocation2 + $0x20] sm:$0xff] 0.0
      %541 = vst [vmem:[#allocation2 + $0x28] sm:$0xff] 0.0
      %542 = vst [vmem:[#allocation2 + $0x30] sm:$0xff] 0.0
      %543 = vst [vmem:[#allocation2 + $0x38] sm:$0xff] 0.0
      %544 = vst [vmem:[#allocation2 + $0x40] sm:$0xff] 0.0
      %545 = vst [vmem:[#allocation2 + $0x48] sm:$0xff] 0.0
      %546 = vst [vmem:[#allocation2 + $0x50] sm:$0xff] 0.0
      %547 = vst [vmem:[#allocation2 + $0x58] sm:$0xff] 0.0
      %548 = vst [vmem:[#allocation2 + $0x60] sm:$0xff] 0.0
      %549 = vst [vmem:[#allocation2 + $0x68] sm:$0xff] 0.0
      %550 = vst [vmem:[#allocation2 + $0x70] sm:$0xff] 0.0
      %551 = vst [vmem:[#allocation2 + $0x78] sm:$0xff] 0.0
      %552 = vst [vmem:[#allocation2 + $0x80] sm:$0xff] 0.0
      %553 = vst [vmem:[#allocation2 + $0x88] sm:$0xff] 0.0
      %554 = vst [vmem:[#allocation2 + $0x90] sm:$0xff] 0.0
      %555 = vst [vmem:[#allocation2 + $0x98] sm:$0xff] 0.0
      %556 = vst [vmem:[#allocation2 + $0xa0] sm:$0xff] 0.0
      %557 = vst [vmem:[#allocation2 + $0xa8] sm:$0xff] 0.0
      %558 = vst [vmem:[#allocation2 + $0xb0] sm:$0xff] 0.0
      %559 = vst [vmem:[#allocation2 + $0xb8] sm:$0xff] 0.0
      %560 = vst [vmem:[#allocation2 + $0xc0] sm:$0xff] 0.0
      %561 = vst [vmem:[#allocation2 + $0xc8] sm:$0xff] 0.0
      %562 = vst [vmem:[#allocation2 + $0xd0] sm:$0xff] 0.0
      %563 = vst [vmem:[#allocation2 + $0xd8] sm:$0xff] 0.0
      %564 = vst [vmem:[#allocation2 + $0xe0] sm:$0xff] 0.0
      %565 = vst [vmem:[#allocation2 + $0xe8] sm:$0xff] 0.0
      %566 = vst [vmem:[#allocation2 + $0xf0] sm:$0xff] 0.0
      %567 = vst [vmem:[#allocation2 + $0xf8] sm:$0xff] 0.0
      %568 = vst [vmem:[#allocation2 + $0x100] sm:$0xff] 0.0
      %569 = vst [vmem:[#allocation2 + $0x108] sm:$0xff] 0.0
      %570 = vst [vmem:[#allocation2 + $0x110] sm:$0xff] 0.0
      %571 = vst [vmem:[#allocation2 + $0x118] sm:$0xff] 0.0
      %572 = vst [vmem:[#allocation2 + $0x120] sm:$0xff] 0.0
      %573 = vst [vmem:[#allocation2 + $0x128] sm:$0xff] 0.0
      %574 = vst [vmem:[#allocation2 + $0x130] sm:$0xff] 0.0
      %575 = vst [vmem:[#allocation2 + $0x138] sm:$0xff] 0.0
      %576 = vst [vmem:[#allocation2 + $0x140] sm:$0xff] 0.0
      %577 = vst [vmem:[#allocation2 + $0x148] sm:$0xff] 0.0
      %578 = vst [vmem:[#allocation2 + $0x150] sm:$0xff] 0.0
      %579 = vst [vmem:[#allocation2 + $0x158] sm:$0xff] 0.0
      %580 = vst [vmem:[#allocation2 + $0x160] sm:$0xff] 0.0
      %581 = vst [vmem:[#allocation2 + $0x168] sm:$0xff] 0.0
      %582 = vst [vmem:[#allocation2 + $0x170] sm:$0xff] 0.0
      %583 = vst [vmem:[#allocation2 + $0x178] sm:$0xff] 0.0
      %584 = vst [vmem:[#allocation2 + $0x180] sm:$0xff] 0.0
      %585 = vst [vmem:[#allocation2 + $0x188] sm:$0xff] 0.0
      %586 = vst [vmem:[#allocation2 + $0x190] sm:$0xff] 0.0
      %587 = vst [vmem:[#allocation2 + $0x198] sm:$0xff] 0.0
      %588 = vst [vmem:[#allocation2 + $0x1a0] sm:$0xff] 0.0
      %589 = vst [vmem:[#allocation2 + $0x1a8] sm:$0xff] 0.0
      %590 = vst [vmem:[#allocation2 + $0x1b0] sm:$0xff] 0.0
      %591 = vst [vmem:[#allocation2 + $0x1b8] sm:$0xff] 0.0
      %592 = vst [vmem:[#allocation2 + $0x1c0] sm:$0xff] 0.0
      %593 = vst [vmem:[#allocation2 + $0x1c8] sm:$0xff] 0.0
      %594 = vst [vmem:[#allocation2 + $0x1d0] sm:$0xff] 0.0
      %595 = vst [vmem:[#allocation2 + $0x1d8] sm:$0xff] 0.0
      %596 = vst [vmem:[#allocation2 + $0x1e0] sm:$0xff] 0.0
      %597 = vst [vmem:[#allocation2 + $0x1e8] sm:$0xff] 0.0
      %598 = vst [vmem:[#allocation2 + $0x1f0] sm:$0xff] 0.0
      %599 = vst [vmem:[#allocation2 + $0x1f8] sm:$0xff] 0.0
      %vm600 = vcmask 130048
      %601 = vst.msk [vmem:[#allocation2] sm:$0xff] %vm600, %v472
      %602 = vst.msk [vmem:[#allocation2 + $0x8] sm:$0xff] %vm600, %v473
      %603 = vst.msk [vmem:[#allocation2 + $0x10] sm:$0xff] %vm600, %v474
      %604 = vst.msk [vmem:[#allocation2 + $0x18] sm:$0xff] %vm600, %v475
      %605 = vst.msk [vmem:[#allocation2 + $0x20] sm:$0xff] %vm600, %v476
      %606 = vst.msk [vmem:[#allocation2 + $0x28] sm:$0xff] %vm600, %v477
      %607 = vst.msk [vmem:[#allocation2 + $0x30] sm:$0xff] %vm600, %v478
      %608 = vst.msk [vmem:[#allocation2 + $0x38] sm:$0xff] %vm600, %v479
      %609 = vst.msk [vmem:[#allocation2 + $0x40] sm:$0xff] %vm600, %v480
      %610 = vst.msk [vmem:[#allocation2 + $0x48] sm:$0xff] %vm600, %v481
      %611 = vst.msk [vmem:[#allocation2 + $0x50] sm:$0xff] %vm600, %v482
      %612 = vst.msk [vmem:[#allocation2 + $0x58] sm:$0xff] %vm600, %v483
      %613 = vst.msk [vmem:[#allocation2 + $0x60] sm:$0xff] %vm600, %v484
      %614 = vst.msk [vmem:[#allocation2 + $0x68] sm:$0xff] %vm600, %v485
      %615 = vst.msk [vmem:[#allocation2 + $0x70] sm:$0xff] %vm600, %v486
      %616 = vst.msk [vmem:[#allocation2 + $0x78] sm:$0xff] %vm600, %v487
      %617 = vst.msk [vmem:[#allocation2 + $0x80] sm:$0xff] %vm600, %v488
      %618 = vst.msk [vmem:[#allocation2 + $0x88] sm:$0xff] %vm600, %v489
      %619 = vst.msk [vmem:[#allocation2 + $0x90] sm:$0xff] %vm600, %v490
      %620 = vst.msk [vmem:[#allocation2 + $0x98] sm:$0xff] %vm600, %v491
      %621 = vst.msk [vmem:[#allocation2 + $0xa0] sm:$0xff] %vm600, %v492
      %622 = vst.msk [vmem:[#allocation2 + $0xa8] sm:$0xff] %vm600, %v493
      %623 = vst.msk [vmem:[#allocation2 + $0xb0] sm:$0xff] %vm600, %v494
      %624 = vst.msk [vmem:[#allocation2 + $0xb8] sm:$0xff] %vm600, %v495
      %625 = vst.msk [vmem:[#allocation2 + $0xc0] sm:$0xff] %vm600, %v496
      %626 = vst.msk [vmem:[#allocation2 + $0xc8] sm:$0xff] %vm600, %v497
      %627 = vst.msk [vmem:[#allocation2 + $0xd0] sm:$0xff] %vm600, %v498
      %628 = vst.msk [vmem:[#allocation2 + $0xd8] sm:$0xff] %vm600, %v499
      %629 = vst.msk [vmem:[#allocation2 + $0xe0] sm:$0xff] %vm600, %v500
      %630 = vst.msk [vmem:[#allocation2 + $0xe8] sm:$0xff] %vm600, %v501
      %631 = vst.msk [vmem:[#allocation2 + $0xf0] sm:$0xff] %vm600, %v502
      %632 = vst.msk [vmem:[#allocation2 + $0xf8] sm:$0xff] %vm600, %v503
      %633 = vst.msk [vmem:[#allocation2 + $0x100] sm:$0xff] %vm600, %v504
      %634 = vst.msk [vmem:[#allocation2 + $0x108] sm:$0xff] %vm600, %v505
      %635 = vst.msk [vmem:[#allocation2 + $0x110] sm:$0xff] %vm600, %v506
      %636 = vst.msk [vmem:[#allocation2 + $0x118] sm:$0xff] %vm600, %v507
      %637 = vst.msk [vmem:[#allocation2 + $0x120] sm:$0xff] %vm600, %v508
      %638 = vst.msk [vmem:[#allocation2 + $0x128] sm:$0xff] %vm600, %v509
      %639 = vst.msk [vmem:[#allocation2 + $0x130] sm:$0xff] %vm600, %v510
      %640 = vst.msk [vmem:[#allocation2 + $0x138] sm:$0xff] %vm600, %v511
      %641 = vst.msk [vmem:[#allocation2 + $0x140] sm:$0xff] %vm600, %v512
      %642 = vst.msk [vmem:[#allocation2 + $0x148] sm:$0xff] %vm600, %v513
      %643 = vst.msk [vmem:[#allocation2 + $0x150] sm:$0xff] %vm600, %v514
      %644 = vst.msk [vmem:[#allocation2 + $0x158] sm:$0xff] %vm600, %v515
      %645 = vst.msk [vmem:[#allocation2 + $0x160] sm:$0xff] %vm600, %v516
      %646 = vst.msk [vmem:[#allocation2 + $0x168] sm:$0xff] %vm600, %v517
      %647 = vst.msk [vmem:[#allocation2 + $0x170] sm:$0xff] %vm600, %v518
      %648 = vst.msk [vmem:[#allocation2 + $0x178] sm:$0xff] %vm600, %v519
      %649 = vst.msk [vmem:[#allocation2 + $0x180] sm:$0xff] %vm600, %v520
      %650 = vst.msk [vmem:[#allocation2 + $0x188] sm:$0xff] %vm600, %v521
      %651 = vst.msk [vmem:[#allocation2 + $0x190] sm:$0xff] %vm600, %v522
      %652 = vst.msk [vmem:[#allocation2 + $0x198] sm:$0xff] %vm600, %v523
      %653 = vst.msk [vmem:[#allocation2 + $0x1a0] sm:$0xff] %vm600, %v524
      %654 = vst.msk [vmem:[#allocation2 + $0x1a8] sm:$0xff] %vm600, %v525
      %655 = vst.msk [vmem:[#allocation2 + $0x1b0] sm:$0xff] %vm600, %v526
      %656 = vst.msk [vmem:[#allocation2 + $0x1b8] sm:$0xff] %vm600, %v527
      %657 = vst.msk [vmem:[#allocation2 + $0x1c0] sm:$0xff] %vm600, %v528
      %658 = vst.msk [vmem:[#allocation2 + $0x1c8] sm:$0xff] %vm600, %v529
      %659 = vst.msk [vmem:[#allocation2 + $0x1d0] sm:$0xff] %vm600, %v530
      %660 = vst.msk [vmem:[#allocation2 + $0x1d8] sm:$0xff] %vm600, %v531
      %661 = vst.msk [vmem:[#allocation2 + $0x1e0] sm:$0xff] %vm600, %v532
      %662 = vst.msk [vmem:[#allocation2 + $0x1e8] sm:$0xff] %vm600, %v533
      %663 = vst.msk [vmem:[#allocation2 + $0x1f0] sm:$0xff] %vm600, %v534
      %664 = vst.msk [vmem:[#allocation2 + $0x1f8] sm:$0xff] %vm600, %v535
      %v665 = vpack.c.bf16 %v473, %v472
      %v666 = vpack.c.bf16 %v475, %v474
      %v667 = vpack.c.bf16 %v477, %v476
      %v668 = vpack.c.bf16 %v479, %v478
      %v669 = vpack.c.bf16 %v481, %v480
      %v670 = vpack.c.bf16 %v483, %v482
      %v671 = vpack.c.bf16 %v485, %v484
      %v672 = vpack.c.bf16 %v487, %v486
      %v673 = vpack.c.bf16 %v489, %v488
      %v674 = vpack.c.bf16 %v491, %v490
      %v675 = vpack.c.bf16 %v493, %v492
      %v676 = vpack.c.bf16 %v495, %v494
      %v677 = vpack.c.bf16 %v497, %v496
      %v678 = vpack.c.bf16 %v499, %v498
      %v679 = vpack.c.bf16 %v501, %v500
      %v680 = vpack.c.bf16 %v503, %v502
      %v681 = vpack.c.bf16 %v505, %v504
      %v682 = vpack.c.bf16 %v507, %v506
      %v683 = vpack.c.bf16 %v509, %v508
      %v684 = vpack.c.bf16 %v511, %v510
      %v685 = vpack.c.bf16 %v513, %v512
      %v686 = vpack.c.bf16 %v515, %v514
      %v687 = vpack.c.bf16 %v517, %v516
      %v688 = vpack.c.bf16 %v519, %v518
      %v689 = vpack.c.bf16 %v521, %v520
      %v690 = vpack.c.bf16 %v523, %v522
      %v691 = vpack.c.bf16 %v525, %v524
      %v692 = vpack.c.bf16 %v527, %v526
      %v693 = vpack.c.bf16 %v529, %v528
      %v694 = vpack.c.bf16 %v531, %v530
      %v695 = vpack.c.bf16 %v533, %v532
      %v696 = vpack.c.bf16 %v535, %v534
      %v697 = vld [vmem:[%s1] sm:$0xf]
      %v698 = vld [vmem:[%s1 + $0x4] sm:$0xf]
      %v699 = vld [vmem:[%s2] sm:$0x1]
      %v701 = vlaneseq
      %v702 = vshrl.u32 %v701, 7
      %v703 = vsub.s32 0, %v702
      %v704 = vrot.slane %v699, %v703
      %v708 = vunpack.c.l.b16 %v697
      %v709 = vunpack.c.l.b16 %v698
      %v710 = vpack.c.b16 %v709, %v708
      %v713 = vsel %vm600, %v665, 0
      %v716 = vsel %vm600, %v666, 0
      %v719 = vsel %vm600, %v667, 0
      %v722 = vsel %vm600, %v668, 0
      %v725 = vsel %vm600, %v669, 0
      %v728 = vsel %vm600, %v670, 0
      %v731 = vsel %vm600, %v671, 0
      %v734 = vsel %vm600, %v672, 0
      %v737 = vsel %vm600, %v673, 0
      %v740 = vsel %vm600, %v674, 0
      %v743 = vsel %vm600, %v675, 0
      %v746 = vsel %vm600, %v676, 0
      %v749 = vsel %vm600, %v677, 0
      %v752 = vsel %vm600, %v678, 0
      %v755 = vsel %vm600, %v679, 0
      %v758 = vsel %vm600, %v680, 0
      %v761 = vsel %vm600, %v681, 0
      %v764 = vsel %vm600, %v682, 0
      %v767 = vsel %vm600, %v683, 0
      %v770 = vsel %vm600, %v684, 0
      %v773 = vsel %vm600, %v685, 0
      %v776 = vsel %vm600, %v686, 0
      %v779 = vsel %vm600, %v687, 0
      %v782 = vsel %vm600, %v688, 0
      %v785 = vsel %vm600, %v689, 0
      %v788 = vsel %vm600, %v690, 0
      %v791 = vsel %vm600, %v691, 0
      %v794 = vsel %vm600, %v692, 0
      %v797 = vsel %vm600, %v693, 0
      %v800 = vsel %vm600, %v694, 0
      %v803 = vsel %vm600, %v695, 0
      %v806 = vsel %vm600, %v696, 0
      %808 = vmatprep.subr.bf16.mxu0 0
      %809 = vmatpush1.bf16.msra.mxu0 0
      %810 = vmatprep.subr.bf16.mxu0 0
      %811 = vmatpush1.bf16.msra.mxu0 0
      %812 = vmatprep.subr.bf16.mxu0 0
      %813 = vmatpush1.bf16.msra.mxu0 0
      %814 = vmatprep.subr.bf16.mxu0 0
      %815 = vmatpush1.bf16.msra.mxu0 0
      %816 = vmatprep.subr.bf16.mxu0 0
      %817 = vmatpush1.bf16.msra.mxu0 0
      %818 = vmatprep.subr.bf16.mxu0 0
      %819 = vmatpush1.bf16.msra.mxu0 0
      %820 = vmatprep.subr.bf16.mxu0 0
      %821 = vmatpush1.bf16.msra.mxu0 0
      %822 = vmatprep.subr.bf16.mxu0 0
      %823 = vmatpush1.bf16.msra.mxu0 %v710
      %824 = vmatprep.subr.bf16.mxu0 0
      %825 = vmatpush2.bf16.msra.mxu0 0
      %826 = vmatprep.subr.bf16.mxu0 0
      %827 = vmatpush2.bf16.msra.mxu0 0
      %828 = vmatprep.subr.bf16.mxu0 0
      %829 = vmatpush2.bf16.msra.mxu0 0
      %830 = vmatprep.subr.bf16.mxu0 0
      %831 = vmatpush2.bf16.msra.mxu0 0
      %832 = vmatprep.subr.bf16.mxu0 0
      %833 = vmatpush2.bf16.msra.mxu0 0
      %834 = vmatprep.subr.bf16.mxu0 0
      %835 = vmatpush2.bf16.msra.mxu0 0
      %836 = vmatprep.subr.bf16.mxu0 0
      %837 = vmatpush2.bf16.msra.mxu0 0
      %838 = vmatprep.subr.bf16.mxu0 0
      %839 = vmatpush2.bf16.msra.mxu0 0
      %840 = vmatprep.mubr.bf16.mxu0 0
      %841 = vmatmul.mubr.bf16.gmra.mxu0 %v713
      %v842 = vpop.f32.mrf.mxu0
      %v843 = vadd.f32 %v704, %v842
      %v844 = vpop.f32.mrf.mxu0
      %v845 = vpop.f32.mrf.mxu0
      %v846 = vadd.f32 %v704, %v845
      %v847 = vpop.f32.mrf.mxu0
      %848 = vmatprep.mubr.bf16.mxu0 0
      %849 = vmatmul.mubr.bf16.gmra.mxu0 %v716
      %v850 = vpop.f32.mrf.mxu0
      %v851 = vadd.f32 %v704, %v850
      %v852 = vpop.f32.mrf.mxu0
      %v853 = vpop.f32.mrf.mxu0
      %v854 = vadd.f32 %v704, %v853
      %v855 = vpop.f32.mrf.mxu0
      %856 = vmatprep.mubr.bf16.mxu0 0
      %857 = vmatmul.mubr.bf16.gmra.mxu0 %v719
      %v858 = vpop.f32.mrf.mxu0
      %v859 = vadd.f32 %v704, %v858
      %v860 = vpop.f32.mrf.mxu0
      %v861 = vpop.f32.mrf.mxu0
      %v862 = vadd.f32 %v704, %v861
      %v863 = vpop.f32.mrf.mxu0
      %864 = vmatprep.mubr.bf16.mxu0 0
      %865 = vmatmul.mubr.bf16.gmra.mxu0 %v722
      %v866 = vpop.f32.mrf.mxu0
      %v867 = vadd.f32 %v704, %v866
      %v868 = vpop.f32.mrf.mxu0
      %v869 = vpop.f32.mrf.mxu0
      %v870 = vadd.f32 %v704, %v869
      %v871 = vpop.f32.mrf.mxu0
      %872 = vmatprep.mubr.bf16.mxu0 0
      %873 = vmatmul.mubr.bf16.gmra.mxu0 %v725
      %v874 = vpop.f32.mrf.mxu0
      %v875 = vadd.f32 %v704, %v874
      %v876 = vpop.f32.mrf.mxu0
      %v877 = vpop.f32.mrf.mxu0
      %v878 = vadd.f32 %v704, %v877
      %v879 = vpop.f32.mrf.mxu0
      %880 = vmatprep.mubr.bf16.mxu0 0
      %881 = vmatmul.mubr.bf16.gmra.mxu0 %v728
      %v882 = vpop.f32.mrf.mxu0
      %v883 = vadd.f32 %v704, %v882
      %v884 = vpop.f32.mrf.mxu0
      %v885 = vpop.f32.mrf.mxu0
      %v886 = vadd.f32 %v704, %v885
      %v887 = vpop.f32.mrf.mxu0
      %888 = vmatprep.mubr.bf16.mxu0 0
      %889 = vmatmul.mubr.bf16.gmra.mxu0 %v731
      %v890 = vpop.f32.mrf.mxu0
      %v891 = vadd.f32 %v704, %v890
      %v892 = vpop.f32.mrf.mxu0
      %v893 = vpop.f32.mrf.mxu0
      %v894 = vadd.f32 %v704, %v893
      %v895 = vpop.f32.mrf.mxu0
      %896 = vmatprep.mubr.bf16.mxu0 0
      %897 = vmatmul.mubr.bf16.gmra.mxu0 %v734
      %v898 = vpop.f32.mrf.mxu0
      %v899 = vadd.f32 %v704, %v898
      %v900 = vpop.f32.mrf.mxu0
      %v901 = vpop.f32.mrf.mxu0
      %v902 = vadd.f32 %v704, %v901
      %v903 = vpop.f32.mrf.mxu0
      %904 = vmatprep.mubr.bf16.mxu0 0
      %905 = vmatmul.mubr.bf16.gmra.mxu0 %v737
      %v906 = vpop.f32.mrf.mxu0
      %v907 = vadd.f32 %v704, %v906
      %v908 = vpop.f32.mrf.mxu0
      %v909 = vpop.f32.mrf.mxu0
      %v910 = vadd.f32 %v704, %v909
      %v911 = vpop.f32.mrf.mxu0
      %912 = vmatprep.mubr.bf16.mxu0 0
      %913 = vmatmul.mubr.bf16.gmra.mxu0 %v740
      %v914 = vpop.f32.mrf.mxu0
      %v915 = vadd.f32 %v704, %v914
      %v916 = vpop.f32.mrf.mxu0
      %v917 = vpop.f32.mrf.mxu0
      %v918 = vadd.f32 %v704, %v917
      %v919 = vpop.f32.mrf.mxu0
      %920 = vmatprep.mubr.bf16.mxu0 0
      %921 = vmatmul.mubr.bf16.gmra.mxu0 %v743
      %v922 = vpop.f32.mrf.mxu0
      %v923 = vadd.f32 %v704, %v922
      %v924 = vpop.f32.mrf.mxu0
      %v925 = vpop.f32.mrf.mxu0
      %v926 = vadd.f32 %v704, %v925
      %v927 = vpop.f32.mrf.mxu0
      %928 = vmatprep.mubr.bf16.mxu0 0
      %929 = vmatmul.mubr.bf16.gmra.mxu0 %v746
      %v930 = vpop.f32.mrf.mxu0
      %v931 = vadd.f32 %v704, %v930
      %v932 = vpop.f32.mrf.mxu0
      %v933 = vpop.f32.mrf.mxu0
      %v934 = vadd.f32 %v704, %v933
      %v935 = vpop.f32.mrf.mxu0
      %936 = vmatprep.mubr.bf16.mxu0 0
      %937 = vmatmul.mubr.bf16.gmra.mxu0 %v749
      %v938 = vpop.f32.mrf.mxu0
      %v939 = vadd.f32 %v704, %v938
      %v940 = vpop.f32.mrf.mxu0
      %v941 = vpop.f32.mrf.mxu0
      %v942 = vadd.f32 %v704, %v941
      %v943 = vpop.f32.mrf.mxu0
      %944 = vmatprep.mubr.bf16.mxu0 0
      %945 = vmatmul.mubr.bf16.gmra.mxu0 %v752
      %v946 = vpop.f32.mrf.mxu0
      %v947 = vadd.f32 %v704, %v946
      %v948 = vpop.f32.mrf.mxu0
      %v949 = vpop.f32.mrf.mxu0
      %v950 = vadd.f32 %v704, %v949
      %v951 = vpop.f32.mrf.mxu0
      %952 = vmatprep.mubr.bf16.mxu0 0
      %953 = vmatmul.mubr.bf16.gmra.mxu0 %v755
      %v954 = vpop.f32.mrf.mxu0
      %v955 = vadd.f32 %v704, %v954
      %v956 = vpop.f32.mrf.mxu0
      %v957 = vpop.f32.mrf.mxu0
      %v958 = vadd.f32 %v704, %v957
      %v959 = vpop.f32.mrf.mxu0
      %960 = vmatprep.mubr.bf16.mxu0 0
      %961 = vmatmul.mubr.bf16.gmra.mxu0 %v758
      %v962 = vpop.f32.mrf.mxu0
      %v963 = vadd.f32 %v704, %v962
      %v964 = vpop.f32.mrf.mxu0
      %v965 = vpop.f32.mrf.mxu0
      %v966 = vadd.f32 %v704, %v965
      %v967 = vpop.f32.mrf.mxu0
      %968 = vmatprep.mubr.bf16.mxu0 0
      %969 = vmatmul.mubr.bf16.gmra.mxu0 %v761
      %v970 = vpop.f32.mrf.mxu0
      %v971 = vadd.f32 %v704, %v970
      %v972 = vpop.f32.mrf.mxu0
      %v973 = vpop.f32.mrf.mxu0
      %v974 = vadd.f32 %v704, %v973
      %v975 = vpop.f32.mrf.mxu0
      %976 = vmatprep.mubr.bf16.mxu0 0
      %977 = vmatmul.mubr.bf16.gmra.mxu0 %v764
      %v978 = vpop.f32.mrf.mxu0
      %v979 = vadd.f32 %v704, %v978
      %v980 = vpop.f32.mrf.mxu0
      %v981 = vpop.f32.mrf.mxu0
      %v982 = vadd.f32 %v704, %v981
      %v983 = vpop.f32.mrf.mxu0
      %984 = vmatprep.mubr.bf16.mxu0 0
      %985 = vmatmul.mubr.bf16.gmra.mxu0 %v767
      %v986 = vpop.f32.mrf.mxu0
      %v987 = vadd.f32 %v704, %v986
      %v988 = vpop.f32.mrf.mxu0
      %v989 = vpop.f32.mrf.mxu0
      %v990 = vadd.f32 %v704, %v989
      %v991 = vpop.f32.mrf.mxu0
      %992 = vmatprep.mubr.bf16.mxu0 0
      %993 = vmatmul.mubr.bf16.gmra.mxu0 %v770
      %v994 = vpop.f32.mrf.mxu0
      %v995 = vadd.f32 %v704, %v994
      %v996 = vpop.f32.mrf.mxu0
      %v997 = vpop.f32.mrf.mxu0
      %v998 = vadd.f32 %v704, %v997
      %v999 = vpop.f32.mrf.mxu0
      %1000 = vmatprep.mubr.bf16.mxu0 0
      %1001 = vmatmul.mubr.bf16.gmra.mxu0 %v773
      %v1002 = vpop.f32.mrf.mxu0
      %v1003 = vadd.f32 %v704, %v1002
      %v1004 = vpop.f32.mrf.mxu0
      %v1005 = vpop.f32.mrf.mxu0
      %v1006 = vadd.f32 %v704, %v1005
      %v1007 = vpop.f32.mrf.mxu0
      %1008 = vmatprep.mubr.bf16.mxu0 0
      %1009 = vmatmul.mubr.bf16.gmra.mxu0 %v776
      %v1010 = vpop.f32.mrf.mxu0
      %v1011 = vadd.f32 %v704, %v1010
      %v1012 = vpop.f32.mrf.mxu0
      %v1013 = vpop.f32.mrf.mxu0
      %v1014 = vadd.f32 %v704, %v1013
      %v1015 = vpop.f32.mrf.mxu0
      %1016 = vmatprep.mubr.bf16.mxu0 0
      %1017 = vmatmul.mubr.bf16.gmra.mxu0 %v779
      %v1018 = vpop.f32.mrf.mxu0
      %v1019 = vadd.f32 %v704, %v1018
      %v1020 = vpop.f32.mrf.mxu0
      %v1021 = vpop.f32.mrf.mxu0
      %v1022 = vadd.f32 %v704, %v1021
      %v1023 = vpop.f32.mrf.mxu0
      %1024 = vmatprep.mubr.bf16.mxu0 0
      %1025 = vmatmul.mubr.bf16.gmra.mxu0 %v782
      %v1026 = vpop.f32.mrf.mxu0
      %v1027 = vadd.f32 %v704, %v1026
      %v1028 = vpop.f32.mrf.mxu0
      %v1029 = vpop.f32.mrf.mxu0
      %v1030 = vadd.f32 %v704, %v1029
      %v1031 = vpop.f32.mrf.mxu0
      %1032 = vmatprep.mubr.bf16.mxu0 0
      %1033 = vmatmul.mubr.bf16.gmra.mxu0 %v785
      %v1034 = vpop.f32.mrf.mxu0
      %v1035 = vadd.f32 %v704, %v1034
      %v1036 = vpop.f32.mrf.mxu0
      %v1037 = vpop.f32.mrf.mxu0
      %v1038 = vadd.f32 %v704, %v1037
      %v1039 = vpop.f32.mrf.mxu0
      %1040 = vmatprep.mubr.bf16.mxu0 0
      %1041 = vmatmul.mubr.bf16.gmra.mxu0 %v788
      %v1042 = vpop.f32.mrf.mxu0
      %v1043 = vadd.f32 %v704, %v1042
      %v1044 = vpop.f32.mrf.mxu0
      %v1045 = vpop.f32.mrf.mxu0
      %v1046 = vadd.f32 %v704, %v1045
      %v1047 = vpop.f32.mrf.mxu0
      %1048 = vmatprep.mubr.bf16.mxu0 0
      %1049 = vmatmul.mubr.bf16.gmra.mxu0 %v791
      %v1050 = vpop.f32.mrf.mxu0
      %v1051 = vadd.f32 %v704, %v1050
      %v1052 = vpop.f32.mrf.mxu0
      %v1053 = vpop.f32.mrf.mxu0
      %v1054 = vadd.f32 %v704, %v1053
      %v1055 = vpop.f32.mrf.mxu0
      %1056 = vmatprep.mubr.bf16.mxu0 0
      %1057 = vmatmul.mubr.bf16.gmra.mxu0 %v794
      %v1058 = vpop.f32.mrf.mxu0
      %v1059 = vadd.f32 %v704, %v1058
      %v1060 = vpop.f32.mrf.mxu0
      %v1061 = vpop.f32.mrf.mxu0
      %v1062 = vadd.f32 %v704, %v1061
      %v1063 = vpop.f32.mrf.mxu0
      %1064 = vmatprep.mubr.bf16.mxu0 0
      %1065 = vmatmul.mubr.bf16.gmra.mxu0 %v797
      %v1066 = vpop.f32.mrf.mxu0
      %v1067 = vadd.f32 %v704, %v1066
      %v1068 = vpop.f32.mrf.mxu0
      %v1069 = vpop.f32.mrf.mxu0
      %v1070 = vadd.f32 %v704, %v1069
      %v1071 = vpop.f32.mrf.mxu0
      %1072 = vmatprep.mubr.bf16.mxu0 0
      %1073 = vmatmul.mubr.bf16.gmra.mxu0 %v800
      %v1074 = vpop.f32.mrf.mxu0
      %v1075 = vadd.f32 %v704, %v1074
      %v1076 = vpop.f32.mrf.mxu0
      %v1077 = vpop.f32.mrf.mxu0
      %v1078 = vadd.f32 %v704, %v1077
      %v1079 = vpop.f32.mrf.mxu0
      %1080 = vmatprep.mubr.bf16.mxu0 0
      %1081 = vmatmul.mubr.bf16.gmra.mxu0 %v803
      %v1082 = vpop.f32.mrf.mxu0
      %v1083 = vadd.f32 %v704, %v1082
      %v1084 = vpop.f32.mrf.mxu0
      %v1085 = vpop.f32.mrf.mxu0
      %v1086 = vadd.f32 %v704, %v1085
      %v1087 = vpop.f32.mrf.mxu0
      %1088 = vmatprep.mubr.bf16.mxu0 0
      %1089 = vmatmul.mubr.bf16.gmra.mxu0 %v806
      %v1090 = vpop.f32.mrf.mxu0
      %v1091 = vadd.f32 %v704, %v1090
      %v1092 = vpop.f32.mrf.mxu0
      %v1093 = vpop.f32.mrf.mxu0
      %v1094 = vadd.f32 %v704, %v1093
      %v1095 = vpop.f32.mrf.mxu0
      %1096 = vdwg.mxu0
      %v1097 = vxor.u32 %v843, 2147483648
      %v1098 = vxor.u32 %v846, 2147483648
      %v1099 = vxor.u32 %v851, 2147483648
      %v1100 = vxor.u32 %v854, 2147483648
      %v1101 = vxor.u32 %v859, 2147483648
      %v1102 = vxor.u32 %v862, 2147483648
      %v1103 = vxor.u32 %v867, 2147483648
      %v1104 = vxor.u32 %v870, 2147483648
      %v1105 = vxor.u32 %v875, 2147483648
      %v1106 = vxor.u32 %v878, 2147483648
      %v1107 = vxor.u32 %v883, 2147483648
      %v1108 = vxor.u32 %v886, 2147483648
      %v1109 = vxor.u32 %v891, 2147483648
      %v1110 = vxor.u32 %v894, 2147483648
      %v1111 = vxor.u32 %v899, 2147483648
      %v1112 = vxor.u32 %v902, 2147483648
      %v1113 = vxor.u32 %v907, 2147483648
      %v1114 = vxor.u32 %v910, 2147483648
      %v1115 = vxor.u32 %v915, 2147483648
      %v1116 = vxor.u32 %v918, 2147483648
      %v1117 = vxor.u32 %v923, 2147483648
      %v1118 = vxor.u32 %v926, 2147483648
      %v1119 = vxor.u32 %v931, 2147483648
      %v1120 = vxor.u32 %v934, 2147483648
      %v1121 = vxor.u32 %v939, 2147483648
      %v1122 = vxor.u32 %v942, 2147483648
      %v1123 = vxor.u32 %v947, 2147483648
      %v1124 = vxor.u32 %v950, 2147483648
      %v1125 = vxor.u32 %v955, 2147483648
      %v1126 = vxor.u32 %v958, 2147483648
      %v1127 = vxor.u32 %v963, 2147483648
      %v1128 = vxor.u32 %v966, 2147483648
      %v1129 = vxor.u32 %v971, 2147483648
      %v1130 = vxor.u32 %v974, 2147483648
      %v1131 = vxor.u32 %v979, 2147483648
      %v1132 = vxor.u32 %v982, 2147483648
      %v1133 = vxor.u32 %v987, 2147483648
      %v1134 = vxor.u32 %v990, 2147483648
      %v1135 = vxor.u32 %v995, 2147483648
      %v1136 = vxor.u32 %v998, 2147483648
      %v1137 = vxor.u32 %v1003, 2147483648
      %v1138 = vxor.u32 %v1006, 2147483648
      %v1139 = vxor.u32 %v1011, 2147483648
      %v1140 = vxor.u32 %v1014, 2147483648
      %v1141 = vxor.u32 %v1019, 2147483648
      %v1142 = vxor.u32 %v1022, 2147483648
      %v1143 = vxor.u32 %v1027, 2147483648
      %v1144 = vxor.u32 %v1030, 2147483648
      %v1145 = vxor.u32 %v1035, 2147483648
      %v1146 = vxor.u32 %v1038, 2147483648
      %v1147 = vxor.u32 %v1043, 2147483648
      %v1148 = vxor.u32 %v1046, 2147483648
      %v1149 = vxor.u32 %v1051, 2147483648
      %v1150 = vxor.u32 %v1054, 2147483648
      %v1151 = vxor.u32 %v1059, 2147483648
      %v1152 = vxor.u32 %v1062, 2147483648
      %v1153 = vxor.u32 %v1067, 2147483648
      %v1154 = vxor.u32 %v1070, 2147483648
      %v1155 = vxor.u32 %v1075, 2147483648
      %v1156 = vxor.u32 %v1078, 2147483648
      %v1157 = vxor.u32 %v1083, 2147483648
      %v1158 = vxor.u32 %v1086, 2147483648
      %v1159 = vxor.u32 %v1091, 2147483648
      %v1160 = vxor.u32 %v1094, 2147483648
      %v1161 = vmul.f32 %v1097, 1.442695
      %v1162 = vpow.pop %v1161
      %v1163 = vmul.f32 %v1098, 1.442695
      %v1164 = vpow.pop %v1163
      %v1165 = vmul.f32 %v1099, 1.442695
      %v1166 = vpow.pop %v1165
      %v1167 = vmul.f32 %v1100, 1.442695
      %v1168 = vpow.pop %v1167
      %v1169 = vmul.f32 %v1101, 1.442695
      %v1170 = vpow.pop %v1169
      %v1171 = vmul.f32 %v1102, 1.442695
      %v1172 = vpow.pop %v1171
      %v1173 = vmul.f32 %v1103, 1.442695
      %v1174 = vpow.pop %v1173
      %v1175 = vmul.f32 %v1104, 1.442695
      %v1176 = vpow.pop %v1175
      %v1177 = vmul.f32 %v1105, 1.442695
      %v1178 = vpow.pop %v1177
      %v1179 = vmul.f32 %v1106, 1.442695
      %v1180 = vpow.pop %v1179
      %v1181 = vmul.f32 %v1107, 1.442695
      %v1182 = vpow.pop %v1181
      %v1183 = vmul.f32 %v1108, 1.442695
      %v1184 = vpow.pop %v1183
      %v1185 = vmul.f32 %v1109, 1.442695
      %v1186 = vpow.pop %v1185
      %v1187 = vmul.f32 %v1110, 1.442695
      %v1188 = vpow.pop %v1187
      %v1189 = vmul.f32 %v1111, 1.442695
      %v1190 = vpow.pop %v1189
      %v1191 = vmul.f32 %v1112, 1.442695
      %v1192 = vpow.pop %v1191
      %v1193 = vmul.f32 %v1113, 1.442695
      %v1194 = vpow.pop %v1193
      %v1195 = vmul.f32 %v1114, 1.442695
      %v1196 = vpow.pop %v1195
      %v1197 = vmul.f32 %v1115, 1.442695
      %v1198 = vpow.pop %v1197
      %v1199 = vmul.f32 %v1116, 1.442695
      %v1200 = vpow.pop %v1199
      %v1201 = vmul.f32 %v1117, 1.442695
      %v1202 = vpow.pop %v1201
      %v1203 = vmul.f32 %v1118, 1.442695
      %v1204 = vpow.pop %v1203
      %v1205 = vmul.f32 %v1119, 1.442695
      %v1206 = vpow.pop %v1205
      %v1207 = vmul.f32 %v1120, 1.442695
      %v1208 = vpow.pop %v1207
      %v1209 = vmul.f32 %v1121, 1.442695
      %v1210 = vpow.pop %v1209
      %v1211 = vmul.f32 %v1122, 1.442695
      %v1212 = vpow.pop %v1211
      %v1213 = vmul.f32 %v1123, 1.442695
      %v1214 = vpow.pop %v1213
      %v1215 = vmul.f32 %v1124, 1.442695
      %v1216 = vpow.pop %v1215
      %v1217 = vmul.f32 %v1125, 1.442695
      %v1218 = vpow.pop %v1217
      %v1219 = vmul.f32 %v1126, 1.442695
      %v1220 = vpow.pop %v1219
      %v1221 = vmul.f32 %v1127, 1.442695
      %v1222 = vpow.pop %v1221
      %v1223 = vmul.f32 %v1128, 1.442695
      %v1224 = vpow.pop %v1223
      %v1225 = vmul.f32 %v1129, 1.442695
      %v1226 = vpow.pop %v1225
      %v1227 = vmul.f32 %v1130, 1.442695
      %v1228 = vpow.pop %v1227
      %v1229 = vmul.f32 %v1131, 1.442695
      %v1230 = vpow.pop %v1229
      %v1231 = vmul.f32 %v1132, 1.442695
      %v1232 = vpow.pop %v1231
      %v1233 = vmul.f32 %v1133, 1.442695
      %v1234 = vpow.pop %v1233
      %v1235 = vmul.f32 %v1134, 1.442695
      %v1236 = vpow.pop %v1235
      %v1237 = vmul.f32 %v1135, 1.442695
      %v1238 = vpow.pop %v1237
      %v1239 = vmul.f32 %v1136, 1.442695
      %v1240 = vpow.pop %v1239
      %v1241 = vmul.f32 %v1137, 1.442695
      %v1242 = vpow.pop %v1241
      %v1243 = vmul.f32 %v1138, 1.442695
      %v1244 = vpow.pop %v1243
      %v1245 = vmul.f32 %v1139, 1.442695
      %v1246 = vpow.pop %v1245
      %v1247 = vmul.f32 %v1140, 1.442695
      %v1248 = vpow.pop %v1247
      %v1249 = vmul.f32 %v1141, 1.442695
      %v1250 = vpow.pop %v1249
      %v1251 = vmul.f32 %v1142, 1.442695
      %v1252 = vpow.pop %v1251
      %v1253 = vmul.f32 %v1143, 1.442695
      %v1254 = vpow.pop %v1253
      %v1255 = vmul.f32 %v1144, 1.442695
      %v1256 = vpow.pop %v1255
      %v1257 = vmul.f32 %v1145, 1.442695
      %v1258 = vpow.pop %v1257
      %v1259 = vmul.f32 %v1146, 1.442695
      %v1260 = vpow.pop %v1259
      %v1261 = vmul.f32 %v1147, 1.442695
      %v1262 = vpow.pop %v1261
      %v1263 = vmul.f32 %v1148, 1.442695
      %v1264 = vpow.pop %v1263
      %v1265 = vmul.f32 %v1149, 1.442695
      %v1266 = vpow.pop %v1265
      %v1267 = vmul.f32 %v1150, 1.442695
      %v1268 = vpow.pop %v1267
      %v1269 = vmul.f32 %v1151, 1.442695
      %v1270 = vpow.pop %v1269
      %v1271 = vmul.f32 %v1152, 1.442695
      %v1272 = vpow.pop %v1271
      %v1273 = vmul.f32 %v1153, 1.442695
      %v1274 = vpow.pop %v1273
      %v1275 = vmul.f32 %v1154, 1.442695
      %v1276 = vpow.pop %v1275
      %v1277 = vmul.f32 %v1155, 1.442695
      %v1278 = vpow.pop %v1277
      %v1279 = vmul.f32 %v1156, 1.442695
      %v1280 = vpow.pop %v1279
      %v1281 = vmul.f32 %v1157, 1.442695
      %v1282 = vpow.pop %v1281
      %v1283 = vmul.f32 %v1158, 1.442695
      %v1284 = vpow.pop %v1283
      %v1285 = vmul.f32 %v1159, 1.442695
      %v1286 = vpow.pop %v1285
      %v1287 = vmul.f32 %v1160, 1.442695
      %v1288 = vpow.pop %v1287
      %v1289 = vadd.f32 %v1162, 1.0
      %v1290 = vadd.f32 %v1164, 1.0
      %v1291 = vadd.f32 %v1166, 1.0
      %v1292 = vadd.f32 %v1168, 1.0
      %v1293 = vadd.f32 %v1170, 1.0
      %v1294 = vadd.f32 %v1172, 1.0
      %v1295 = vadd.f32 %v1174, 1.0
      %v1296 = vadd.f32 %v1176, 1.0
      %v1297 = vadd.f32 %v1178, 1.0
      %v1298 = vadd.f32 %v1180, 1.0
      %v1299 = vadd.f32 %v1182, 1.0
      %v1300 = vadd.f32 %v1184, 1.0
      %v1301 = vadd.f32 %v1186, 1.0
      %v1302 = vadd.f32 %v1188, 1.0
      %v1303 = vadd.f32 %v1190, 1.0
      %v1304 = vadd.f32 %v1192, 1.0
      %v1305 = vadd.f32 %v1194, 1.0
      %v1306 = vadd.f32 %v1196, 1.0
      %v1307 = vadd.f32 %v1198, 1.0
      %v1308 = vadd.f32 %v1200, 1.0
      %v1309 = vadd.f32 %v1202, 1.0
      %v1310 = vadd.f32 %v1204, 1.0
      %v1311 = vadd.f32 %v1206, 1.0
      %v1312 = vadd.f32 %v1208, 1.0
      %v1313 = vadd.f32 %v1210, 1.0
      %v1314 = vadd.f32 %v1212, 1.0
      %v1315 = vadd.f32 %v1214, 1.0
      %v1316 = vadd.f32 %v1216, 1.0
      %v1317 = vadd.f32 %v1218, 1.0
      %v1318 = vadd.f32 %v1220, 1.0
      %v1319 = vadd.f32 %v1222, 1.0
      %v1320 = vadd.f32 %v1224, 1.0
      %v1321 = vadd.f32 %v1226, 1.0
      %v1322 = vadd.f32 %v1228, 1.0
      %v1323 = vadd.f32 %v1230, 1.0
      %v1324 = vadd.f32 %v1232, 1.0
      %v1325 = vadd.f32 %v1234, 1.0
      %v1326 = vadd.f32 %v1236, 1.0
      %v1327 = vadd.f32 %v1238, 1.0
      %v1328 = vadd.f32 %v1240, 1.0
      %v1329 = vadd.f32 %v1242, 1.0
      %v1330 = vadd.f32 %v1244, 1.0
      %v1331 = vadd.f32 %v1246, 1.0
      %v1332 = vadd.f32 %v1248, 1.0
      %v1333 = vadd.f32 %v1250, 1.0
      %v1334 = vadd.f32 %v1252, 1.0
      %v1335 = vadd.f32 %v1254, 1.0
      %v1336 = vadd.f32 %v1256, 1.0
      %v1337 = vadd.f32 %v1258, 1.0
      %v1338 = vadd.f32 %v1260, 1.0
      %v1339 = vadd.f32 %v1262, 1.0
      %v1340 = vadd.f32 %v1264, 1.0
      %v1341 = vadd.f32 %v1266, 1.0
      %v1342 = vadd.f32 %v1268, 1.0
      %v1343 = vadd.f32 %v1270, 1.0
      %v1344 = vadd.f32 %v1272, 1.0
      %v1345 = vadd.f32 %v1274, 1.0
      %v1346 = vadd.f32 %v1276, 1.0
      %v1347 = vadd.f32 %v1278, 1.0
      %v1348 = vadd.f32 %v1280, 1.0
      %v1349 = vadd.f32 %v1282, 1.0
      %v1350 = vadd.f32 %v1284, 1.0
      %v1351 = vadd.f32 %v1286, 1.0
      %v1352 = vadd.f32 %v1288, 1.0
      %v1353 = vrcp.pop %v1289
      %v1354 = vmul.f32 1.0, %v1353
      %v1355 = vrcp.pop %v1290
      %v1356 = vmul.f32 1.0, %v1355
      %v1357 = vrcp.pop %v1291
      %v1358 = vmul.f32 1.0, %v1357
      %v1359 = vrcp.pop %v1292
      %v1360 = vmul.f32 1.0, %v1359
      %v1361 = vrcp.pop %v1293
      %v1362 = vmul.f32 1.0, %v1361
      %v1363 = vrcp.pop %v1294
      %v1364 = vmul.f32 1.0, %v1363
      %v1365 = vrcp.pop %v1295
      %v1366 = vmul.f32 1.0, %v1365
      %v1367 = vrcp.pop %v1296
      %v1368 = vmul.f32 1.0, %v1367
      %v1369 = vrcp.pop %v1297
      %v1370 = vmul.f32 1.0, %v1369
      %v1371 = vrcp.pop %v1298
      %v1372 = vmul.f32 1.0, %v1371
      %v1373 = vrcp.pop %v1299
      %v1374 = vmul.f32 1.0, %v1373
      %v1375 = vrcp.pop %v1300
      %v1376 = vmul.f32 1.0, %v1375
      %v1377 = vrcp.pop %v1301
      %v1378 = vmul.f32 1.0, %v1377
      %v1379 = vrcp.pop %v1302
      %v1380 = vmul.f32 1.0, %v1379
      %v1381 = vrcp.pop %v1303
      %v1382 = vmul.f32 1.0, %v1381
      %v1383 = vrcp.pop %v1304
      %v1384 = vmul.f32 1.0, %v1383
      %v1385 = vrcp.pop %v1305
      %v1386 = vmul.f32 1.0, %v1385
      %v1387 = vrcp.pop %v1306
      %v1388 = vmul.f32 1.0, %v1387
      %v1389 = vrcp.pop %v1307
      %v1390 = vmul.f32 1.0, %v1389
      %v1391 = vrcp.pop %v1308
      %v1392 = vmul.f32 1.0, %v1391
      %v1393 = vrcp.pop %v1309
      %v1394 = vmul.f32 1.0, %v1393
      %v1395 = vrcp.pop %v1310
      %v1396 = vmul.f32 1.0, %v1395
      %v1397 = vrcp.pop %v1311
      %v1398 = vmul.f32 1.0, %v1397
      %v1399 = vrcp.pop %v1312
      %v1400 = vmul.f32 1.0, %v1399
      %v1401 = vrcp.pop %v1313
      %v1402 = vmul.f32 1.0, %v1401
      %v1403 = vrcp.pop %v1314
      %v1404 = vmul.f32 1.0, %v1403
      %v1405 = vrcp.pop %v1315
      %v1406 = vmul.f32 1.0, %v1405
      %v1407 = vrcp.pop %v1316
      %v1408 = vmul.f32 1.0, %v1407
      %v1409 = vrcp.pop %v1317
      %v1410 = vmul.f32 1.0, %v1409
      %v1411 = vrcp.pop %v1318
      %v1412 = vmul.f32 1.0, %v1411
      %v1413 = vrcp.pop %v1319
      %v1414 = vmul.f32 1.0, %v1413
      %v1415 = vrcp.pop %v1320
      %v1416 = vmul.f32 1.0, %v1415
      %v1417 = vrcp.pop %v1321
      %v1418 = vmul.f32 1.0, %v1417
      %v1419 = vrcp.pop %v1322
      %v1420 = vmul.f32 1.0, %v1419
      %v1421 = vrcp.pop %v1323
      %v1422 = vmul.f32 1.0, %v1421
      %v1423 = vrcp.pop %v1324
      %v1424 = vmul.f32 1.0, %v1423
      %v1425 = vrcp.pop %v1325
      %v1426 = vmul.f32 1.0, %v1425
      %v1427 = vrcp.pop %v1326
      %v1428 = vmul.f32 1.0, %v1427
      %v1429 = vrcp.pop %v1327
      %v1430 = vmul.f32 1.0, %v1429
      %v1431 = vrcp.pop %v1328
      %v1432 = vmul.f32 1.0, %v1431
      %v1433 = vrcp.pop %v1329
      %v1434 = vmul.f32 1.0, %v1433
      %v1435 = vrcp.pop %v1330
      %v1436 = vmul.f32 1.0, %v1435
      %v1437 = vrcp.pop %v1331
      %v1438 = vmul.f32 1.0, %v1437
      %v1439 = vrcp.pop %v1332
      %v1440 = vmul.f32 1.0, %v1439
      %v1441 = vrcp.pop %v1333
      %v1442 = vmul.f32 1.0, %v1441
      %v1443 = vrcp.pop %v1334
      %v1444 = vmul.f32 1.0, %v1443
      %v1445 = vrcp.pop %v1335
      %v1446 = vmul.f32 1.0, %v1445
      %v1447 = vrcp.pop %v1336
      %v1448 = vmul.f32 1.0, %v1447
      %v1449 = vrcp.pop %v1337
      %v1450 = vmul.f32 1.0, %v1449
      %v1451 = vrcp.pop %v1338
      %v1452 = vmul.f32 1.0, %v1451
      %v1453 = vrcp.pop %v1339
      %v1454 = vmul.f32 1.0, %v1453
      %v1455 = vrcp.pop %v1340
      %v1456 = vmul.f32 1.0, %v1455
      %v1457 = vrcp.pop %v1341
      %v1458 = vmul.f32 1.0, %v1457
      %v1459 = vrcp.pop %v1342
      %v1460 = vmul.f32 1.0, %v1459
      %v1461 = vrcp.pop %v1343
      %v1462 = vmul.f32 1.0, %v1461
      %v1463 = vrcp.pop %v1344
      %v1464 = vmul.f32 1.0, %v1463
      %v1465 = vrcp.pop %v1345
      %v1466 = vmul.f32 1.0, %v1465
      %v1467 = vrcp.pop %v1346
      %v1468 = vmul.f32 1.0, %v1467
      %v1469 = vrcp.pop %v1347
      %v1470 = vmul.f32 1.0, %v1469
      %v1471 = vrcp.pop %v1348
      %v1472 = vmul.f32 1.0, %v1471
      %v1473 = vrcp.pop %v1349
      %v1474 = vmul.f32 1.0, %v1473
      %v1475 = vrcp.pop %v1350
      %v1476 = vmul.f32 1.0, %v1475
      %v1477 = vrcp.pop %v1351
      %v1478 = vmul.f32 1.0, %v1477
      %v1479 = vrcp.pop %v1352
      %v1480 = vmul.f32 1.0, %v1479
      %v1481 = vmul.f32 %v843, %v1354
      %v1482 = vmul.f32 %v846, %v1356
      %v1483 = vmul.f32 %v851, %v1358
      %v1484 = vmul.f32 %v854, %v1360
      %v1485 = vmul.f32 %v859, %v1362
      %v1486 = vmul.f32 %v862, %v1364
      %v1487 = vmul.f32 %v867, %v1366
      %v1488 = vmul.f32 %v870, %v1368
      %v1489 = vmul.f32 %v875, %v1370
      %v1490 = vmul.f32 %v878, %v1372
      %v1491 = vmul.f32 %v883, %v1374
      %v1492 = vmul.f32 %v886, %v1376
      %v1493 = vmul.f32 %v891, %v1378
      %v1494 = vmul.f32 %v894, %v1380
      %v1495 = vmul.f32 %v899, %v1382
      %v1496 = vmul.f32 %v902, %v1384
      %v1497 = vmul.f32 %v907, %v1386
      %v1498 = vmul.f32 %v910, %v1388
      %v1499 = vmul.f32 %v915, %v1390
      %v1500 = vmul.f32 %v918, %v1392
      %v1501 = vmul.f32 %v923, %v1394
      %v1502 = vmul.f32 %v926, %v1396
      %v1503 = vmul.f32 %v931, %v1398
      %v1504 = vmul.f32 %v934, %v1400
      %v1505 = vmul.f32 %v939, %v1402
      %v1506 = vmul.f32 %v942, %v1404
      %v1507 = vmul.f32 %v947, %v1406
      %v1508 = vmul.f32 %v950, %v1408
      %v1509 = vmul.f32 %v955, %v1410
      %v1510 = vmul.f32 %v958, %v1412
      %v1511 = vmul.f32 %v963, %v1414
      %v1512 = vmul.f32 %v966, %v1416
      %v1513 = vmul.f32 %v971, %v1418
      %v1514 = vmul.f32 %v974, %v1420
      %v1515 = vmul.f32 %v979, %v1422
      %v1516 = vmul.f32 %v982, %v1424
      %v1517 = vmul.f32 %v987, %v1426
      %v1518 = vmul.f32 %v990, %v1428
      %v1519 = vmul.f32 %v995, %v1430
      %v1520 = vmul.f32 %v998, %v1432
      %v1521 = vmul.f32 %v1003, %v1434
      %v1522 = vmul.f32 %v1006, %v1436
      %v1523 = vmul.f32 %v1011, %v1438
      %v1524 = vmul.f32 %v1014, %v1440
      %v1525 = vmul.f32 %v1019, %v1442
      %v1526 = vmul.f32 %v1022, %v1444
      %v1527 = vmul.f32 %v1027, %v1446
      %v1528 = vmul.f32 %v1030, %v1448
      %v1529 = vmul.f32 %v1035, %v1450
      %v1530 = vmul.f32 %v1038, %v1452
      %v1531 = vmul.f32 %v1043, %v1454
      %v1532 = vmul.f32 %v1046, %v1456
      %v1533 = vmul.f32 %v1051, %v1458
      %v1534 = vmul.f32 %v1054, %v1460
      %v1535 = vmul.f32 %v1059, %v1462
      %v1536 = vmul.f32 %v1062, %v1464
      %v1537 = vmul.f32 %v1067, %v1466
      %v1538 = vmul.f32 %v1070, %v1468
      %v1539 = vmul.f32 %v1075, %v1470
      %v1540 = vmul.f32 %v1078, %v1472
      %v1541 = vmul.f32 %v1083, %v1474
      %v1542 = vmul.f32 %v1086, %v1476
      %v1543 = vmul.f32 %v1091, %v1478
      %v1544 = vmul.f32 %v1094, %v1480
      %v1545 = vpack.c.bf16 %v1482, %v1481
      %v1546 = vpack.c.bf16 %v1484, %v1483
      %v1547 = vpack.c.bf16 %v1486, %v1485
      %v1548 = vpack.c.bf16 %v1488, %v1487
      %v1549 = vpack.c.bf16 %v1490, %v1489
      %v1550 = vpack.c.bf16 %v1492, %v1491
      %v1551 = vpack.c.bf16 %v1494, %v1493
      %v1552 = vpack.c.bf16 %v1496, %v1495
      %v1553 = vpack.c.bf16 %v1498, %v1497
      %v1554 = vpack.c.bf16 %v1500, %v1499
      %v1555 = vpack.c.bf16 %v1502, %v1501
      %v1556 = vpack.c.bf16 %v1504, %v1503
      %v1557 = vpack.c.bf16 %v1506, %v1505
      %v1558 = vpack.c.bf16 %v1508, %v1507
      %v1559 = vpack.c.bf16 %v1510, %v1509
      %v1560 = vpack.c.bf16 %v1512, %v1511
      %v1561 = vpack.c.bf16 %v1514, %v1513
      %v1562 = vpack.c.bf16 %v1516, %v1515
      %v1563 = vpack.c.bf16 %v1518, %v1517
      %v1564 = vpack.c.bf16 %v1520, %v1519
      %v1565 = vpack.c.bf16 %v1522, %v1521
      %v1566 = vpack.c.bf16 %v1524, %v1523
      %v1567 = vpack.c.bf16 %v1526, %v1525
      %v1568 = vpack.c.bf16 %v1528, %v1527
      %v1569 = vpack.c.bf16 %v1530, %v1529
      %v1570 = vpack.c.bf16 %v1532, %v1531
      %v1571 = vpack.c.bf16 %v1534, %v1533
      %v1572 = vpack.c.bf16 %v1536, %v1535
      %v1573 = vpack.c.bf16 %v1538, %v1537
      %v1574 = vpack.c.bf16 %v1540, %v1539
      %v1575 = vpack.c.bf16 %v1542, %v1541
      %v1576 = vpack.c.bf16 %v1544, %v1543
      %v1577 = vld [vmem:[%s3] sm:$0xf]
      %v1578 = vld [vmem:[%s3 + $0x4] sm:$0xf]
      %v1579 = vld [vmem:[%s3 + $0x8] sm:$0xf]
      %v1580 = vld [vmem:[%s3 + $0xc] sm:$0xf]
      %v1581 = vld [vmem:[%s3 + $0x10] sm:$0xf]
      %v1582 = vld [vmem:[%s3 + $0x14] sm:$0xf]
      %v1583 = vld [vmem:[%s3 + $0x18] sm:$0xf]
      %v1584 = vld [vmem:[%s3 + $0x1c] sm:$0xf]
      %v1585 = vld [vmem:[%s3 + $0x20] sm:$0xf]
      %v1586 = vld [vmem:[%s3 + $0x24] sm:$0xf]
      %v1587 = vld [vmem:[%s3 + $0x28] sm:$0xf]
      %v1588 = vld [vmem:[%s3 + $0x2c] sm:$0xf]
      %v1589 = vld [vmem:[%s3 + $0x30] sm:$0xf]
      %v1590 = vld [vmem:[%s3 + $0x34] sm:$0xf]
      %v1591 = vld [vmem:[%s3 + $0x38] sm:$0xf]
      %v1592 = vld [vmem:[%s3 + $0x3c] sm:$0xf]
      %v1593 = vld [vmem:[%s4] sm:$0x1]
      %v1595 = vlaneseq
      %v1596 = vshrl.u32 %v1595, 7
      %v1597 = vsub.s32 0, %v1596
      %v1598 = vrot.slane %v1593, %v1597
      %v1616 = vunpack.c.l.b16 %v1577
      %v1617 = vunpack.c.l.b16 %v1578
      %v1618 = vunpack.c.l.b16 %v1579
      %v1619 = vunpack.c.l.b16 %v1580
      %v1620 = vunpack.c.l.b16 %v1581
      %v1621 = vunpack.c.l.b16 %v1582
      %v1622 = vunpack.c.l.b16 %v1583
      %v1623 = vunpack.c.l.b16 %v1584
      %v1624 = vunpack.c.l.b16 %v1585
      %v1625 = vunpack.c.l.b16 %v1586
      %v1626 = vunpack.c.l.b16 %v1587
      %v1627 = vunpack.c.l.b16 %v1588
      %v1628 = vunpack.c.l.b16 %v1589
      %v1629 = vunpack.c.l.b16 %v1590
      %v1630 = vunpack.c.l.b16 %v1591
      %v1631 = vunpack.c.l.b16 %v1592
      %v1632 = vpack.c.b16 %v1617, %v1616
      %v1633 = vpack.c.b16 %v1619, %v1618
      %v1634 = vpack.c.b16 %v1621, %v1620
      %v1635 = vpack.c.b16 %v1623, %v1622
      %v1636 = vpack.c.b16 %v1625, %v1624
      %v1637 = vpack.c.b16 %v1627, %v1626
      %v1638 = vpack.c.b16 %v1629, %v1628
      %v1639 = vpack.c.b16 %v1631, %v1630
      %1648 = vmatprep.subr.bf16.mxu0 0
      %1649 = vmatpush1.bf16.msra.mxu0 %v1639
      %1650 = vmatprep.subr.bf16.mxu0 0
      %1651 = vmatpush1.bf16.msra.mxu0 %v1638
      %1652 = vmatprep.subr.bf16.mxu0 0
      %1653 = vmatpush1.bf16.msra.mxu0 %v1637
      %1654 = vmatprep.subr.bf16.mxu0 0
      %1655 = vmatpush1.bf16.msra.mxu0 %v1636
      %1656 = vmatprep.subr.bf16.mxu0 0
      %1657 = vmatpush1.bf16.msra.mxu0 %v1635
      %1658 = vmatprep.subr.bf16.mxu0 0
      %1659 = vmatpush1.bf16.msra.mxu0 %v1634
      %1660 = vmatprep.subr.bf16.mxu0 0
      %1661 = vmatpush1.bf16.msra.mxu0 %v1633
      %1662 = vmatprep.subr.bf16.mxu0 0
      %1663 = vmatpush1.bf16.msra.mxu0 %v1632
      %1664 = vmatprep.subr.bf16.mxu0 0
      %1665 = vmatpush2.bf16.msra.mxu0 0
      %1666 = vmatprep.subr.bf16.mxu0 0
      %1667 = vmatpush2.bf16.msra.mxu0 0
      %1668 = vmatprep.subr.bf16.mxu0 0
      %1669 = vmatpush2.bf16.msra.mxu0 0
      %1670 = vmatprep.subr.bf16.mxu0 0
      %1671 = vmatpush2.bf16.msra.mxu0 0
      %1672 = vmatprep.subr.bf16.mxu0 0
      %1673 = vmatpush2.bf16.msra.mxu0 0
      %1674 = vmatprep.subr.bf16.mxu0 0
      %1675 = vmatpush2.bf16.msra.mxu0 0
      %1676 = vmatprep.subr.bf16.mxu0 0
      %1677 = vmatpush2.bf16.msra.mxu0 0
      %1678 = vmatprep.subr.bf16.mxu0 0
      %1679 = vmatpush2.bf16.msra.mxu0 0
      %1680 = vmatprep.mubr.bf16.mxu0 0
      %1681 = vmatmul.mubr.bf16.gmra.mxu0 %v1545
      %v1682 = vpop.f32.mrf.mxu0
      %v1683 = vadd.f32 %v1598, %v1682
      %v1684 = vpop.f32.mrf.mxu0
      %v1685 = vpop.f32.mrf.mxu0
      %v1686 = vadd.f32 %v1598, %v1685
      %v1687 = vpop.f32.mrf.mxu0
      %1688 = vmatprep.mubr.bf16.mxu0 0
      %1689 = vmatmul.mubr.bf16.gmra.mxu0 %v1546
      %v1690 = vpop.f32.mrf.mxu0
      %v1691 = vadd.f32 %v1598, %v1690
      %v1692 = vpop.f32.mrf.mxu0
      %v1693 = vpop.f32.mrf.mxu0
      %v1694 = vadd.f32 %v1598, %v1693
      %v1695 = vpop.f32.mrf.mxu0
      %1696 = vmatprep.mubr.bf16.mxu0 0
      %1697 = vmatmul.mubr.bf16.gmra.mxu0 %v1547
      %v1698 = vpop.f32.mrf.mxu0
      %v1699 = vadd.f32 %v1598, %v1698
      %v1700 = vpop.f32.mrf.mxu0
      %v1701 = vpop.f32.mrf.mxu0
      %v1702 = vadd.f32 %v1598, %v1701
      %v1703 = vpop.f32.mrf.mxu0
      %1704 = vmatprep.mubr.bf16.mxu0 0
      %1705 = vmatmul.mubr.bf16.gmra.mxu0 %v1548
      %v1706 = vpop.f32.mrf.mxu0
      %v1707 = vadd.f32 %v1598, %v1706
      %v1708 = vpop.f32.mrf.mxu0
      %v1709 = vpop.f32.mrf.mxu0
      %v1710 = vadd.f32 %v1598, %v1709
      %v1711 = vpop.f32.mrf.mxu0
      %1712 = vmatprep.mubr.bf16.mxu0 0
      %1713 = vmatmul.mubr.bf16.gmra.mxu0 %v1549
      %v1714 = vpop.f32.mrf.mxu0
      %v1715 = vadd.f32 %v1598, %v1714
      %v1716 = vpop.f32.mrf.mxu0
      %v1717 = vpop.f32.mrf.mxu0
      %v1718 = vadd.f32 %v1598, %v1717
      %v1719 = vpop.f32.mrf.mxu0
      %1720 = vmatprep.mubr.bf16.mxu0 0
      %1721 = vmatmul.mubr.bf16.gmra.mxu0 %v1550
      %v1722 = vpop.f32.mrf.mxu0
      %v1723 = vadd.f32 %v1598, %v1722
      %v1724 = vpop.f32.mrf.mxu0
      %v1725 = vpop.f32.mrf.mxu0
      %v1726 = vadd.f32 %v1598, %v1725
      %v1727 = vpop.f32.mrf.mxu0
      %1728 = vmatprep.mubr.bf16.mxu0 0
      %1729 = vmatmul.mubr.bf16.gmra.mxu0 %v1551
      %v1730 = vpop.f32.mrf.mxu0
      %v1731 = vadd.f32 %v1598, %v1730
      %v1732 = vpop.f32.mrf.mxu0
      %v1733 = vpop.f32.mrf.mxu0
      %v1734 = vadd.f32 %v1598, %v1733
      %v1735 = vpop.f32.mrf.mxu0
      %1736 = vmatprep.mubr.bf16.mxu0 0
      %1737 = vmatmul.mubr.bf16.gmra.mxu0 %v1552
      %v1738 = vpop.f32.mrf.mxu0
      %v1739 = vadd.f32 %v1598, %v1738
      %v1740 = vpop.f32.mrf.mxu0
      %v1741 = vpop.f32.mrf.mxu0
      %v1742 = vadd.f32 %v1598, %v1741
      %v1743 = vpop.f32.mrf.mxu0
      %1744 = vmatprep.mubr.bf16.mxu0 0
      %1745 = vmatmul.mubr.bf16.gmra.mxu0 %v1553
      %v1746 = vpop.f32.mrf.mxu0
      %v1747 = vadd.f32 %v1598, %v1746
      %v1748 = vpop.f32.mrf.mxu0
      %v1749 = vpop.f32.mrf.mxu0
      %v1750 = vadd.f32 %v1598, %v1749
      %v1751 = vpop.f32.mrf.mxu0
      %1752 = vmatprep.mubr.bf16.mxu0 0
      %1753 = vmatmul.mubr.bf16.gmra.mxu0 %v1554
      %v1754 = vpop.f32.mrf.mxu0
      %v1755 = vadd.f32 %v1598, %v1754
      %v1756 = vpop.f32.mrf.mxu0
      %v1757 = vpop.f32.mrf.mxu0
      %v1758 = vadd.f32 %v1598, %v1757
      %v1759 = vpop.f32.mrf.mxu0
      %1760 = vmatprep.mubr.bf16.mxu0 0
      %1761 = vmatmul.mubr.bf16.gmra.mxu0 %v1555
      %v1762 = vpop.f32.mrf.mxu0
      %v1763 = vadd.f32 %v1598, %v1762
      %v1764 = vpop.f32.mrf.mxu0
      %v1765 = vpop.f32.mrf.mxu0
      %v1766 = vadd.f32 %v1598, %v1765
      %v1767 = vpop.f32.mrf.mxu0
      %1768 = vmatprep.mubr.bf16.mxu0 0
      %1769 = vmatmul.mubr.bf16.gmra.mxu0 %v1556
      %v1770 = vpop.f32.mrf.mxu0
      %v1771 = vadd.f32 %v1598, %v1770
      %v1772 = vpop.f32.mrf.mxu0
      %v1773 = vpop.f32.mrf.mxu0
      %v1774 = vadd.f32 %v1598, %v1773
      %v1775 = vpop.f32.mrf.mxu0
      %1776 = vmatprep.mubr.bf16.mxu0 0
      %1777 = vmatmul.mubr.bf16.gmra.mxu0 %v1557
      %v1778 = vpop.f32.mrf.mxu0
      %v1779 = vadd.f32 %v1598, %v1778
      %v1780 = vpop.f32.mrf.mxu0
      %v1781 = vpop.f32.mrf.mxu0
      %v1782 = vadd.f32 %v1598, %v1781
      %v1783 = vpop.f32.mrf.mxu0
      %1784 = vmatprep.mubr.bf16.mxu0 0
      %1785 = vmatmul.mubr.bf16.gmra.mxu0 %v1558
      %v1786 = vpop.f32.mrf.mxu0
      %v1787 = vadd.f32 %v1598, %v1786
      %v1788 = vpop.f32.mrf.mxu0
      %v1789 = vpop.f32.mrf.mxu0
      %v1790 = vadd.f32 %v1598, %v1789
      %v1791 = vpop.f32.mrf.mxu0
      %1792 = vmatprep.mubr.bf16.mxu0 0
      %1793 = vmatmul.mubr.bf16.gmra.mxu0 %v1559
      %v1794 = vpop.f32.mrf.mxu0
      %v1795 = vadd.f32 %v1598, %v1794
      %v1796 = vpop.f32.mrf.mxu0
      %v1797 = vpop.f32.mrf.mxu0
      %v1798 = vadd.f32 %v1598, %v1797
      %v1799 = vpop.f32.mrf.mxu0
      %1800 = vmatprep.mubr.bf16.mxu0 0
      %1801 = vmatmul.mubr.bf16.gmra.mxu0 %v1560
      %v1802 = vpop.f32.mrf.mxu0
      %v1803 = vadd.f32 %v1598, %v1802
      %v1804 = vpop.f32.mrf.mxu0
      %v1805 = vpop.f32.mrf.mxu0
      %v1806 = vadd.f32 %v1598, %v1805
      %v1807 = vpop.f32.mrf.mxu0
      %1808 = vmatprep.mubr.bf16.mxu0 0
      %1809 = vmatmul.mubr.bf16.gmra.mxu0 %v1561
      %v1810 = vpop.f32.mrf.mxu0
      %v1811 = vadd.f32 %v1598, %v1810
      %v1812 = vpop.f32.mrf.mxu0
      %v1813 = vpop.f32.mrf.mxu0
      %v1814 = vadd.f32 %v1598, %v1813
      %v1815 = vpop.f32.mrf.mxu0
      %1816 = vmatprep.mubr.bf16.mxu0 0
      %1817 = vmatmul.mubr.bf16.gmra.mxu0 %v1562
      %v1818 = vpop.f32.mrf.mxu0
      %v1819 = vadd.f32 %v1598, %v1818
      %v1820 = vpop.f32.mrf.mxu0
      %v1821 = vpop.f32.mrf.mxu0
      %v1822 = vadd.f32 %v1598, %v1821
      %v1823 = vpop.f32.mrf.mxu0
      %1824 = vmatprep.mubr.bf16.mxu0 0
      %1825 = vmatmul.mubr.bf16.gmra.mxu0 %v1563
      %v1826 = vpop.f32.mrf.mxu0
      %v1827 = vadd.f32 %v1598, %v1826
      %v1828 = vpop.f32.mrf.mxu0
      %v1829 = vpop.f32.mrf.mxu0
      %v1830 = vadd.f32 %v1598, %v1829
      %v1831 = vpop.f32.mrf.mxu0
      %1832 = vmatprep.mubr.bf16.mxu0 0
      %1833 = vmatmul.mubr.bf16.gmra.mxu0 %v1564
      %v1834 = vpop.f32.mrf.mxu0
      %v1835 = vadd.f32 %v1598, %v1834
      %v1836 = vpop.f32.mrf.mxu0
      %v1837 = vpop.f32.mrf.mxu0
      %v1838 = vadd.f32 %v1598, %v1837
      %v1839 = vpop.f32.mrf.mxu0
      %1840 = vmatprep.mubr.bf16.mxu0 0
      %1841 = vmatmul.mubr.bf16.gmra.mxu0 %v1565
      %v1842 = vpop.f32.mrf.mxu0
      %v1843 = vadd.f32 %v1598, %v1842
      %v1844 = vpop.f32.mrf.mxu0
      %v1845 = vpop.f32.mrf.mxu0
      %v1846 = vadd.f32 %v1598, %v1845
      %v1847 = vpop.f32.mrf.mxu0
      %1848 = vmatprep.mubr.bf16.mxu0 0
      %1849 = vmatmul.mubr.bf16.gmra.mxu0 %v1566
      %v1850 = vpop.f32.mrf.mxu0
      %v1851 = vadd.f32 %v1598, %v1850
      %v1852 = vpop.f32.mrf.mxu0
      %v1853 = vpop.f32.mrf.mxu0
      %v1854 = vadd.f32 %v1598, %v1853
      %v1855 = vpop.f32.mrf.mxu0
      %1856 = vmatprep.mubr.bf16.mxu0 0
      %1857 = vmatmul.mubr.bf16.gmra.mxu0 %v1567
      %v1858 = vpop.f32.mrf.mxu0
      %v1859 = vadd.f32 %v1598, %v1858
      %v1860 = vpop.f32.mrf.mxu0
      %v1861 = vpop.f32.mrf.mxu0
      %v1862 = vadd.f32 %v1598, %v1861
      %v1863 = vpop.f32.mrf.mxu0
      %1864 = vmatprep.mubr.bf16.mxu0 0
      %1865 = vmatmul.mubr.bf16.gmra.mxu0 %v1568
      %v1866 = vpop.f32.mrf.mxu0
      %v1867 = vadd.f32 %v1598, %v1866
      %v1868 = vpop.f32.mrf.mxu0
      %v1869 = vpop.f32.mrf.mxu0
      %v1870 = vadd.f32 %v1598, %v1869
      %v1871 = vpop.f32.mrf.mxu0
      %1872 = vmatprep.mubr.bf16.mxu0 0
      %1873 = vmatmul.mubr.bf16.gmra.mxu0 %v1569
      %v1874 = vpop.f32.mrf.mxu0
      %v1875 = vadd.f32 %v1598, %v1874
      %v1876 = vpop.f32.mrf.mxu0
      %v1877 = vpop.f32.mrf.mxu0
      %v1878 = vadd.f32 %v1598, %v1877
      %v1879 = vpop.f32.mrf.mxu0
      %1880 = vmatprep.mubr.bf16.mxu0 0
      %1881 = vmatmul.mubr.bf16.gmra.mxu0 %v1570
      %v1882 = vpop.f32.mrf.mxu0
      %v1883 = vadd.f32 %v1598, %v1882
      %v1884 = vpop.f32.mrf.mxu0
      %v1885 = vpop.f32.mrf.mxu0
      %v1886 = vadd.f32 %v1598, %v1885
      %v1887 = vpop.f32.mrf.mxu0
      %1888 = vmatprep.mubr.bf16.mxu0 0
      %1889 = vmatmul.mubr.bf16.gmra.mxu0 %v1571
      %v1890 = vpop.f32.mrf.mxu0
      %v1891 = vadd.f32 %v1598, %v1890
      %v1892 = vpop.f32.mrf.mxu0
      %v1893 = vpop.f32.mrf.mxu0
      %v1894 = vadd.f32 %v1598, %v1893
      %v1895 = vpop.f32.mrf.mxu0
      %1896 = vmatprep.mubr.bf16.mxu0 0
      %1897 = vmatmul.mubr.bf16.gmra.mxu0 %v1572
      %v1898 = vpop.f32.mrf.mxu0
      %v1899 = vadd.f32 %v1598, %v1898
      %v1900 = vpop.f32.mrf.mxu0
      %v1901 = vpop.f32.mrf.mxu0
      %v1902 = vadd.f32 %v1598, %v1901
      %v1903 = vpop.f32.mrf.mxu0
      %1904 = vmatprep.mubr.bf16.mxu0 0
      %1905 = vmatmul.mubr.bf16.gmra.mxu0 %v1573
      %v1906 = vpop.f32.mrf.mxu0
      %v1907 = vadd.f32 %v1598, %v1906
      %v1908 = vpop.f32.mrf.mxu0
      %v1909 = vpop.f32.mrf.mxu0
      %v1910 = vadd.f32 %v1598, %v1909
      %v1911 = vpop.f32.mrf.mxu0
      %1912 = vmatprep.mubr.bf16.mxu0 0
      %1913 = vmatmul.mubr.bf16.gmra.mxu0 %v1574
      %v1914 = vpop.f32.mrf.mxu0
      %v1915 = vadd.f32 %v1598, %v1914
      %v1916 = vpop.f32.mrf.mxu0
      %v1917 = vpop.f32.mrf.mxu0
      %v1918 = vadd.f32 %v1598, %v1917
      %v1919 = vpop.f32.mrf.mxu0
      %1920 = vmatprep.mubr.bf16.mxu0 0
      %1921 = vmatmul.mubr.bf16.gmra.mxu0 %v1575
      %v1922 = vpop.f32.mrf.mxu0
      %v1923 = vadd.f32 %v1598, %v1922
      %v1924 = vpop.f32.mrf.mxu0
      %v1925 = vpop.f32.mrf.mxu0
      %v1926 = vadd.f32 %v1598, %v1925
      %v1927 = vpop.f32.mrf.mxu0
      %1928 = vmatprep.mubr.bf16.mxu0 0
      %1929 = vmatmul.mubr.bf16.gmra.mxu0 %v1576
      %v1930 = vpop.f32.mrf.mxu0
      %v1931 = vadd.f32 %v1598, %v1930
      %v1932 = vpop.f32.mrf.mxu0
      %v1933 = vpop.f32.mrf.mxu0
      %v1934 = vadd.f32 %v1598, %v1933
      %v1935 = vpop.f32.mrf.mxu0
      %1936 = vdwg.mxu0
      %v1937 = vxor.u32 %v1683, 2147483648
      %v1938 = vxor.u32 %v1686, 2147483648
      %v1939 = vxor.u32 %v1691, 2147483648
      %v1940 = vxor.u32 %v1694, 2147483648
      %v1941 = vxor.u32 %v1699, 2147483648
      %v1942 = vxor.u32 %v1702, 2147483648
      %v1943 = vxor.u32 %v1707, 2147483648
      %v1944 = vxor.u32 %v1710, 2147483648
      %v1945 = vxor.u32 %v1715, 2147483648
      %v1946 = vxor.u32 %v1718, 2147483648
      %v1947 = vxor.u32 %v1723, 2147483648
      %v1948 = vxor.u32 %v1726, 2147483648
      %v1949 = vxor.u32 %v1731, 2147483648
      %v1950 = vxor.u32 %v1734, 2147483648
      %v1951 = vxor.u32 %v1739, 2147483648
      %v1952 = vxor.u32 %v1742, 2147483648
      %v1953 = vxor.u32 %v1747, 2147483648
      %v1954 = vxor.u32 %v1750, 2147483648
      %v1955 = vxor.u32 %v1755, 2147483648
      %v1956 = vxor.u32 %v1758, 2147483648
      %v1957 = vxor.u32 %v1763, 2147483648
      %v1958 = vxor.u32 %v1766, 2147483648
      %v1959 = vxor.u32 %v1771, 2147483648
      %v1960 = vxor.u32 %v1774, 2147483648
      %v1961 = vxor.u32 %v1779, 2147483648
      %v1962 = vxor.u32 %v1782, 2147483648
      %v1963 = vxor.u32 %v1787, 2147483648
      %v1964 = vxor.u32 %v1790, 2147483648
      %v1965 = vxor.u32 %v1795, 2147483648
      %v1966 = vxor.u32 %v1798, 2147483648
      %v1967 = vxor.u32 %v1803, 2147483648
      %v1968 = vxor.u32 %v1806, 2147483648
      %v1969 = vxor.u32 %v1811, 2147483648
      %v1970 = vxor.u32 %v1814, 2147483648
      %v1971 = vxor.u32 %v1819, 2147483648
      %v1972 = vxor.u32 %v1822, 2147483648
      %v1973 = vxor.u32 %v1827, 2147483648
      %v1974 = vxor.u32 %v1830, 2147483648
      %v1975 = vxor.u32 %v1835, 2147483648
      %v1976 = vxor.u32 %v1838, 2147483648
      %v1977 = vxor.u32 %v1843, 2147483648
      %v1978 = vxor.u32 %v1846, 2147483648
      %v1979 = vxor.u32 %v1851, 2147483648
      %v1980 = vxor.u32 %v1854, 2147483648
      %v1981 = vxor.u32 %v1859, 2147483648
      %v1982 = vxor.u32 %v1862, 2147483648
      %v1983 = vxor.u32 %v1867, 2147483648
      %v1984 = vxor.u32 %v1870, 2147483648
      %v1985 = vxor.u32 %v1875, 2147483648
      %v1986 = vxor.u32 %v1878, 2147483648
      %v1987 = vxor.u32 %v1883, 2147483648
      %v1988 = vxor.u32 %v1886, 2147483648
      %v1989 = vxor.u32 %v1891, 2147483648
      %v1990 = vxor.u32 %v1894, 2147483648
      %v1991 = vxor.u32 %v1899, 2147483648
      %v1992 = vxor.u32 %v1902, 2147483648
      %v1993 = vxor.u32 %v1907, 2147483648
      %v1994 = vxor.u32 %v1910, 2147483648
      %v1995 = vxor.u32 %v1915, 2147483648
      %v1996 = vxor.u32 %v1918, 2147483648
      %v1997 = vxor.u32 %v1923, 2147483648
      %v1998 = vxor.u32 %v1926, 2147483648
      %v1999 = vxor.u32 %v1931, 2147483648
      %v2000 = vxor.u32 %v1934, 2147483648
      %v2001 = vmul.f32 %v1937, 1.442695
      %v2002 = vpow.pop %v2001
      %v2003 = vmul.f32 %v1938, 1.442695
      %v2004 = vpow.pop %v2003
      %v2005 = vmul.f32 %v1939, 1.442695
      %v2006 = vpow.pop %v2005
      %v2007 = vmul.f32 %v1940, 1.442695
      %v2008 = vpow.pop %v2007
      %v2009 = vmul.f32 %v1941, 1.442695
      %v2010 = vpow.pop %v2009
      %v2011 = vmul.f32 %v1942, 1.442695
      %v2012 = vpow.pop %v2011
      %v2013 = vmul.f32 %v1943, 1.442695
      %v2014 = vpow.pop %v2013
      %v2015 = vmul.f32 %v1944, 1.442695
      %v2016 = vpow.pop %v2015
      %v2017 = vmul.f32 %v1945, 1.442695
      %v2018 = vpow.pop %v2017
      %v2019 = vmul.f32 %v1946, 1.442695
      %v2020 = vpow.pop %v2019
      %v2021 = vmul.f32 %v1947, 1.442695
      %v2022 = vpow.pop %v2021
      %v2023 = vmul.f32 %v1948, 1.442695
      %v2024 = vpow.pop %v2023
      %v2025 = vmul.f32 %v1949, 1.442695
      %v2026 = vpow.pop %v2025
      %v2027 = vmul.f32 %v1950, 1.442695
      %v2028 = vpow.pop %v2027
      %v2029 = vmul.f32 %v1951, 1.442695
      %v2030 = vpow.pop %v2029
      %v2031 = vmul.f32 %v1952, 1.442695
      %v2032 = vpow.pop %v2031
      %v2033 = vmul.f32 %v1953, 1.442695
      %v2034 = vpow.pop %v2033
      %v2035 = vmul.f32 %v1954, 1.442695
      %v2036 = vpow.pop %v2035
      %v2037 = vmul.f32 %v1955, 1.442695
      %v2038 = vpow.pop %v2037
      %v2039 = vmul.f32 %v1956, 1.442695
      %v2040 = vpow.pop %v2039
      %v2041 = vmul.f32 %v1957, 1.442695
      %v2042 = vpow.pop %v2041
      %v2043 = vmul.f32 %v1958, 1.442695
      %v2044 = vpow.pop %v2043
      %v2045 = vmul.f32 %v1959, 1.442695
      %v2046 = vpow.pop %v2045
      %v2047 = vmul.f32 %v1960, 1.442695
      %v2048 = vpow.pop %v2047
      %v2049 = vmul.f32 %v1961, 1.442695
      %v2050 = vpow.pop %v2049
      %v2051 = vmul.f32 %v1962, 1.442695
      %v2052 = vpow.pop %v2051
      %v2053 = vmul.f32 %v1963, 1.442695
      %v2054 = vpow.pop %v2053
      %v2055 = vmul.f32 %v1964, 1.442695
      %v2056 = vpow.pop %v2055
      %v2057 = vmul.f32 %v1965, 1.442695
      %v2058 = vpow.pop %v2057
      %v2059 = vmul.f32 %v1966, 1.442695
      %v2060 = vpow.pop %v2059
      %v2061 = vmul.f32 %v1967, 1.442695
      %v2062 = vpow.pop %v2061
      %v2063 = vmul.f32 %v1968, 1.442695
      %v2064 = vpow.pop %v2063
      %v2065 = vmul.f32 %v1969, 1.442695
      %v2066 = vpow.pop %v2065
      %v2067 = vmul.f32 %v1970, 1.442695
      %v2068 = vpow.pop %v2067
      %v2069 = vmul.f32 %v1971, 1.442695
      %v2070 = vpow.pop %v2069
      %v2071 = vmul.f32 %v1972, 1.442695
      %v2072 = vpow.pop %v2071
      %v2073 = vmul.f32 %v1973, 1.442695
      %v2074 = vpow.pop %v2073
      %v2075 = vmul.f32 %v1974, 1.442695
      %v2076 = vpow.pop %v2075
      %v2077 = vmul.f32 %v1975, 1.442695
      %v2078 = vpow.pop %v2077
      %v2079 = vmul.f32 %v1976, 1.442695
      %v2080 = vpow.pop %v2079
      %v2081 = vmul.f32 %v1977, 1.442695
      %v2082 = vpow.pop %v2081
      %v2083 = vmul.f32 %v1978, 1.442695
      %v2084 = vpow.pop %v2083
      %v2085 = vmul.f32 %v1979, 1.442695
      %v2086 = vpow.pop %v2085
      %v2087 = vmul.f32 %v1980, 1.442695
      %v2088 = vpow.pop %v2087
      %v2089 = vmul.f32 %v1981, 1.442695
      %v2090 = vpow.pop %v2089
      %v2091 = vmul.f32 %v1982, 1.442695
      %v2092 = vpow.pop %v2091
      %v2093 = vmul.f32 %v1983, 1.442695
      %v2094 = vpow.pop %v2093
      %v2095 = vmul.f32 %v1984, 1.442695
      %v2096 = vpow.pop %v2095
      %v2097 = vmul.f32 %v1985, 1.442695
      %v2098 = vpow.pop %v2097
      %v2099 = vmul.f32 %v1986, 1.442695
      %v2100 = vpow.pop %v2099
      %v2101 = vmul.f32 %v1987, 1.442695
      %v2102 = vpow.pop %v2101
      %v2103 = vmul.f32 %v1988, 1.442695
      %v2104 = vpow.pop %v2103
      %v2105 = vmul.f32 %v1989, 1.442695
      %v2106 = vpow.pop %v2105
      %v2107 = vmul.f32 %v1990, 1.442695
      %v2108 = vpow.pop %v2107
      %v2109 = vmul.f32 %v1991, 1.442695
      %v2110 = vpow.pop %v2109
      %v2111 = vmul.f32 %v1992, 1.442695
      %v2112 = vpow.pop %v2111
      %v2113 = vmul.f32 %v1993, 1.442695
      %v2114 = vpow.pop %v2113
      %v2115 = vmul.f32 %v1994, 1.442695
      %v2116 = vpow.pop %v2115
      %v2117 = vmul.f32 %v1995, 1.442695
      %v2118 = vpow.pop %v2117
      %v2119 = vmul.f32 %v1996, 1.442695
      %v2120 = vpow.pop %v2119
      %v2121 = vmul.f32 %v1997, 1.442695
      %v2122 = vpow.pop %v2121
      %v2123 = vmul.f32 %v1998, 1.442695
      %v2124 = vpow.pop %v2123
      %v2125 = vmul.f32 %v1999, 1.442695
      %v2126 = vpow.pop %v2125
      %v2127 = vmul.f32 %v2000, 1.442695
      %v2128 = vpow.pop %v2127
      %v2129 = vadd.f32 %v2002, 1.0
      %v2130 = vadd.f32 %v2004, 1.0
      %v2131 = vadd.f32 %v2006, 1.0
      %v2132 = vadd.f32 %v2008, 1.0
      %v2133 = vadd.f32 %v2010, 1.0
      %v2134 = vadd.f32 %v2012, 1.0
      %v2135 = vadd.f32 %v2014, 1.0
      %v2136 = vadd.f32 %v2016, 1.0
      %v2137 = vadd.f32 %v2018, 1.0
      %v2138 = vadd.f32 %v2020, 1.0
      %v2139 = vadd.f32 %v2022, 1.0
      %v2140 = vadd.f32 %v2024, 1.0
      %v2141 = vadd.f32 %v2026, 1.0
      %v2142 = vadd.f32 %v2028, 1.0
      %v2143 = vadd.f32 %v2030, 1.0
      %v2144 = vadd.f32 %v2032, 1.0
      %v2145 = vadd.f32 %v2034, 1.0
      %v2146 = vadd.f32 %v2036, 1.0
      %v2147 = vadd.f32 %v2038, 1.0
      %v2148 = vadd.f32 %v2040, 1.0
      %v2149 = vadd.f32 %v2042, 1.0
      %v2150 = vadd.f32 %v2044, 1.0
      %v2151 = vadd.f32 %v2046, 1.0
      %v2152 = vadd.f32 %v2048, 1.0
      %v2153 = vadd.f32 %v2050, 1.0
      %v2154 = vadd.f32 %v2052, 1.0
      %v2155 = vadd.f32 %v2054, 1.0
      %v2156 = vadd.f32 %v2056, 1.0
      %v2157 = vadd.f32 %v2058, 1.0
      %v2158 = vadd.f32 %v2060, 1.0
      %v2159 = vadd.f32 %v2062, 1.0
      %v2160 = vadd.f32 %v2064, 1.0
      %v2161 = vadd.f32 %v2066, 1.0
      %v2162 = vadd.f32 %v2068, 1.0
      %v2163 = vadd.f32 %v2070, 1.0
      %v2164 = vadd.f32 %v2072, 1.0
      %v2165 = vadd.f32 %v2074, 1.0
      %v2166 = vadd.f32 %v2076, 1.0
      %v2167 = vadd.f32 %v2078, 1.0
      %v2168 = vadd.f32 %v2080, 1.0
      %v2169 = vadd.f32 %v2082, 1.0
      %v2170 = vadd.f32 %v2084, 1.0
      %v2171 = vadd.f32 %v2086, 1.0
      %v2172 = vadd.f32 %v2088, 1.0
      %v2173 = vadd.f32 %v2090, 1.0
      %v2174 = vadd.f32 %v2092, 1.0
      %v2175 = vadd.f32 %v2094, 1.0
      %v2176 = vadd.f32 %v2096, 1.0
      %v2177 = vadd.f32 %v2098, 1.0
      %v2178 = vadd.f32 %v2100, 1.0
      %v2179 = vadd.f32 %v2102, 1.0
      %v2180 = vadd.f32 %v2104, 1.0
      %v2181 = vadd.f32 %v2106, 1.0
      %v2182 = vadd.f32 %v2108, 1.0
      %v2183 = vadd.f32 %v2110, 1.0
      %v2184 = vadd.f32 %v2112, 1.0
      %v2185 = vadd.f32 %v2114, 1.0
      %v2186 = vadd.f32 %v2116, 1.0
      %v2187 = vadd.f32 %v2118, 1.0
      %v2188 = vadd.f32 %v2120, 1.0
      %v2189 = vadd.f32 %v2122, 1.0
      %v2190 = vadd.f32 %v2124, 1.0
      %v2191 = vadd.f32 %v2126, 1.0
      %v2192 = vadd.f32 %v2128, 1.0
      %v2193 = vrcp.pop %v2129
      %v2194 = vmul.f32 1.0, %v2193
      %v2195 = vrcp.pop %v2130
      %v2196 = vmul.f32 1.0, %v2195
      %v2197 = vrcp.pop %v2131
      %v2198 = vmul.f32 1.0, %v2197
      %v2199 = vrcp.pop %v2132
      %v2200 = vmul.f32 1.0, %v2199
      %v2201 = vrcp.pop %v2133
      %v2202 = vmul.f32 1.0, %v2201
      %v2203 = vrcp.pop %v2134
      %v2204 = vmul.f32 1.0, %v2203
      %v2205 = vrcp.pop %v2135
      %v2206 = vmul.f32 1.0, %v2205
      %v2207 = vrcp.pop %v2136
      %v2208 = vmul.f32 1.0, %v2207
      %v2209 = vrcp.pop %v2137
      %v2210 = vmul.f32 1.0, %v2209
      %v2211 = vrcp.pop %v2138
      %v2212 = vmul.f32 1.0, %v2211
      %v2213 = vrcp.pop %v2139
      %v2214 = vmul.f32 1.0, %v2213
      %v2215 = vrcp.pop %v2140
      %v2216 = vmul.f32 1.0, %v2215
      %v2217 = vrcp.pop %v2141
      %v2218 = vmul.f32 1.0, %v2217
      %v2219 = vrcp.pop %v2142
      %v2220 = vmul.f32 1.0, %v2219
      %v2221 = vrcp.pop %v2143
      %v2222 = vmul.f32 1.0, %v2221
      %v2223 = vrcp.pop %v2144
      %v2224 = vmul.f32 1.0, %v2223
      %v2225 = vrcp.pop %v2145
      %v2226 = vmul.f32 1.0, %v2225
      %v2227 = vrcp.pop %v2146
      %v2228 = vmul.f32 1.0, %v2227
      %v2229 = vrcp.pop %v2147
      %v2230 = vmul.f32 1.0, %v2229
      %v2231 = vrcp.pop %v2148
      %v2232 = vmul.f32 1.0, %v2231
      %v2233 = vrcp.pop %v2149
      %v2234 = vmul.f32 1.0, %v2233
      %v2235 = vrcp.pop %v2150
      %v2236 = vmul.f32 1.0, %v2235
      %v2237 = vrcp.pop %v2151
      %v2238 = vmul.f32 1.0, %v2237
      %v2239 = vrcp.pop %v2152
      %v2240 = vmul.f32 1.0, %v2239
      %v2241 = vrcp.pop %v2153
      %v2242 = vmul.f32 1.0, %v2241
      %v2243 = vrcp.pop %v2154
      %v2244 = vmul.f32 1.0, %v2243
      %v2245 = vrcp.pop %v2155
      %v2246 = vmul.f32 1.0, %v2245
      %v2247 = vrcp.pop %v2156
      %v2248 = vmul.f32 1.0, %v2247
      %v2249 = vrcp.pop %v2157
      %v2250 = vmul.f32 1.0, %v2249
      %v2251 = vrcp.pop %v2158
      %v2252 = vmul.f32 1.0, %v2251
      %v2253 = vrcp.pop %v2159
      %v2254 = vmul.f32 1.0, %v2253
      %v2255 = vrcp.pop %v2160
      %v2256 = vmul.f32 1.0, %v2255
      %v2257 = vrcp.pop %v2161
      %v2258 = vmul.f32 1.0, %v2257
      %v2259 = vrcp.pop %v2162
      %v2260 = vmul.f32 1.0, %v2259
      %v2261 = vrcp.pop %v2163
      %v2262 = vmul.f32 1.0, %v2261
      %v2263 = vrcp.pop %v2164
      %v2264 = vmul.f32 1.0, %v2263
      %v2265 = vrcp.pop %v2165
      %v2266 = vmul.f32 1.0, %v2265
      %v2267 = vrcp.pop %v2166
      %v2268 = vmul.f32 1.0, %v2267
      %v2269 = vrcp.pop %v2167
      %v2270 = vmul.f32 1.0, %v2269
      %v2271 = vrcp.pop %v2168
      %v2272 = vmul.f32 1.0, %v2271
      %v2273 = vrcp.pop %v2169
      %v2274 = vmul.f32 1.0, %v2273
      %v2275 = vrcp.pop %v2170
      %v2276 = vmul.f32 1.0, %v2275
      %v2277 = vrcp.pop %v2171
      %v2278 = vmul.f32 1.0, %v2277
      %v2279 = vrcp.pop %v2172
      %v2280 = vmul.f32 1.0, %v2279
      %v2281 = vrcp.pop %v2173
      %v2282 = vmul.f32 1.0, %v2281
      %v2283 = vrcp.pop %v2174
      %v2284 = vmul.f32 1.0, %v2283
      %v2285 = vrcp.pop %v2175
      %v2286 = vmul.f32 1.0, %v2285
      %v2287 = vrcp.pop %v2176
      %v2288 = vmul.f32 1.0, %v2287
      %v2289 = vrcp.pop %v2177
      %v2290 = vmul.f32 1.0, %v2289
      %v2291 = vrcp.pop %v2178
      %v2292 = vmul.f32 1.0, %v2291
      %v2293 = vrcp.pop %v2179
      %v2294 = vmul.f32 1.0, %v2293
      %v2295 = vrcp.pop %v2180
      %v2296 = vmul.f32 1.0, %v2295
      %v2297 = vrcp.pop %v2181
      %v2298 = vmul.f32 1.0, %v2297
      %v2299 = vrcp.pop %v2182
      %v2300 = vmul.f32 1.0, %v2299
      %v2301 = vrcp.pop %v2183
      %v2302 = vmul.f32 1.0, %v2301
      %v2303 = vrcp.pop %v2184
      %v2304 = vmul.f32 1.0, %v2303
      %v2305 = vrcp.pop %v2185
      %v2306 = vmul.f32 1.0, %v2305
      %v2307 = vrcp.pop %v2186
      %v2308 = vmul.f32 1.0, %v2307
      %v2309 = vrcp.pop %v2187
      %v2310 = vmul.f32 1.0, %v2309
      %v2311 = vrcp.pop %v2188
      %v2312 = vmul.f32 1.0, %v2311
      %v2313 = vrcp.pop %v2189
      %v2314 = vmul.f32 1.0, %v2313
      %v2315 = vrcp.pop %v2190
      %v2316 = vmul.f32 1.0, %v2315
      %v2317 = vrcp.pop %v2191
      %v2318 = vmul.f32 1.0, %v2317
      %v2319 = vrcp.pop %v2192
      %v2320 = vmul.f32 1.0, %v2319
      %v2321 = vmul.f32 %v1683, %v2194
      %v2322 = vmul.f32 %v1686, %v2196
      %v2323 = vmul.f32 %v1691, %v2198
      %v2324 = vmul.f32 %v1694, %v2200
      %v2325 = vmul.f32 %v1699, %v2202
      %v2326 = vmul.f32 %v1702, %v2204
      %v2327 = vmul.f32 %v1707, %v2206
      %v2328 = vmul.f32 %v1710, %v2208
      %v2329 = vmul.f32 %v1715, %v2210
      %v2330 = vmul.f32 %v1718, %v2212
      %v2331 = vmul.f32 %v1723, %v2214
      %v2332 = vmul.f32 %v1726, %v2216
      %v2333 = vmul.f32 %v1731, %v2218
      %v2334 = vmul.f32 %v1734, %v2220
      %v2335 = vmul.f32 %v1739, %v2222
      %v2336 = vmul.f32 %v1742, %v2224
      %v2337 = vmul.f32 %v1747, %v2226
      %v2338 = vmul.f32 %v1750, %v2228
      %v2339 = vmul.f32 %v1755, %v2230
      %v2340 = vmul.f32 %v1758, %v2232
      %v2341 = vmul.f32 %v1763, %v2234
      %v2342 = vmul.f32 %v1766, %v2236
      %v2343 = vmul.f32 %v1771, %v2238
      %v2344 = vmul.f32 %v1774, %v2240
      %v2345 = vmul.f32 %v1779, %v2242
      %v2346 = vmul.f32 %v1782, %v2244
      %v2347 = vmul.f32 %v1787, %v2246
      %v2348 = vmul.f32 %v1790, %v2248
      %v2349 = vmul.f32 %v1795, %v2250
      %v2350 = vmul.f32 %v1798, %v2252
      %v2351 = vmul.f32 %v1803, %v2254
      %v2352 = vmul.f32 %v1806, %v2256
      %v2353 = vmul.f32 %v1811, %v2258
      %v2354 = vmul.f32 %v1814, %v2260
      %v2355 = vmul.f32 %v1819, %v2262
      %v2356 = vmul.f32 %v1822, %v2264
      %v2357 = vmul.f32 %v1827, %v2266
      %v2358 = vmul.f32 %v1830, %v2268
      %v2359 = vmul.f32 %v1835, %v2270
      %v2360 = vmul.f32 %v1838, %v2272
      %v2361 = vmul.f32 %v1843, %v2274
      %v2362 = vmul.f32 %v1846, %v2276
      %v2363 = vmul.f32 %v1851, %v2278
      %v2364 = vmul.f32 %v1854, %v2280
      %v2365 = vmul.f32 %v1859, %v2282
      %v2366 = vmul.f32 %v1862, %v2284
      %v2367 = vmul.f32 %v1867, %v2286
      %v2368 = vmul.f32 %v1870, %v2288
      %v2369 = vmul.f32 %v1875, %v2290
      %v2370 = vmul.f32 %v1878, %v2292
      %v2371 = vmul.f32 %v1883, %v2294
      %v2372 = vmul.f32 %v1886, %v2296
      %v2373 = vmul.f32 %v1891, %v2298
      %v2374 = vmul.f32 %v1894, %v2300
      %v2375 = vmul.f32 %v1899, %v2302
      %v2376 = vmul.f32 %v1902, %v2304
      %v2377 = vmul.f32 %v1907, %v2306
      %v2378 = vmul.f32 %v1910, %v2308
      %v2379 = vmul.f32 %v1915, %v2310
      %v2380 = vmul.f32 %v1918, %v2312
      %v2381 = vmul.f32 %v1923, %v2314
      %v2382 = vmul.f32 %v1926, %v2316
      %v2383 = vmul.f32 %v1931, %v2318
      %v2384 = vmul.f32 %v1934, %v2320
      %v2385 = vld [vmem:[#allocation2] sm:$0xff]
      %v2386 = vld [vmem:[#allocation2 + $0x8] sm:$0xff]
      %v2387 = vld [vmem:[#allocation2 + $0x10] sm:$0xff]
      %v2388 = vld [vmem:[#allocation2 + $0x18] sm:$0xff]
      %v2389 = vld [vmem:[#allocation2 + $0x20] sm:$0xff]
      %v2390 = vld [vmem:[#allocation2 + $0x28] sm:$0xff]
      %v2391 = vld [vmem:[#allocation2 + $0x30] sm:$0xff]
      %v2392 = vld [vmem:[#allocation2 + $0x38] sm:$0xff]
      %v2393 = vld [vmem:[#allocation2 + $0x40] sm:$0xff]
      %v2394 = vld [vmem:[#allocation2 + $0x48] sm:$0xff]
      %v2395 = vld [vmem:[#allocation2 + $0x50] sm:$0xff]
      %v2396 = vld [vmem:[#allocation2 + $0x58] sm:$0xff]
      %v2397 = vld [vmem:[#allocation2 + $0x60] sm:$0xff]
      %v2398 = vld [vmem:[#allocation2 + $0x68] sm:$0xff]
      %v2399 = vld [vmem:[#allocation2 + $0x70] sm:$0xff]
      %v2400 = vld [vmem:[#allocation2 + $0x78] sm:$0xff]
      %v2401 = vld [vmem:[#allocation2 + $0x80] sm:$0xff]
      %v2402 = vld [vmem:[#allocation2 + $0x88] sm:$0xff]
      %v2403 = vld [vmem:[#allocation2 + $0x90] sm:$0xff]
      %v2404 = vld [vmem:[#allocation2 + $0x98] sm:$0xff]
      %v2405 = vld [vmem:[#allocation2 + $0xa0] sm:$0xff]
      %v2406 = vld [vmem:[#allocation2 + $0xa8] sm:$0xff]
      %v2407 = vld [vmem:[#allocation2 + $0xb0] sm:$0xff]
      %v2408 = vld [vmem:[#allocation2 + $0xb8] sm:$0xff]
      %v2409 = vld [vmem:[#allocation2 + $0xc0] sm:$0xff]
      %v2410 = vld [vmem:[#allocation2 + $0xc8] sm:$0xff]
      %v2411 = vld [vmem:[#allocation2 + $0xd0] sm:$0xff]
      %v2412 = vld [vmem:[#allocation2 + $0xd8] sm:$0xff]
      %v2413 = vld [vmem:[#allocation2 + $0xe0] sm:$0xff]
      %v2414 = vld [vmem:[#allocation2 + $0xe8] sm:$0xff]
      %v2415 = vld [vmem:[#allocation2 + $0xf0] sm:$0xff]
      %v2416 = vld [vmem:[#allocation2 + $0xf8] sm:$0xff]
      %v2417 = vld [vmem:[#allocation2 + $0x100] sm:$0xff]
      %v2418 = vld [vmem:[#allocation2 + $0x108] sm:$0xff]
      %v2419 = vld [vmem:[#allocation2 + $0x110] sm:$0xff]
      %v2420 = vld [vmem:[#allocation2 + $0x118] sm:$0xff]
      %v2421 = vld [vmem:[#allocation2 + $0x120] sm:$0xff]
      %v2422 = vld [vmem:[#allocation2 + $0x128] sm:$0xff]
      %v2423 = vld [vmem:[#allocation2 + $0x130] sm:$0xff]
      %v2424 = vld [vmem:[#allocation2 + $0x138] sm:$0xff]
      %v2425 = vld [vmem:[#allocation2 + $0x140] sm:$0xff]
      %v2426 = vld [vmem:[#allocation2 + $0x148] sm:$0xff]
      %v2427 = vld [vmem:[#allocation2 + $0x150] sm:$0xff]
      %v2428 = vld [vmem:[#allocation2 + $0x158] sm:$0xff]
      %v2429 = vld [vmem:[#allocation2 + $0x160] sm:$0xff]
      %v2430 = vld [vmem:[#allocation2 + $0x168] sm:$0xff]
      %v2431 = vld [vmem:[#allocation2 + $0x170] sm:$0xff]
      %v2432 = vld [vmem:[#allocation2 + $0x178] sm:$0xff]
      %v2433 = vld [vmem:[#allocation2 + $0x180] sm:$0xff]
      %v2434 = vld [vmem:[#allocation2 + $0x188] sm:$0xff]
      %v2435 = vld [vmem:[#allocation2 + $0x190] sm:$0xff]
      %v2436 = vld [vmem:[#allocation2 + $0x198] sm:$0xff]
      %v2437 = vld [vmem:[#allocation2 + $0x1a0] sm:$0xff]
      %v2438 = vld [vmem:[#allocation2 + $0x1a8] sm:$0xff]
      %v2439 = vld [vmem:[#allocation2 + $0x1b0] sm:$0xff]
      %v2440 = vld [vmem:[#allocation2 + $0x1b8] sm:$0xff]
      %v2441 = vld [vmem:[#allocation2 + $0x1c0] sm:$0xff]
      %v2442 = vld [vmem:[#allocation2 + $0x1c8] sm:$0xff]
      %v2443 = vld [vmem:[#allocation2 + $0x1d0] sm:$0xff]
      %v2444 = vld [vmem:[#allocation2 + $0x1d8] sm:$0xff]
      %v2445 = vld [vmem:[#allocation2 + $0x1e0] sm:$0xff]
      %v2446 = vld [vmem:[#allocation2 + $0x1e8] sm:$0xff]
      %v2447 = vld [vmem:[#allocation2 + $0x1f0] sm:$0xff]
      %v2448 = vld [vmem:[#allocation2 + $0x1f8] sm:$0xff]
      %v2449 = vadd.f32 %v2321, %v2385
      %v2450 = vadd.f32 %v2322, %v2386
      %v2451 = vadd.f32 %v2323, %v2387
      %v2452 = vadd.f32 %v2324, %v2388
      %v2453 = vadd.f32 %v2325, %v2389
      %v2454 = vadd.f32 %v2326, %v2390
      %v2455 = vadd.f32 %v2327, %v2391
      %v2456 = vadd.f32 %v2328, %v2392
      %v2457 = vadd.f32 %v2329, %v2393
      %v2458 = vadd.f32 %v2330, %v2394
      %v2459 = vadd.f32 %v2331, %v2395
      %v2460 = vadd.f32 %v2332, %v2396
      %v2461 = vadd.f32 %v2333, %v2397
      %v2462 = vadd.f32 %v2334, %v2398
      %v2463 = vadd.f32 %v2335, %v2399
      %v2464 = vadd.f32 %v2336, %v2400
      %v2465 = vadd.f32 %v2337, %v2401
      %v2466 = vadd.f32 %v2338, %v2402
      %v2467 = vadd.f32 %v2339, %v2403
      %v2468 = vadd.f32 %v2340, %v2404
      %v2469 = vadd.f32 %v2341, %v2405
      %v2470 = vadd.f32 %v2342, %v2406
      %v2471 = vadd.f32 %v2343, %v2407
      %v2472 = vadd.f32 %v2344, %v2408
      %v2473 = vadd.f32 %v2345, %v2409
      %v2474 = vadd.f32 %v2346, %v2410
      %v2475 = vadd.f32 %v2347, %v2411
      %v2476 = vadd.f32 %v2348, %v2412
      %v2477 = vadd.f32 %v2349, %v2413
      %v2478 = vadd.f32 %v2350, %v2414
      %v2479 = vadd.f32 %v2351, %v2415
      %v2480 = vadd.f32 %v2352, %v2416
      %v2481 = vadd.f32 %v2353, %v2417
      %v2482 = vadd.f32 %v2354, %v2418
      %v2483 = vadd.f32 %v2355, %v2419
      %v2484 = vadd.f32 %v2356, %v2420
      %v2485 = vadd.f32 %v2357, %v2421
      %v2486 = vadd.f32 %v2358, %v2422
      %v2487 = vadd.f32 %v2359, %v2423
      %v2488 = vadd.f32 %v2360, %v2424
      %v2489 = vadd.f32 %v2361, %v2425
      %v2490 = vadd.f32 %v2362, %v2426
      %v2491 = vadd.f32 %v2363, %v2427
      %v2492 = vadd.f32 %v2364, %v2428
      %v2493 = vadd.f32 %v2365, %v2429
      %v2494 = vadd.f32 %v2366, %v2430
      %v2495 = vadd.f32 %v2367, %v2431
      %v2496 = vadd.f32 %v2368, %v2432
      %v2497 = vadd.f32 %v2369, %v2433
      %v2498 = vadd.f32 %v2370, %v2434
      %v2499 = vadd.f32 %v2371, %v2435
      %v2500 = vadd.f32 %v2372, %v2436
      %v2501 = vadd.f32 %v2373, %v2437
      %v2502 = vadd.f32 %v2374, %v2438
      %v2503 = vadd.f32 %v2375, %v2439
      %v2504 = vadd.f32 %v2376, %v2440
      %v2505 = vadd.f32 %v2377, %v2441
      %v2506 = vadd.f32 %v2378, %v2442
      %v2507 = vadd.f32 %v2379, %v2443
      %v2508 = vadd.f32 %v2380, %v2444
      %v2509 = vadd.f32 %v2381, %v2445
      %v2510 = vadd.f32 %v2382, %v2446
      %v2511 = vadd.f32 %v2383, %v2447
      %v2512 = vadd.f32 %v2384, %v2448
      %v2513 = vpack.c.bf16 %v2450, %v2449
      %v2514 = vpack.c.bf16 %v2452, %v2451
      %v2515 = vpack.c.bf16 %v2454, %v2453
      %v2516 = vpack.c.bf16 %v2456, %v2455
      %v2517 = vpack.c.bf16 %v2458, %v2457
      %v2518 = vpack.c.bf16 %v2460, %v2459
      %v2519 = vpack.c.bf16 %v2462, %v2461
      %v2520 = vpack.c.bf16 %v2464, %v2463
      %v2521 = vpack.c.bf16 %v2466, %v2465
      %v2522 = vpack.c.bf16 %v2468, %v2467
      %v2523 = vpack.c.bf16 %v2470, %v2469
      %v2524 = vpack.c.bf16 %v2472, %v2471
      %v2525 = vpack.c.bf16 %v2474, %v2473
      %v2526 = vpack.c.bf16 %v2476, %v2475
      %v2527 = vpack.c.bf16 %v2478, %v2477
      %v2528 = vpack.c.bf16 %v2480, %v2479
      %v2529 = vpack.c.bf16 %v2482, %v2481
      %v2530 = vpack.c.bf16 %v2484, %v2483
      %v2531 = vpack.c.bf16 %v2486, %v2485
      %v2532 = vpack.c.bf16 %v2488, %v2487
      %v2533 = vpack.c.bf16 %v2490, %v2489
      %v2534 = vpack.c.bf16 %v2492, %v2491
      %v2535 = vpack.c.bf16 %v2494, %v2493
      %v2536 = vpack.c.bf16 %v2496, %v2495
      %v2537 = vpack.c.bf16 %v2498, %v2497
      %v2538 = vpack.c.bf16 %v2500, %v2499
      %v2539 = vpack.c.bf16 %v2502, %v2501
      %v2540 = vpack.c.bf16 %v2504, %v2503
      %v2541 = vpack.c.bf16 %v2506, %v2505
      %v2542 = vpack.c.bf16 %v2508, %v2507
      %v2543 = vpack.c.bf16 %v2510, %v2509
      %v2544 = vpack.c.bf16 %v2512, %v2511
      %v2545 = vld [vmem:[%s5] sm:$0xf]
      %v2546 = vld [vmem:[%s5 + $0x4] sm:$0xf]
      %v2547 = vld [vmem:[%s5 + $0x8] sm:$0xf]
      %v2548 = vld [vmem:[%s5 + $0xc] sm:$0xf]
      %v2549 = vld [vmem:[%s5 + $0x10] sm:$0xf]
      %v2550 = vld [vmem:[%s5 + $0x14] sm:$0xf]
      %v2551 = vld [vmem:[%s5 + $0x18] sm:$0xf]
      %v2552 = vld [vmem:[%s5 + $0x1c] sm:$0xf]
      %v2553 = vld [vmem:[%s5 + $0x20] sm:$0xf]
      %v2554 = vld [vmem:[%s5 + $0x24] sm:$0xf]
      %v2555 = vld [vmem:[%s5 + $0x28] sm:$0xf]
      %v2556 = vld [vmem:[%s5 + $0x2c] sm:$0xf]
      %v2557 = vld [vmem:[%s5 + $0x30] sm:$0xf]
      %v2558 = vld [vmem:[%s5 + $0x34] sm:$0xf]
      %v2559 = vld [vmem:[%s5 + $0x38] sm:$0xf]
      %v2560 = vld [vmem:[%s5 + $0x3c] sm:$0xf]
      %v2561 = vld [vmem:[%s6] sm:$0x1]
      %v2563 = vlaneseq
      %v2564 = vshrl.u32 %v2563, 7
      %v2565 = vsub.s32 0, %v2564
      %v2566 = vrot.slane %v2561, %v2565
      %v2584 = vunpack.c.l.b16 %v2545
      %v2585 = vunpack.c.l.b16 %v2546
      %v2586 = vunpack.c.l.b16 %v2547
      %v2587 = vunpack.c.l.b16 %v2548
      %v2588 = vunpack.c.l.b16 %v2549
      %v2589 = vunpack.c.l.b16 %v2550
      %v2590 = vunpack.c.l.b16 %v2551
      %v2591 = vunpack.c.l.b16 %v2552
      %v2592 = vunpack.c.l.b16 %v2553
      %v2593 = vunpack.c.l.b16 %v2554
      %v2594 = vunpack.c.l.b16 %v2555
      %v2595 = vunpack.c.l.b16 %v2556
      %v2596 = vunpack.c.l.b16 %v2557
      %v2597 = vunpack.c.l.b16 %v2558
      %v2598 = vunpack.c.l.b16 %v2559
      %v2599 = vunpack.c.l.b16 %v2560
      %v2600 = vpack.c.b16 %v2585, %v2584
      %v2601 = vpack.c.b16 %v2587, %v2586
      %v2602 = vpack.c.b16 %v2589, %v2588
      %v2603 = vpack.c.b16 %v2591, %v2590
      %v2604 = vpack.c.b16 %v2593, %v2592
      %v2605 = vpack.c.b16 %v2595, %v2594
      %v2606 = vpack.c.b16 %v2597, %v2596
      %v2607 = vpack.c.b16 %v2599, %v2598
      %2616 = vmatprep.subr.bf16.mxu0 0
      %2617 = vmatpush1.bf16.msra.mxu0 %v2607
      %2618 = vmatprep.subr.bf16.mxu0 0
      %2619 = vmatpush1.bf16.msra.mxu0 %v2606
      %2620 = vmatprep.subr.bf16.mxu0 0
      %2621 = vmatpush1.bf16.msra.mxu0 %v2605
      %2622 = vmatprep.subr.bf16.mxu0 0
      %2623 = vmatpush1.bf16.msra.mxu0 %v2604
      %2624 = vmatprep.subr.bf16.mxu0 0
      %2625 = vmatpush1.bf16.msra.mxu0 %v2603
      %2626 = vmatprep.subr.bf16.mxu0 0
      %2627 = vmatpush1.bf16.msra.mxu0 %v2602
      %2628 = vmatprep.subr.bf16.mxu0 0
      %2629 = vmatpush1.bf16.msra.mxu0 %v2601
      %2630 = vmatprep.subr.bf16.mxu0 0
      %2631 = vmatpush1.bf16.msra.mxu0 %v2600
      %2632 = vmatprep.subr.bf16.mxu0 0
      %2633 = vmatpush2.bf16.msra.mxu0 0
      %2634 = vmatprep.subr.bf16.mxu0 0
      %2635 = vmatpush2.bf16.msra.mxu0 0
      %2636 = vmatprep.subr.bf16.mxu0 0
      %2637 = vmatpush2.bf16.msra.mxu0 0
      %2638 = vmatprep.subr.bf16.mxu0 0
      %2639 = vmatpush2.bf16.msra.mxu0 0
      %2640 = vmatprep.subr.bf16.mxu0 0
      %2641 = vmatpush2.bf16.msra.mxu0 0
      %2642 = vmatprep.subr.bf16.mxu0 0
      %2643 = vmatpush2.bf16.msra.mxu0 0
      %2644 = vmatprep.subr.bf16.mxu0 0
      %2645 = vmatpush2.bf16.msra.mxu0 0
      %2646 = vmatprep.subr.bf16.mxu0 0
      %2647 = vmatpush2.bf16.msra.mxu0 0
      %2648 = vmatprep.mubr.bf16.mxu0 0
      %2649 = vmatmul.mubr.bf16.gmra.mxu0 %v2513
      %v2650 = vpop.f32.mrf.mxu0
      %v2651 = vadd.f32 %v2566, %v2650
      %v2652 = vpop.f32.mrf.mxu0
      %v2653 = vpop.f32.mrf.mxu0
      %v2654 = vadd.f32 %v2566, %v2653
      %v2655 = vpop.f32.mrf.mxu0
      %2656 = vmatprep.mubr.bf16.mxu0 0
      %2657 = vmatmul.mubr.bf16.gmra.mxu0 %v2514
      %v2658 = vpop.f32.mrf.mxu0
      %v2659 = vadd.f32 %v2566, %v2658
      %v2660 = vpop.f32.mrf.mxu0
      %v2661 = vpop.f32.mrf.mxu0
      %v2662 = vadd.f32 %v2566, %v2661
      %v2663 = vpop.f32.mrf.mxu0
      %2664 = vmatprep.mubr.bf16.mxu0 0
      %2665 = vmatmul.mubr.bf16.gmra.mxu0 %v2515
      %v2666 = vpop.f32.mrf.mxu0
      %v2667 = vadd.f32 %v2566, %v2666
      %v2668 = vpop.f32.mrf.mxu0
      %v2669 = vpop.f32.mrf.mxu0
      %v2670 = vadd.f32 %v2566, %v2669
      %v2671 = vpop.f32.mrf.mxu0
      %2672 = vmatprep.mubr.bf16.mxu0 0
      %2673 = vmatmul.mubr.bf16.gmra.mxu0 %v2516
      %v2674 = vpop.f32.mrf.mxu0
      %v2675 = vadd.f32 %v2566, %v2674
      %v2676 = vpop.f32.mrf.mxu0
      %v2677 = vpop.f32.mrf.mxu0
      %v2678 = vadd.f32 %v2566, %v2677
      %v2679 = vpop.f32.mrf.mxu0
      %2680 = vmatprep.mubr.bf16.mxu0 0
      %2681 = vmatmul.mubr.bf16.gmra.mxu0 %v2517
      %v2682 = vpop.f32.mrf.mxu0
      %v2683 = vadd.f32 %v2566, %v2682
      %v2684 = vpop.f32.mrf.mxu0
      %v2685 = vpop.f32.mrf.mxu0
      %v2686 = vadd.f32 %v2566, %v2685
      %v2687 = vpop.f32.mrf.mxu0
      %2688 = vmatprep.mubr.bf16.mxu0 0
      %2689 = vmatmul.mubr.bf16.gmra.mxu0 %v2518
      %v2690 = vpop.f32.mrf.mxu0
      %v2691 = vadd.f32 %v2566, %v2690
      %v2692 = vpop.f32.mrf.mxu0
      %v2693 = vpop.f32.mrf.mxu0
      %v2694 = vadd.f32 %v2566, %v2693
      %v2695 = vpop.f32.mrf.mxu0
      %2696 = vmatprep.mubr.bf16.mxu0 0
      %2697 = vmatmul.mubr.bf16.gmra.mxu0 %v2519
      %v2698 = vpop.f32.mrf.mxu0
      %v2699 = vadd.f32 %v2566, %v2698
      %v2700 = vpop.f32.mrf.mxu0
      %v2701 = vpop.f32.mrf.mxu0
      %v2702 = vadd.f32 %v2566, %v2701
      %v2703 = vpop.f32.mrf.mxu0
      %2704 = vmatprep.mubr.bf16.mxu0 0
      %2705 = vmatmul.mubr.bf16.gmra.mxu0 %v2520
      %v2706 = vpop.f32.mrf.mxu0
      %v2707 = vadd.f32 %v2566, %v2706
      %v2708 = vpop.f32.mrf.mxu0
      %v2709 = vpop.f32.mrf.mxu0
      %v2710 = vadd.f32 %v2566, %v2709
      %v2711 = vpop.f32.mrf.mxu0
      %2712 = vmatprep.mubr.bf16.mxu0 0
      %2713 = vmatmul.mubr.bf16.gmra.mxu0 %v2521
      %v2714 = vpop.f32.mrf.mxu0
      %v2715 = vadd.f32 %v2566, %v2714
      %v2716 = vpop.f32.mrf.mxu0
      %v2717 = vpop.f32.mrf.mxu0
      %v2718 = vadd.f32 %v2566, %v2717
      %v2719 = vpop.f32.mrf.mxu0
      %2720 = vmatprep.mubr.bf16.mxu0 0
      %2721 = vmatmul.mubr.bf16.gmra.mxu0 %v2522
      %v2722 = vpop.f32.mrf.mxu0
      %v2723 = vadd.f32 %v2566, %v2722
      %v2724 = vpop.f32.mrf.mxu0
      %v2725 = vpop.f32.mrf.mxu0
      %v2726 = vadd.f32 %v2566, %v2725
      %v2727 = vpop.f32.mrf.mxu0
      %2728 = vmatprep.mubr.bf16.mxu0 0
      %2729 = vmatmul.mubr.bf16.gmra.mxu0 %v2523
      %v2730 = vpop.f32.mrf.mxu0
      %v2731 = vadd.f32 %v2566, %v2730
      %v2732 = vpop.f32.mrf.mxu0
      %v2733 = vpop.f32.mrf.mxu0
      %v2734 = vadd.f32 %v2566, %v2733
      %v2735 = vpop.f32.mrf.mxu0
      %2736 = vmatprep.mubr.bf16.mxu0 0
      %2737 = vmatmul.mubr.bf16.gmra.mxu0 %v2524
      %v2738 = vpop.f32.mrf.mxu0
      %v2739 = vadd.f32 %v2566, %v2738
      %v2740 = vpop.f32.mrf.mxu0
      %v2741 = vpop.f32.mrf.mxu0
      %v2742 = vadd.f32 %v2566, %v2741
      %v2743 = vpop.f32.mrf.mxu0
      %2744 = vmatprep.mubr.bf16.mxu0 0
      %2745 = vmatmul.mubr.bf16.gmra.mxu0 %v2525
      %v2746 = vpop.f32.mrf.mxu0
      %v2747 = vadd.f32 %v2566, %v2746
      %v2748 = vpop.f32.mrf.mxu0
      %v2749 = vpop.f32.mrf.mxu0
      %v2750 = vadd.f32 %v2566, %v2749
      %v2751 = vpop.f32.mrf.mxu0
      %2752 = vmatprep.mubr.bf16.mxu0 0
      %2753 = vmatmul.mubr.bf16.gmra.mxu0 %v2526
      %v2754 = vpop.f32.mrf.mxu0
      %v2755 = vadd.f32 %v2566, %v2754
      %v2756 = vpop.f32.mrf.mxu0
      %v2757 = vpop.f32.mrf.mxu0
      %v2758 = vadd.f32 %v2566, %v2757
      %v2759 = vpop.f32.mrf.mxu0
      %2760 = vmatprep.mubr.bf16.mxu0 0
      %2761 = vmatmul.mubr.bf16.gmra.mxu0 %v2527
      %v2762 = vpop.f32.mrf.mxu0
      %v2763 = vadd.f32 %v2566, %v2762
      %v2764 = vpop.f32.mrf.mxu0
      %v2765 = vpop.f32.mrf.mxu0
      %v2766 = vadd.f32 %v2566, %v2765
      %v2767 = vpop.f32.mrf.mxu0
      %2768 = vmatprep.mubr.bf16.mxu0 0
      %2769 = vmatmul.mubr.bf16.gmra.mxu0 %v2528
      %v2770 = vpop.f32.mrf.mxu0
      %v2771 = vadd.f32 %v2566, %v2770
      %v2772 = vpop.f32.mrf.mxu0
      %v2773 = vpop.f32.mrf.mxu0
      %v2774 = vadd.f32 %v2566, %v2773
      %v2775 = vpop.f32.mrf.mxu0
      %2776 = vmatprep.mubr.bf16.mxu0 0
      %2777 = vmatmul.mubr.bf16.gmra.mxu0 %v2529
      %v2778 = vpop.f32.mrf.mxu0
      %v2779 = vadd.f32 %v2566, %v2778
      %v2780 = vpop.f32.mrf.mxu0
      %v2781 = vpop.f32.mrf.mxu0
      %v2782 = vadd.f32 %v2566, %v2781
      %v2783 = vpop.f32.mrf.mxu0
      %2784 = vmatprep.mubr.bf16.mxu0 0
      %2785 = vmatmul.mubr.bf16.gmra.mxu0 %v2530
      %v2786 = vpop.f32.mrf.mxu0
      %v2787 = vadd.f32 %v2566, %v2786
      %v2788 = vpop.f32.mrf.mxu0
      %v2789 = vpop.f32.mrf.mxu0
      %v2790 = vadd.f32 %v2566, %v2789
      %v2791 = vpop.f32.mrf.mxu0
      %2792 = vmatprep.mubr.bf16.mxu0 0
      %2793 = vmatmul.mubr.bf16.gmra.mxu0 %v2531
      %v2794 = vpop.f32.mrf.mxu0
      %v2795 = vadd.f32 %v2566, %v2794
      %v2796 = vpop.f32.mrf.mxu0
      %v2797 = vpop.f32.mrf.mxu0
      %v2798 = vadd.f32 %v2566, %v2797
      %v2799 = vpop.f32.mrf.mxu0
      %2800 = vmatprep.mubr.bf16.mxu0 0
      %2801 = vmatmul.mubr.bf16.gmra.mxu0 %v2532
      %v2802 = vpop.f32.mrf.mxu0
      %v2803 = vadd.f32 %v2566, %v2802
      %v2804 = vpop.f32.mrf.mxu0
      %v2805 = vpop.f32.mrf.mxu0
      %v2806 = vadd.f32 %v2566, %v2805
      %v2807 = vpop.f32.mrf.mxu0
      %2808 = vmatprep.mubr.bf16.mxu0 0
      %2809 = vmatmul.mubr.bf16.gmra.mxu0 %v2533
      %v2810 = vpop.f32.mrf.mxu0
      %v2811 = vadd.f32 %v2566, %v2810
      %v2812 = vpop.f32.mrf.mxu0
      %v2813 = vpop.f32.mrf.mxu0
      %v2814 = vadd.f32 %v2566, %v2813
      %v2815 = vpop.f32.mrf.mxu0
      %2816 = vmatprep.mubr.bf16.mxu0 0
      %2817 = vmatmul.mubr.bf16.gmra.mxu0 %v2534
      %v2818 = vpop.f32.mrf.mxu0
      %v2819 = vadd.f32 %v2566, %v2818
      %v2820 = vpop.f32.mrf.mxu0
      %v2821 = vpop.f32.mrf.mxu0
      %v2822 = vadd.f32 %v2566, %v2821
      %v2823 = vpop.f32.mrf.mxu0
      %2824 = vmatprep.mubr.bf16.mxu0 0
      %2825 = vmatmul.mubr.bf16.gmra.mxu0 %v2535
      %v2826 = vpop.f32.mrf.mxu0
      %v2827 = vadd.f32 %v2566, %v2826
      %v2828 = vpop.f32.mrf.mxu0
      %v2829 = vpop.f32.mrf.mxu0
      %v2830 = vadd.f32 %v2566, %v2829
      %v2831 = vpop.f32.mrf.mxu0
      %2832 = vmatprep.mubr.bf16.mxu0 0
      %2833 = vmatmul.mubr.bf16.gmra.mxu0 %v2536
      %v2834 = vpop.f32.mrf.mxu0
      %v2835 = vadd.f32 %v2566, %v2834
      %v2836 = vpop.f32.mrf.mxu0
      %v2837 = vpop.f32.mrf.mxu0
      %v2838 = vadd.f32 %v2566, %v2837
      %v2839 = vpop.f32.mrf.mxu0
      %2840 = vmatprep.mubr.bf16.mxu0 0
      %2841 = vmatmul.mubr.bf16.gmra.mxu0 %v2537
      %v2842 = vpop.f32.mrf.mxu0
      %v2843 = vadd.f32 %v2566, %v2842
      %v2844 = vpop.f32.mrf.mxu0
      %v2845 = vpop.f32.mrf.mxu0
      %v2846 = vadd.f32 %v2566, %v2845
      %v2847 = vpop.f32.mrf.mxu0
      %2848 = vmatprep.mubr.bf16.mxu0 0
      %2849 = vmatmul.mubr.bf16.gmra.mxu0 %v2538
      %v2850 = vpop.f32.mrf.mxu0
      %v2851 = vadd.f32 %v2566, %v2850
      %v2852 = vpop.f32.mrf.mxu0
      %v2853 = vpop.f32.mrf.mxu0
      %v2854 = vadd.f32 %v2566, %v2853
      %v2855 = vpop.f32.mrf.mxu0
      %2856 = vmatprep.mubr.bf16.mxu0 0
      %2857 = vmatmul.mubr.bf16.gmra.mxu0 %v2539
      %v2858 = vpop.f32.mrf.mxu0
      %v2859 = vadd.f32 %v2566, %v2858
      %v2860 = vpop.f32.mrf.mxu0
      %v2861 = vpop.f32.mrf.mxu0
      %v2862 = vadd.f32 %v2566, %v2861
      %v2863 = vpop.f32.mrf.mxu0
      %2864 = vmatprep.mubr.bf16.mxu0 0
      %2865 = vmatmul.mubr.bf16.gmra.mxu0 %v2540
      %v2866 = vpop.f32.mrf.mxu0
      %v2867 = vadd.f32 %v2566, %v2866
      %v2868 = vpop.f32.mrf.mxu0
      %v2869 = vpop.f32.mrf.mxu0
      %v2870 = vadd.f32 %v2566, %v2869
      %v2871 = vpop.f32.mrf.mxu0
      %2872 = vmatprep.mubr.bf16.mxu0 0
      %2873 = vmatmul.mubr.bf16.gmra.mxu0 %v2541
      %v2874 = vpop.f32.mrf.mxu0
      %v2875 = vadd.f32 %v2566, %v2874
      %v2876 = vpop.f32.mrf.mxu0
      %v2877 = vpop.f32.mrf.mxu0
      %v2878 = vadd.f32 %v2566, %v2877
      %v2879 = vpop.f32.mrf.mxu0
      %2880 = vmatprep.mubr.bf16.mxu0 0
      %2881 = vmatmul.mubr.bf16.gmra.mxu0 %v2542
      %v2882 = vpop.f32.mrf.mxu0
      %v2883 = vadd.f32 %v2566, %v2882
      %v2884 = vpop.f32.mrf.mxu0
      %v2885 = vpop.f32.mrf.mxu0
      %v2886 = vadd.f32 %v2566, %v2885
      %v2887 = vpop.f32.mrf.mxu0
      %2888 = vmatprep.mubr.bf16.mxu0 0
      %2889 = vmatmul.mubr.bf16.gmra.mxu0 %v2543
      %v2890 = vpop.f32.mrf.mxu0
      %v2891 = vadd.f32 %v2566, %v2890
      %v2892 = vpop.f32.mrf.mxu0
      %v2893 = vpop.f32.mrf.mxu0
      %v2894 = vadd.f32 %v2566, %v2893
      %v2895 = vpop.f32.mrf.mxu0
      %2896 = vmatprep.mubr.bf16.mxu0 0
      %2897 = vmatmul.mubr.bf16.gmra.mxu0 %v2544
      %v2898 = vpop.f32.mrf.mxu0
      %v2899 = vadd.f32 %v2566, %v2898
      %v2900 = vpop.f32.mrf.mxu0
      %v2901 = vpop.f32.mrf.mxu0
      %v2902 = vadd.f32 %v2566, %v2901
      %v2903 = vpop.f32.mrf.mxu0
      %2904 = vdwg.mxu0
      %v2905 = vxor.u32 %v2651, 2147483648
      %v2906 = vxor.u32 %v2654, 2147483648
      %v2907 = vxor.u32 %v2659, 2147483648
      %v2908 = vxor.u32 %v2662, 2147483648
      %v2909 = vxor.u32 %v2667, 2147483648
      %v2910 = vxor.u32 %v2670, 2147483648
      %v2911 = vxor.u32 %v2675, 2147483648
      %v2912 = vxor.u32 %v2678, 2147483648
      %v2913 = vxor.u32 %v2683, 2147483648
      %v2914 = vxor.u32 %v2686, 2147483648
      %v2915 = vxor.u32 %v2691, 2147483648
      %v2916 = vxor.u32 %v2694, 2147483648
      %v2917 = vxor.u32 %v2699, 2147483648
      %v2918 = vxor.u32 %v2702, 2147483648
      %v2919 = vxor.u32 %v2707, 2147483648
      %v2920 = vxor.u32 %v2710, 2147483648
      %v2921 = vxor.u32 %v2715, 2147483648
      %v2922 = vxor.u32 %v2718, 2147483648
      %v2923 = vxor.u32 %v2723, 2147483648
      %v2924 = vxor.u32 %v2726, 2147483648
      %v2925 = vxor.u32 %v2731, 2147483648
      %v2926 = vxor.u32 %v2734, 2147483648
      %v2927 = vxor.u32 %v2739, 2147483648
      %v2928 = vxor.u32 %v2742, 2147483648
      %v2929 = vxor.u32 %v2747, 2147483648
      %v2930 = vxor.u32 %v2750, 2147483648
      %v2931 = vxor.u32 %v2755, 2147483648
      %v2932 = vxor.u32 %v2758, 2147483648
      %v2933 = vxor.u32 %v2763, 2147483648
      %v2934 = vxor.u32 %v2766, 2147483648
      %v2935 = vxor.u32 %v2771, 2147483648
      %v2936 = vxor.u32 %v2774, 2147483648
      %v2937 = vxor.u32 %v2779, 2147483648
      %v2938 = vxor.u32 %v2782, 2147483648
      %v2939 = vxor.u32 %v2787, 2147483648
      %v2940 = vxor.u32 %v2790, 2147483648
      %v2941 = vxor.u32 %v2795, 2147483648
      %v2942 = vxor.u32 %v2798, 2147483648
      %v2943 = vxor.u32 %v2803, 2147483648
      %v2944 = vxor.u32 %v2806, 2147483648
      %v2945 = vxor.u32 %v2811, 2147483648
      %v2946 = vxor.u32 %v2814, 2147483648
      %v2947 = vxor.u32 %v2819, 2147483648
      %v2948 = vxor.u32 %v2822, 2147483648
      %v2949 = vxor.u32 %v2827, 2147483648
      %v2950 = vxor.u32 %v2830, 2147483648
      %v2951 = vxor.u32 %v2835, 2147483648
      %v2952 = vxor.u32 %v2838, 2147483648
      %v2953 = vxor.u32 %v2843, 2147483648
      %v2954 = vxor.u32 %v2846, 2147483648
      %v2955 = vxor.u32 %v2851, 2147483648
      %v2956 = vxor.u32 %v2854, 2147483648
      %v2957 = vxor.u32 %v2859, 2147483648
      %v2958 = vxor.u32 %v2862, 2147483648
      %v2959 = vxor.u32 %v2867, 2147483648
      %v2960 = vxor.u32 %v2870, 2147483648
      %v2961 = vxor.u32 %v2875, 2147483648
      %v2962 = vxor.u32 %v2878, 2147483648
      %v2963 = vxor.u32 %v2883, 2147483648
      %v2964 = vxor.u32 %v2886, 2147483648
      %v2965 = vxor.u32 %v2891, 2147483648
      %v2966 = vxor.u32 %v2894, 2147483648
      %v2967 = vxor.u32 %v2899, 2147483648
      %v2968 = vxor.u32 %v2902, 2147483648
      %v2969 = vmul.f32 %v2905, 1.442695
      %v2970 = vpow.pop %v2969
      %v2971 = vmul.f32 %v2906, 1.442695
      %v2972 = vpow.pop %v2971
      %v2973 = vmul.f32 %v2907, 1.442695
      %v2974 = vpow.pop %v2973
      %v2975 = vmul.f32 %v2908, 1.442695
      %v2976 = vpow.pop %v2975
      %v2977 = vmul.f32 %v2909, 1.442695
      %v2978 = vpow.pop %v2977
      %v2979 = vmul.f32 %v2910, 1.442695
      %v2980 = vpow.pop %v2979
      %v2981 = vmul.f32 %v2911, 1.442695
      %v2982 = vpow.pop %v2981
      %v2983 = vmul.f32 %v2912, 1.442695
      %v2984 = vpow.pop %v2983
      %v2985 = vmul.f32 %v2913, 1.442695
      %v2986 = vpow.pop %v2985
      %v2987 = vmul.f32 %v2914, 1.442695
      %v2988 = vpow.pop %v2987
      %v2989 = vmul.f32 %v2915, 1.442695
      %v2990 = vpow.pop %v2989
      %v2991 = vmul.f32 %v2916, 1.442695
      %v2992 = vpow.pop %v2991
      %v2993 = vmul.f32 %v2917, 1.442695
      %v2994 = vpow.pop %v2993
      %v2995 = vmul.f32 %v2918, 1.442695
      %v2996 = vpow.pop %v2995
      %v2997 = vmul.f32 %v2919, 1.442695
      %v2998 = vpow.pop %v2997
      %v2999 = vmul.f32 %v2920, 1.442695
      %v3000 = vpow.pop %v2999
      %v3001 = vmul.f32 %v2921, 1.442695
      %v3002 = vpow.pop %v3001
      %v3003 = vmul.f32 %v2922, 1.442695
      %v3004 = vpow.pop %v3003
      %v3005 = vmul.f32 %v2923, 1.442695
      %v3006 = vpow.pop %v3005
      %v3007 = vmul.f32 %v2924, 1.442695
      %v3008 = vpow.pop %v3007
      %v3009 = vmul.f32 %v2925, 1.442695
      %v3010 = vpow.pop %v3009
      %v3011 = vmul.f32 %v2926, 1.442695
      %v3012 = vpow.pop %v3011
      %v3013 = vmul.f32 %v2927, 1.442695
      %v3014 = vpow.pop %v3013
      %v3015 = vmul.f32 %v2928, 1.442695
      %v3016 = vpow.pop %v3015
      %v3017 = vmul.f32 %v2929, 1.442695
      %v3018 = vpow.pop %v3017
      %v3019 = vmul.f32 %v2930, 1.442695
      %v3020 = vpow.pop %v3019
      %v3021 = vmul.f32 %v2931, 1.442695
      %v3022 = vpow.pop %v3021
      %v3023 = vmul.f32 %v2932, 1.442695
      %v3024 = vpow.pop %v3023
      %v3025 = vmul.f32 %v2933, 1.442695
      %v3026 = vpow.pop %v3025
      %v3027 = vmul.f32 %v2934, 1.442695
      %v3028 = vpow.pop %v3027
      %v3029 = vmul.f32 %v2935, 1.442695
      %v3030 = vpow.pop %v3029
      %v3031 = vmul.f32 %v2936, 1.442695
      %v3032 = vpow.pop %v3031
      %v3033 = vmul.f32 %v2937, 1.442695
      %v3034 = vpow.pop %v3033
      %v3035 = vmul.f32 %v2938, 1.442695
      %v3036 = vpow.pop %v3035
      %v3037 = vmul.f32 %v2939, 1.442695
      %v3038 = vpow.pop %v3037
      %v3039 = vmul.f32 %v2940, 1.442695
      %v3040 = vpow.pop %v3039
      %v3041 = vmul.f32 %v2941, 1.442695
      %v3042 = vpow.pop %v3041
      %v3043 = vmul.f32 %v2942, 1.442695
      %v3044 = vpow.pop %v3043
      %v3045 = vmul.f32 %v2943, 1.442695
      %v3046 = vpow.pop %v3045
      %v3047 = vmul.f32 %v2944, 1.442695
      %v3048 = vpow.pop %v3047
      %v3049 = vmul.f32 %v2945, 1.442695
      %v3050 = vpow.pop %v3049
      %v3051 = vmul.f32 %v2946, 1.442695
      %v3052 = vpow.pop %v3051
      %v3053 = vmul.f32 %v2947, 1.442695
      %v3054 = vpow.pop %v3053
      %v3055 = vmul.f32 %v2948, 1.442695
      %v3056 = vpow.pop %v3055
      %v3057 = vmul.f32 %v2949, 1.442695
      %v3058 = vpow.pop %v3057
      %v3059 = vmul.f32 %v2950, 1.442695
      %v3060 = vpow.pop %v3059
      %v3061 = vmul.f32 %v2951, 1.442695
      %v3062 = vpow.pop %v3061
      %v3063 = vmul.f32 %v2952, 1.442695
      %v3064 = vpow.pop %v3063
      %v3065 = vmul.f32 %v2953, 1.442695
      %v3066 = vpow.pop %v3065
      %v3067 = vmul.f32 %v2954, 1.442695
      %v3068 = vpow.pop %v3067
      %v3069 = vmul.f32 %v2955, 1.442695
      %v3070 = vpow.pop %v3069
      %v3071 = vmul.f32 %v2956, 1.442695
      %v3072 = vpow.pop %v3071
      %v3073 = vmul.f32 %v2957, 1.442695
      %v3074 = vpow.pop %v3073
      %v3075 = vmul.f32 %v2958, 1.442695
      %v3076 = vpow.pop %v3075
      %v3077 = vmul.f32 %v2959, 1.442695
      %v3078 = vpow.pop %v3077
      %v3079 = vmul.f32 %v2960, 1.442695
      %v3080 = vpow.pop %v3079
      %v3081 = vmul.f32 %v2961, 1.442695
      %v3082 = vpow.pop %v3081
      %v3083 = vmul.f32 %v2962, 1.442695
      %v3084 = vpow.pop %v3083
      %v3085 = vmul.f32 %v2963, 1.442695
      %v3086 = vpow.pop %v3085
      %v3087 = vmul.f32 %v2964, 1.442695
      %v3088 = vpow.pop %v3087
      %v3089 = vmul.f32 %v2965, 1.442695
      %v3090 = vpow.pop %v3089
      %v3091 = vmul.f32 %v2966, 1.442695
      %v3092 = vpow.pop %v3091
      %v3093 = vmul.f32 %v2967, 1.442695
      %v3094 = vpow.pop %v3093
      %v3095 = vmul.f32 %v2968, 1.442695
      %v3096 = vpow.pop %v3095
      %v3097 = vadd.f32 %v2970, 1.0
      %v3098 = vadd.f32 %v2972, 1.0
      %v3099 = vadd.f32 %v2974, 1.0
      %v3100 = vadd.f32 %v2976, 1.0
      %v3101 = vadd.f32 %v2978, 1.0
      %v3102 = vadd.f32 %v2980, 1.0
      %v3103 = vadd.f32 %v2982, 1.0
      %v3104 = vadd.f32 %v2984, 1.0
      %v3105 = vadd.f32 %v2986, 1.0
      %v3106 = vadd.f32 %v2988, 1.0
      %v3107 = vadd.f32 %v2990, 1.0
      %v3108 = vadd.f32 %v2992, 1.0
      %v3109 = vadd.f32 %v2994, 1.0
      %v3110 = vadd.f32 %v2996, 1.0
      %v3111 = vadd.f32 %v2998, 1.0
      %v3112 = vadd.f32 %v3000, 1.0
      %v3113 = vadd.f32 %v3002, 1.0
      %v3114 = vadd.f32 %v3004, 1.0
      %v3115 = vadd.f32 %v3006, 1.0
      %v3116 = vadd.f32 %v3008, 1.0
      %v3117 = vadd.f32 %v3010, 1.0
      %v3118 = vadd.f32 %v3012, 1.0
      %v3119 = vadd.f32 %v3014, 1.0
      %v3120 = vadd.f32 %v3016, 1.0
      %v3121 = vadd.f32 %v3018, 1.0
      %v3122 = vadd.f32 %v3020, 1.0
      %v3123 = vadd.f32 %v3022, 1.0
      %v3124 = vadd.f32 %v3024, 1.0
      %v3125 = vadd.f32 %v3026, 1.0
      %v3126 = vadd.f32 %v3028, 1.0
      %v3127 = vadd.f32 %v3030, 1.0
      %v3128 = vadd.f32 %v3032, 1.0
      %v3129 = vadd.f32 %v3034, 1.0
      %v3130 = vadd.f32 %v3036, 1.0
      %v3131 = vadd.f32 %v3038, 1.0
      %v3132 = vadd.f32 %v3040, 1.0
      %v3133 = vadd.f32 %v3042, 1.0
      %v3134 = vadd.f32 %v3044, 1.0
      %v3135 = vadd.f32 %v3046, 1.0
      %v3136 = vadd.f32 %v3048, 1.0
      %v3137 = vadd.f32 %v3050, 1.0
      %v3138 = vadd.f32 %v3052, 1.0
      %v3139 = vadd.f32 %v3054, 1.0
      %v3140 = vadd.f32 %v3056, 1.0
      %v3141 = vadd.f32 %v3058, 1.0
      %v3142 = vadd.f32 %v3060, 1.0
      %v3143 = vadd.f32 %v3062, 1.0
      %v3144 = vadd.f32 %v3064, 1.0
      %v3145 = vadd.f32 %v3066, 1.0
      %v3146 = vadd.f32 %v3068, 1.0
      %v3147 = vadd.f32 %v3070, 1.0
      %v3148 = vadd.f32 %v3072, 1.0
      %v3149 = vadd.f32 %v3074, 1.0
      %v3150 = vadd.f32 %v3076, 1.0
      %v3151 = vadd.f32 %v3078, 1.0
      %v3152 = vadd.f32 %v3080, 1.0
      %v3153 = vadd.f32 %v3082, 1.0
      %v3154 = vadd.f32 %v3084, 1.0
      %v3155 = vadd.f32 %v3086, 1.0
      %v3156 = vadd.f32 %v3088, 1.0
      %v3157 = vadd.f32 %v3090, 1.0
      %v3158 = vadd.f32 %v3092, 1.0
      %v3159 = vadd.f32 %v3094, 1.0
      %v3160 = vadd.f32 %v3096, 1.0
      %v3161 = vrcp.pop %v3097
      %v3162 = vmul.f32 1.0, %v3161
      %v3163 = vrcp.pop %v3098
      %v3164 = vmul.f32 1.0, %v3163
      %v3165 = vrcp.pop %v3099
      %v3166 = vmul.f32 1.0, %v3165
      %v3167 = vrcp.pop %v3100
      %v3168 = vmul.f32 1.0, %v3167
      %v3169 = vrcp.pop %v3101
      %v3170 = vmul.f32 1.0, %v3169
      %v3171 = vrcp.pop %v3102
      %v3172 = vmul.f32 1.0, %v3171
      %v3173 = vrcp.pop %v3103
      %v3174 = vmul.f32 1.0, %v3173
      %v3175 = vrcp.pop %v3104
      %v3176 = vmul.f32 1.0, %v3175
      %v3177 = vrcp.pop %v3105
      %v3178 = vmul.f32 1.0, %v3177
      %v3179 = vrcp.pop %v3106
      %v3180 = vmul.f32 1.0, %v3179
      %v3181 = vrcp.pop %v3107
      %v3182 = vmul.f32 1.0, %v3181
      %v3183 = vrcp.pop %v3108
      %v3184 = vmul.f32 1.0, %v3183
      %v3185 = vrcp.pop %v3109
      %v3186 = vmul.f32 1.0, %v3185
      %v3187 = vrcp.pop %v3110
      %v3188 = vmul.f32 1.0, %v3187
      %v3189 = vrcp.pop %v3111
      %v3190 = vmul.f32 1.0, %v3189
      %v3191 = vrcp.pop %v3112
      %v3192 = vmul.f32 1.0, %v3191
      %v3193 = vrcp.pop %v3113
      %v3194 = vmul.f32 1.0, %v3193
      %v3195 = vrcp.pop %v3114
      %v3196 = vmul.f32 1.0, %v3195
      %v3197 = vrcp.pop %v3115
      %v3198 = vmul.f32 1.0, %v3197
      %v3199 = vrcp.pop %v3116
      %v3200 = vmul.f32 1.0, %v3199
      %v3201 = vrcp.pop %v3117
      %v3202 = vmul.f32 1.0, %v3201
      %v3203 = vrcp.pop %v3118
      %v3204 = vmul.f32 1.0, %v3203
      %v3205 = vrcp.pop %v3119
      %v3206 = vmul.f32 1.0, %v3205
      %v3207 = vrcp.pop %v3120
      %v3208 = vmul.f32 1.0, %v3207
      %v3209 = vrcp.pop %v3121
      %v3210 = vmul.f32 1.0, %v3209
      %v3211 = vrcp.pop %v3122
      %v3212 = vmul.f32 1.0, %v3211
      %v3213 = vrcp.pop %v3123
      %v3214 = vmul.f32 1.0, %v3213
      %v3215 = vrcp.pop %v3124
      %v3216 = vmul.f32 1.0, %v3215
      %v3217 = vrcp.pop %v3125
      %v3218 = vmul.f32 1.0, %v3217
      %v3219 = vrcp.pop %v3126
      %v3220 = vmul.f32 1.0, %v3219
      %v3221 = vrcp.pop %v3127
      %v3222 = vmul.f32 1.0, %v3221
      %v3223 = vrcp.pop %v3128
      %v3224 = vmul.f32 1.0, %v3223
      %v3225 = vrcp.pop %v3129
      %v3226 = vmul.f32 1.0, %v3225
      %v3227 = vrcp.pop %v3130
      %v3228 = vmul.f32 1.0, %v3227
      %v3229 = vrcp.pop %v3131
      %v3230 = vmul.f32 1.0, %v3229
      %v3231 = vrcp.pop %v3132
      %v3232 = vmul.f32 1.0, %v3231
      %v3233 = vrcp.pop %v3133
      %v3234 = vmul.f32 1.0, %v3233
      %v3235 = vrcp.pop %v3134
      %v3236 = vmul.f32 1.0, %v3235
      %v3237 = vrcp.pop %v3135
      %v3238 = vmul.f32 1.0, %v3237
      %v3239 = vrcp.pop %v3136
      %v3240 = vmul.f32 1.0, %v3239
      %v3241 = vrcp.pop %v3137
      %v3242 = vmul.f32 1.0, %v3241
      %v3243 = vrcp.pop %v3138
      %v3244 = vmul.f32 1.0, %v3243
      %v3245 = vrcp.pop %v3139
      %v3246 = vmul.f32 1.0, %v3245
      %v3247 = vrcp.pop %v3140
      %v3248 = vmul.f32 1.0, %v3247
      %v3249 = vrcp.pop %v3141
      %v3250 = vmul.f32 1.0, %v3249
      %v3251 = vrcp.pop %v3142
      %v3252 = vmul.f32 1.0, %v3251
      %v3253 = vrcp.pop %v3143
      %v3254 = vmul.f32 1.0, %v3253
      %v3255 = vrcp.pop %v3144
      %v3256 = vmul.f32 1.0, %v3255
      %v3257 = vrcp.pop %v3145
      %v3258 = vmul.f32 1.0, %v3257
      %v3259 = vrcp.pop %v3146
      %v3260 = vmul.f32 1.0, %v3259
      %v3261 = vrcp.pop %v3147
      %v3262 = vmul.f32 1.0, %v3261
      %v3263 = vrcp.pop %v3148
      %v3264 = vmul.f32 1.0, %v3263
      %v3265 = vrcp.pop %v3149
      %v3266 = vmul.f32 1.0, %v3265
      %v3267 = vrcp.pop %v3150
      %v3268 = vmul.f32 1.0, %v3267
      %v3269 = vrcp.pop %v3151
      %v3270 = vmul.f32 1.0, %v3269
      %v3271 = vrcp.pop %v3152
      %v3272 = vmul.f32 1.0, %v3271
      %v3273 = vrcp.pop %v3153
      %v3274 = vmul.f32 1.0, %v3273
      %v3275 = vrcp.pop %v3154
      %v3276 = vmul.f32 1.0, %v3275
      %v3277 = vrcp.pop %v3155
      %v3278 = vmul.f32 1.0, %v3277
      %v3279 = vrcp.pop %v3156
      %v3280 = vmul.f32 1.0, %v3279
      %v3281 = vrcp.pop %v3157
      %v3282 = vmul.f32 1.0, %v3281
      %v3283 = vrcp.pop %v3158
      %v3284 = vmul.f32 1.0, %v3283
      %v3285 = vrcp.pop %v3159
      %v3286 = vmul.f32 1.0, %v3285
      %v3287 = vrcp.pop %v3160
      %v3288 = vmul.f32 1.0, %v3287
      %v3289 = vmul.f32 %v2651, %v3162
      %v3290 = vmul.f32 %v2654, %v3164
      %v3291 = vmul.f32 %v2659, %v3166
      %v3292 = vmul.f32 %v2662, %v3168
      %v3293 = vmul.f32 %v2667, %v3170
      %v3294 = vmul.f32 %v2670, %v3172
      %v3295 = vmul.f32 %v2675, %v3174
      %v3296 = vmul.f32 %v2678, %v3176
      %v3297 = vmul.f32 %v2683, %v3178
      %v3298 = vmul.f32 %v2686, %v3180
      %v3299 = vmul.f32 %v2691, %v3182
      %v3300 = vmul.f32 %v2694, %v3184
      %v3301 = vmul.f32 %v2699, %v3186
      %v3302 = vmul.f32 %v2702, %v3188
      %v3303 = vmul.f32 %v2707, %v3190
      %v3304 = vmul.f32 %v2710, %v3192
      %v3305 = vmul.f32 %v2715, %v3194
      %v3306 = vmul.f32 %v2718, %v3196
      %v3307 = vmul.f32 %v2723, %v3198
      %v3308 = vmul.f32 %v2726, %v3200
      %v3309 = vmul.f32 %v2731, %v3202
      %v3310 = vmul.f32 %v2734, %v3204
      %v3311 = vmul.f32 %v2739, %v3206
      %v3312 = vmul.f32 %v2742, %v3208
      %v3313 = vmul.f32 %v2747, %v3210
      %v3314 = vmul.f32 %v2750, %v3212
      %v3315 = vmul.f32 %v2755, %v3214
      %v3316 = vmul.f32 %v2758, %v3216
      %v3317 = vmul.f32 %v2763, %v3218
      %v3318 = vmul.f32 %v2766, %v3220
      %v3319 = vmul.f32 %v2771, %v3222
      %v3320 = vmul.f32 %v2774, %v3224
      %v3321 = vmul.f32 %v2779, %v3226
      %v3322 = vmul.f32 %v2782, %v3228
      %v3323 = vmul.f32 %v2787, %v3230
      %v3324 = vmul.f32 %v2790, %v3232
      %v3325 = vmul.f32 %v2795, %v3234
      %v3326 = vmul.f32 %v2798, %v3236
      %v3327 = vmul.f32 %v2803, %v3238
      %v3328 = vmul.f32 %v2806, %v3240
      %v3329 = vmul.f32 %v2811, %v3242
      %v3330 = vmul.f32 %v2814, %v3244
      %v3331 = vmul.f32 %v2819, %v3246
      %v3332 = vmul.f32 %v2822, %v3248
      %v3333 = vmul.f32 %v2827, %v3250
      %v3334 = vmul.f32 %v2830, %v3252
      %v3335 = vmul.f32 %v2835, %v3254
      %v3336 = vmul.f32 %v2838, %v3256
      %v3337 = vmul.f32 %v2843, %v3258
      %v3338 = vmul.f32 %v2846, %v3260
      %v3339 = vmul.f32 %v2851, %v3262
      %v3340 = vmul.f32 %v2854, %v3264
      %v3341 = vmul.f32 %v2859, %v3266
      %v3342 = vmul.f32 %v2862, %v3268
      %v3343 = vmul.f32 %v2867, %v3270
      %v3344 = vmul.f32 %v2870, %v3272
      %v3345 = vmul.f32 %v2875, %v3274
      %v3346 = vmul.f32 %v2878, %v3276
      %v3347 = vmul.f32 %v2883, %v3278
      %v3348 = vmul.f32 %v2886, %v3280
      %v3349 = vmul.f32 %v2891, %v3282
      %v3350 = vmul.f32 %v2894, %v3284
      %v3351 = vmul.f32 %v2899, %v3286
      %v3352 = vmul.f32 %v2902, %v3288
      %v3353 = vpack.c.bf16 %v3290, %v3289
      %v3354 = vpack.c.bf16 %v3292, %v3291
      %v3355 = vpack.c.bf16 %v3294, %v3293
      %v3356 = vpack.c.bf16 %v3296, %v3295
      %v3357 = vpack.c.bf16 %v3298, %v3297
      %v3358 = vpack.c.bf16 %v3300, %v3299
      %v3359 = vpack.c.bf16 %v3302, %v3301
      %v3360 = vpack.c.bf16 %v3304, %v3303
      %v3361 = vpack.c.bf16 %v3306, %v3305
      %v3362 = vpack.c.bf16 %v3308, %v3307
      %v3363 = vpack.c.bf16 %v3310, %v3309
      %v3364 = vpack.c.bf16 %v3312, %v3311
      %v3365 = vpack.c.bf16 %v3314, %v3313
      %v3366 = vpack.c.bf16 %v3316, %v3315
      %v3367 = vpack.c.bf16 %v3318, %v3317
      %v3368 = vpack.c.bf16 %v3320, %v3319
      %v3369 = vpack.c.bf16 %v3322, %v3321
      %v3370 = vpack.c.bf16 %v3324, %v3323
      %v3371 = vpack.c.bf16 %v3326, %v3325
      %v3372 = vpack.c.bf16 %v3328, %v3327
      %v3373 = vpack.c.bf16 %v3330, %v3329
      %v3374 = vpack.c.bf16 %v3332, %v3331
      %v3375 = vpack.c.bf16 %v3334, %v3333
      %v3376 = vpack.c.bf16 %v3336, %v3335
      %v3377 = vpack.c.bf16 %v3338, %v3337
      %v3378 = vpack.c.bf16 %v3340, %v3339
      %v3379 = vpack.c.bf16 %v3342, %v3341
      %v3380 = vpack.c.bf16 %v3344, %v3343
      %v3381 = vpack.c.bf16 %v3346, %v3345
      %v3382 = vpack.c.bf16 %v3348, %v3347
      %v3383 = vpack.c.bf16 %v3350, %v3349
      %v3384 = vpack.c.bf16 %v3352, %v3351
      %v3385 = vld [vmem:[%s7] sm:$0xf]
      %v3386 = vld [vmem:[%s7 + $0x4] sm:$0xf]
      %v3387 = vld [vmem:[%s7 + $0x8] sm:$0xf]
      %v3388 = vld [vmem:[%s7 + $0xc] sm:$0xf]
      %v3389 = vld [vmem:[%s7 + $0x10] sm:$0xf]
      %v3390 = vld [vmem:[%s7 + $0x14] sm:$0xf]
      %v3391 = vld [vmem:[%s7 + $0x18] sm:$0xf]
      %v3392 = vld [vmem:[%s7 + $0x1c] sm:$0xf]
      %v3393 = vld [vmem:[%s7 + $0x20] sm:$0xf]
      %v3394 = vld [vmem:[%s7 + $0x24] sm:$0xf]
      %v3395 = vld [vmem:[%s7 + $0x28] sm:$0xf]
      %v3396 = vld [vmem:[%s7 + $0x2c] sm:$0xf]
      %v3397 = vld [vmem:[%s7 + $0x30] sm:$0xf]
      %v3398 = vld [vmem:[%s7 + $0x34] sm:$0xf]
      %v3399 = vld [vmem:[%s7 + $0x38] sm:$0xf]
      %v3400 = vld [vmem:[%s7 + $0x3c] sm:$0xf]
      %v3401 = vld [vmem:[%s8] sm:$0x1]
      %v3403 = vlaneseq
      %v3404 = vshrl.u32 %v3403, 7
      %v3405 = vsub.s32 0, %v3404
      %v3406 = vrot.slane %v3401, %v3405
      %v3424 = vunpack.c.l.b16 %v3385
      %v3425 = vunpack.c.l.b16 %v3386
      %v3426 = vunpack.c.l.b16 %v3387
      %v3427 = vunpack.c.l.b16 %v3388
      %v3428 = vunpack.c.l.b16 %v3389
      %v3429 = vunpack.c.l.b16 %v3390
      %v3430 = vunpack.c.l.b16 %v3391
      %v3431 = vunpack.c.l.b16 %v3392
      %v3432 = vunpack.c.l.b16 %v3393
      %v3433 = vunpack.c.l.b16 %v3394
      %v3434 = vunpack.c.l.b16 %v3395
      %v3435 = vunpack.c.l.b16 %v3396
      %v3436 = vunpack.c.l.b16 %v3397
      %v3437 = vunpack.c.l.b16 %v3398
      %v3438 = vunpack.c.l.b16 %v3399
      %v3439 = vunpack.c.l.b16 %v3400
      %v3440 = vpack.c.b16 %v3425, %v3424
      %v3441 = vpack.c.b16 %v3427, %v3426
      %v3442 = vpack.c.b16 %v3429, %v3428
      %v3443 = vpack.c.b16 %v3431, %v3430
      %v3444 = vpack.c.b16 %v3433, %v3432
      %v3445 = vpack.c.b16 %v3435, %v3434
      %v3446 = vpack.c.b16 %v3437, %v3436
      %v3447 = vpack.c.b16 %v3439, %v3438
      %3456 = vmatprep.subr.bf16.mxu0 0
      %3457 = vmatpush1.bf16.msra.mxu0 %v3447
      %3458 = vmatprep.subr.bf16.mxu0 0
      %3459 = vmatpush1.bf16.msra.mxu0 %v3446
      %3460 = vmatprep.subr.bf16.mxu0 0
      %3461 = vmatpush1.bf16.msra.mxu0 %v3445
      %3462 = vmatprep.subr.bf16.mxu0 0
      %3463 = vmatpush1.bf16.msra.mxu0 %v3444
      %3464 = vmatprep.subr.bf16.mxu0 0
      %3465 = vmatpush1.bf16.msra.mxu0 %v3443
      %3466 = vmatprep.subr.bf16.mxu0 0
      %3467 = vmatpush1.bf16.msra.mxu0 %v3442
      %3468 = vmatprep.subr.bf16.mxu0 0
      %3469 = vmatpush1.bf16.msra.mxu0 %v3441
      %3470 = vmatprep.subr.bf16.mxu0 0
      %3471 = vmatpush1.bf16.msra.mxu0 %v3440
      %3472 = vmatprep.subr.bf16.mxu0 0
      %3473 = vmatpush2.bf16.msra.mxu0 0
      %3474 = vmatprep.subr.bf16.mxu0 0
      %3475 = vmatpush2.bf16.msra.mxu0 0
      %3476 = vmatprep.subr.bf16.mxu0 0
      %3477 = vmatpush2.bf16.msra.mxu0 0
      %3478 = vmatprep.subr.bf16.mxu0 0
      %3479 = vmatpush2.bf16.msra.mxu0 0
      %3480 = vmatprep.subr.bf16.mxu0 0
      %3481 = vmatpush2.bf16.msra.mxu0 0
      %3482 = vmatprep.subr.bf16.mxu0 0
      %3483 = vmatpush2.bf16.msra.mxu0 0
      %3484 = vmatprep.subr.bf16.mxu0 0
      %3485 = vmatpush2.bf16.msra.mxu0 0
      %3486 = vmatprep.subr.bf16.mxu0 0
      %3487 = vmatpush2.bf16.msra.mxu0 0
      %3488 = vmatprep.mubr.bf16.mxu0 0
      %3489 = vmatmul.mubr.bf16.gmra.mxu0 %v3353
      %v3490 = vpop.f32.mrf.mxu0
      %v3491 = vadd.f32 %v3406, %v3490
      %v3492 = vpop.f32.mrf.mxu0
      %v3493 = vpop.f32.mrf.mxu0
      %v3494 = vadd.f32 %v3406, %v3493
      %v3495 = vpop.f32.mrf.mxu0
      %3496 = vmatprep.mubr.bf16.mxu0 0
      %3497 = vmatmul.mubr.bf16.gmra.mxu0 %v3354
      %v3498 = vpop.f32.mrf.mxu0
      %v3499 = vadd.f32 %v3406, %v3498
      %v3500 = vpop.f32.mrf.mxu0
      %v3501 = vpop.f32.mrf.mxu0
      %v3502 = vadd.f32 %v3406, %v3501
      %v3503 = vpop.f32.mrf.mxu0
      %3504 = vmatprep.mubr.bf16.mxu0 0
      %3505 = vmatmul.mubr.bf16.gmra.mxu0 %v3355
      %v3506 = vpop.f32.mrf.mxu0
      %v3507 = vadd.f32 %v3406, %v3506
      %v3508 = vpop.f32.mrf.mxu0
      %v3509 = vpop.f32.mrf.mxu0
      %v3510 = vadd.f32 %v3406, %v3509
      %v3511 = vpop.f32.mrf.mxu0
      %3512 = vmatprep.mubr.bf16.mxu0 0
      %3513 = vmatmul.mubr.bf16.gmra.mxu0 %v3356
      %v3514 = vpop.f32.mrf.mxu0
      %v3515 = vadd.f32 %v3406, %v3514
      %v3516 = vpop.f32.mrf.mxu0
      %v3517 = vpop.f32.mrf.mxu0
      %v3518 = vadd.f32 %v3406, %v3517
      %v3519 = vpop.f32.mrf.mxu0
      %3520 = vmatprep.mubr.bf16.mxu0 0
      %3521 = vmatmul.mubr.bf16.gmra.mxu0 %v3357
      %v3522 = vpop.f32.mrf.mxu0
      %v3523 = vadd.f32 %v3406, %v3522
      %v3524 = vpop.f32.mrf.mxu0
      %v3525 = vpop.f32.mrf.mxu0
      %v3526 = vadd.f32 %v3406, %v3525
      %v3527 = vpop.f32.mrf.mxu0
      %3528 = vmatprep.mubr.bf16.mxu0 0
      %3529 = vmatmul.mubr.bf16.gmra.mxu0 %v3358
      %v3530 = vpop.f32.mrf.mxu0
      %v3531 = vadd.f32 %v3406, %v3530
      %v3532 = vpop.f32.mrf.mxu0
      %v3533 = vpop.f32.mrf.mxu0
      %v3534 = vadd.f32 %v3406, %v3533
      %v3535 = vpop.f32.mrf.mxu0
      %3536 = vmatprep.mubr.bf16.mxu0 0
      %3537 = vmatmul.mubr.bf16.gmra.mxu0 %v3359
      %v3538 = vpop.f32.mrf.mxu0
      %v3539 = vadd.f32 %v3406, %v3538
      %v3540 = vpop.f32.mrf.mxu0
      %v3541 = vpop.f32.mrf.mxu0
      %v3542 = vadd.f32 %v3406, %v3541
      %v3543 = vpop.f32.mrf.mxu0
      %3544 = vmatprep.mubr.bf16.mxu0 0
      %3545 = vmatmul.mubr.bf16.gmra.mxu0 %v3360
      %v3546 = vpop.f32.mrf.mxu0
      %v3547 = vadd.f32 %v3406, %v3546
      %v3548 = vpop.f32.mrf.mxu0
      %v3549 = vpop.f32.mrf.mxu0
      %v3550 = vadd.f32 %v3406, %v3549
      %v3551 = vpop.f32.mrf.mxu0
      %3552 = vmatprep.mubr.bf16.mxu0 0
      %3553 = vmatmul.mubr.bf16.gmra.mxu0 %v3361
      %v3554 = vpop.f32.mrf.mxu0
      %v3555 = vadd.f32 %v3406, %v3554
      %v3556 = vpop.f32.mrf.mxu0
      %v3557 = vpop.f32.mrf.mxu0
      %v3558 = vadd.f32 %v3406, %v3557
      %v3559 = vpop.f32.mrf.mxu0
      %3560 = vmatprep.mubr.bf16.mxu0 0
      %3561 = vmatmul.mubr.bf16.gmra.mxu0 %v3362
      %v3562 = vpop.f32.mrf.mxu0
      %v3563 = vadd.f32 %v3406, %v3562
      %v3564 = vpop.f32.mrf.mxu0
      %v3565 = vpop.f32.mrf.mxu0
      %v3566 = vadd.f32 %v3406, %v3565
      %v3567 = vpop.f32.mrf.mxu0
      %3568 = vmatprep.mubr.bf16.mxu0 0
      %3569 = vmatmul.mubr.bf16.gmra.mxu0 %v3363
      %v3570 = vpop.f32.mrf.mxu0
      %v3571 = vadd.f32 %v3406, %v3570
      %v3572 = vpop.f32.mrf.mxu0
      %v3573 = vpop.f32.mrf.mxu0
      %v3574 = vadd.f32 %v3406, %v3573
      %v3575 = vpop.f32.mrf.mxu0
      %3576 = vmatprep.mubr.bf16.mxu0 0
      %3577 = vmatmul.mubr.bf16.gmra.mxu0 %v3364
      %v3578 = vpop.f32.mrf.mxu0
      %v3579 = vadd.f32 %v3406, %v3578
      %v3580 = vpop.f32.mrf.mxu0
      %v3581 = vpop.f32.mrf.mxu0
      %v3582 = vadd.f32 %v3406, %v3581
      %v3583 = vpop.f32.mrf.mxu0
      %3584 = vmatprep.mubr.bf16.mxu0 0
      %3585 = vmatmul.mubr.bf16.gmra.mxu0 %v3365
      %v3586 = vpop.f32.mrf.mxu0
      %v3587 = vadd.f32 %v3406, %v3586
      %v3588 = vpop.f32.mrf.mxu0
      %v3589 = vpop.f32.mrf.mxu0
      %v3590 = vadd.f32 %v3406, %v3589
      %v3591 = vpop.f32.mrf.mxu0
      %3592 = vmatprep.mubr.bf16.mxu0 0
      %3593 = vmatmul.mubr.bf16.gmra.mxu0 %v3366
      %v3594 = vpop.f32.mrf.mxu0
      %v3595 = vadd.f32 %v3406, %v3594
      %v3596 = vpop.f32.mrf.mxu0
      %v3597 = vpop.f32.mrf.mxu0
      %v3598 = vadd.f32 %v3406, %v3597
      %v3599 = vpop.f32.mrf.mxu0
      %3600 = vmatprep.mubr.bf16.mxu0 0
      %3601 = vmatmul.mubr.bf16.gmra.mxu0 %v3367
      %v3602 = vpop.f32.mrf.mxu0
      %v3603 = vadd.f32 %v3406, %v3602
      %v3604 = vpop.f32.mrf.mxu0
      %v3605 = vpop.f32.mrf.mxu0
      %v3606 = vadd.f32 %v3406, %v3605
      %v3607 = vpop.f32.mrf.mxu0
      %3608 = vmatprep.mubr.bf16.mxu0 0
      %3609 = vmatmul.mubr.bf16.gmra.mxu0 %v3368
      %v3610 = vpop.f32.mrf.mxu0
      %v3611 = vadd.f32 %v3406, %v3610
      %v3612 = vpop.f32.mrf.mxu0
      %v3613 = vpop.f32.mrf.mxu0
      %v3614 = vadd.f32 %v3406, %v3613
      %v3615 = vpop.f32.mrf.mxu0
      %3616 = vmatprep.mubr.bf16.mxu0 0
      %3617 = vmatmul.mubr.bf16.gmra.mxu0 %v3369
      %v3618 = vpop.f32.mrf.mxu0
      %v3619 = vadd.f32 %v3406, %v3618
      %v3620 = vpop.f32.mrf.mxu0
      %v3621 = vpop.f32.mrf.mxu0
      %v3622 = vadd.f32 %v3406, %v3621
      %v3623 = vpop.f32.mrf.mxu0
      %3624 = vmatprep.mubr.bf16.mxu0 0
      %3625 = vmatmul.mubr.bf16.gmra.mxu0 %v3370
      %v3626 = vpop.f32.mrf.mxu0
      %v3627 = vadd.f32 %v3406, %v3626
      %v3628 = vpop.f32.mrf.mxu0
      %v3629 = vpop.f32.mrf.mxu0
      %v3630 = vadd.f32 %v3406, %v3629
      %v3631 = vpop.f32.mrf.mxu0
      %3632 = vmatprep.mubr.bf16.mxu0 0
      %3633 = vmatmul.mubr.bf16.gmra.mxu0 %v3371
      %v3634 = vpop.f32.mrf.mxu0
      %v3635 = vadd.f32 %v3406, %v3634
      %v3636 = vpop.f32.mrf.mxu0
      %v3637 = vpop.f32.mrf.mxu0
      %v3638 = vadd.f32 %v3406, %v3637
      %v3639 = vpop.f32.mrf.mxu0
      %3640 = vmatprep.mubr.bf16.mxu0 0
      %3641 = vmatmul.mubr.bf16.gmra.mxu0 %v3372
      %v3642 = vpop.f32.mrf.mxu0
      %v3643 = vadd.f32 %v3406, %v3642
      %v3644 = vpop.f32.mrf.mxu0
      %v3645 = vpop.f32.mrf.mxu0
      %v3646 = vadd.f32 %v3406, %v3645
      %v3647 = vpop.f32.mrf.mxu0
      %3648 = vmatprep.mubr.bf16.mxu0 0
      %3649 = vmatmul.mubr.bf16.gmra.mxu0 %v3373
      %v3650 = vpop.f32.mrf.mxu0
      %v3651 = vadd.f32 %v3406, %v3650
      %v3652 = vpop.f32.mrf.mxu0
      %v3653 = vpop.f32.mrf.mxu0
      %v3654 = vadd.f32 %v3406, %v3653
      %v3655 = vpop.f32.mrf.mxu0
      %3656 = vmatprep.mubr.bf16.mxu0 0
      %3657 = vmatmul.mubr.bf16.gmra.mxu0 %v3374
      %v3658 = vpop.f32.mrf.mxu0
      %v3659 = vadd.f32 %v3406, %v3658
      %v3660 = vpop.f32.mrf.mxu0
      %v3661 = vpop.f32.mrf.mxu0
      %v3662 = vadd.f32 %v3406, %v3661
      %v3663 = vpop.f32.mrf.mxu0
      %3664 = vmatprep.mubr.bf16.mxu0 0
      %3665 = vmatmul.mubr.bf16.gmra.mxu0 %v3375
      %v3666 = vpop.f32.mrf.mxu0
      %v3667 = vadd.f32 %v3406, %v3666
      %v3668 = vpop.f32.mrf.mxu0
      %v3669 = vpop.f32.mrf.mxu0
      %v3670 = vadd.f32 %v3406, %v3669
      %v3671 = vpop.f32.mrf.mxu0
      %3672 = vmatprep.mubr.bf16.mxu0 0
      %3673 = vmatmul.mubr.bf16.gmra.mxu0 %v3376
      %v3674 = vpop.f32.mrf.mxu0
      %v3675 = vadd.f32 %v3406, %v3674
      %v3676 = vpop.f32.mrf.mxu0
      %v3677 = vpop.f32.mrf.mxu0
      %v3678 = vadd.f32 %v3406, %v3677
      %v3679 = vpop.f32.mrf.mxu0
      %3680 = vmatprep.mubr.bf16.mxu0 0
      %3681 = vmatmul.mubr.bf16.gmra.mxu0 %v3377
      %v3682 = vpop.f32.mrf.mxu0
      %v3683 = vadd.f32 %v3406, %v3682
      %v3684 = vpop.f32.mrf.mxu0
      %v3685 = vpop.f32.mrf.mxu0
      %v3686 = vadd.f32 %v3406, %v3685
      %v3687 = vpop.f32.mrf.mxu0
      %3688 = vmatprep.mubr.bf16.mxu0 0
      %3689 = vmatmul.mubr.bf16.gmra.mxu0 %v3378
      %v3690 = vpop.f32.mrf.mxu0
      %v3691 = vadd.f32 %v3406, %v3690
      %v3692 = vpop.f32.mrf.mxu0
      %v3693 = vpop.f32.mrf.mxu0
      %v3694 = vadd.f32 %v3406, %v3693
      %v3695 = vpop.f32.mrf.mxu0
      %3696 = vmatprep.mubr.bf16.mxu0 0
      %3697 = vmatmul.mubr.bf16.gmra.mxu0 %v3379
      %v3698 = vpop.f32.mrf.mxu0
      %v3699 = vadd.f32 %v3406, %v3698
      %v3700 = vpop.f32.mrf.mxu0
      %v3701 = vpop.f32.mrf.mxu0
      %v3702 = vadd.f32 %v3406, %v3701
      %v3703 = vpop.f32.mrf.mxu0
      %3704 = vmatprep.mubr.bf16.mxu0 0
      %3705 = vmatmul.mubr.bf16.gmra.mxu0 %v3380
      %v3706 = vpop.f32.mrf.mxu0
      %v3707 = vadd.f32 %v3406, %v3706
      %v3708 = vpop.f32.mrf.mxu0
      %v3709 = vpop.f32.mrf.mxu0
      %v3710 = vadd.f32 %v3406, %v3709
      %v3711 = vpop.f32.mrf.mxu0
      %3712 = vmatprep.mubr.bf16.mxu0 0
      %3713 = vmatmul.mubr.bf16.gmra.mxu0 %v3381
      %v3714 = vpop.f32.mrf.mxu0
      %v3715 = vadd.f32 %v3406, %v3714
      %v3716 = vpop.f32.mrf.mxu0
      %v3717 = vpop.f32.mrf.mxu0
      %v3718 = vadd.f32 %v3406, %v3717
      %v3719 = vpop.f32.mrf.mxu0
      %3720 = vmatprep.mubr.bf16.mxu0 0
      %3721 = vmatmul.mubr.bf16.gmra.mxu0 %v3382
      %v3722 = vpop.f32.mrf.mxu0
      %v3723 = vadd.f32 %v3406, %v3722
      %v3724 = vpop.f32.mrf.mxu0
      %v3725 = vpop.f32.mrf.mxu0
      %v3726 = vadd.f32 %v3406, %v3725
      %v3727 = vpop.f32.mrf.mxu0
      %3728 = vmatprep.mubr.bf16.mxu0 0
      %3729 = vmatmul.mubr.bf16.gmra.mxu0 %v3383
      %v3730 = vpop.f32.mrf.mxu0
      %v3731 = vadd.f32 %v3406, %v3730
      %v3732 = vpop.f32.mrf.mxu0
      %v3733 = vpop.f32.mrf.mxu0
      %v3734 = vadd.f32 %v3406, %v3733
      %v3735 = vpop.f32.mrf.mxu0
      %3736 = vmatprep.mubr.bf16.mxu0 0
      %3737 = vmatmul.mubr.bf16.gmra.mxu0 %v3384
      %v3738 = vpop.f32.mrf.mxu0
      %v3739 = vadd.f32 %v3406, %v3738
      %v3740 = vpop.f32.mrf.mxu0
      %v3741 = vpop.f32.mrf.mxu0
      %v3742 = vadd.f32 %v3406, %v3741
      %v3743 = vpop.f32.mrf.mxu0
      %3744 = vdwg.mxu0
      %v3745 = vxor.u32 %v3491, 2147483648
      %v3746 = vxor.u32 %v3494, 2147483648
      %v3747 = vxor.u32 %v3499, 2147483648
      %v3748 = vxor.u32 %v3502, 2147483648
      %v3749 = vxor.u32 %v3507, 2147483648
      %v3750 = vxor.u32 %v3510, 2147483648
      %v3751 = vxor.u32 %v3515, 2147483648
      %v3752 = vxor.u32 %v3518, 2147483648
      %v3753 = vxor.u32 %v3523, 2147483648
      %v3754 = vxor.u32 %v3526, 2147483648
      %v3755 = vxor.u32 %v3531, 2147483648
      %v3756 = vxor.u32 %v3534, 2147483648
      %v3757 = vxor.u32 %v3539, 2147483648
      %v3758 = vxor.u32 %v3542, 2147483648
      %v3759 = vxor.u32 %v3547, 2147483648
      %v3760 = vxor.u32 %v3550, 2147483648
      %v3761 = vxor.u32 %v3555, 2147483648
      %v3762 = vxor.u32 %v3558, 2147483648
      %v3763 = vxor.u32 %v3563, 2147483648
      %v3764 = vxor.u32 %v3566, 2147483648
      %v3765 = vxor.u32 %v3571, 2147483648
      %v3766 = vxor.u32 %v3574, 2147483648
      %v3767 = vxor.u32 %v3579, 2147483648
      %v3768 = vxor.u32 %v3582, 2147483648
      %v3769 = vxor.u32 %v3587, 2147483648
      %v3770 = vxor.u32 %v3590, 2147483648
      %v3771 = vxor.u32 %v3595, 2147483648
      %v3772 = vxor.u32 %v3598, 2147483648
      %v3773 = vxor.u32 %v3603, 2147483648
      %v3774 = vxor.u32 %v3606, 2147483648
      %v3775 = vxor.u32 %v3611, 2147483648
      %v3776 = vxor.u32 %v3614, 2147483648
      %v3777 = vxor.u32 %v3619, 2147483648
      %v3778 = vxor.u32 %v3622, 2147483648
      %v3779 = vxor.u32 %v3627, 2147483648
      %v3780 = vxor.u32 %v3630, 2147483648
      %v3781 = vxor.u32 %v3635, 2147483648
      %v3782 = vxor.u32 %v3638, 2147483648
      %v3783 = vxor.u32 %v3643, 2147483648
      %v3784 = vxor.u32 %v3646, 2147483648
      %v3785 = vxor.u32 %v3651, 2147483648
      %v3786 = vxor.u32 %v3654, 2147483648
      %v3787 = vxor.u32 %v3659, 2147483648
      %v3788 = vxor.u32 %v3662, 2147483648
      %v3789 = vxor.u32 %v3667, 2147483648
      %v3790 = vxor.u32 %v3670, 2147483648
      %v3791 = vxor.u32 %v3675, 2147483648
      %v3792 = vxor.u32 %v3678, 2147483648
      %v3793 = vxor.u32 %v3683, 2147483648
      %v3794 = vxor.u32 %v3686, 2147483648
      %v3795 = vxor.u32 %v3691, 2147483648
      %v3796 = vxor.u32 %v3694, 2147483648
      %v3797 = vxor.u32 %v3699, 2147483648
      %v3798 = vxor.u32 %v3702, 2147483648
      %v3799 = vxor.u32 %v3707, 2147483648
      %v3800 = vxor.u32 %v3710, 2147483648
      %v3801 = vxor.u32 %v3715, 2147483648
      %v3802 = vxor.u32 %v3718, 2147483648
      %v3803 = vxor.u32 %v3723, 2147483648
      %v3804 = vxor.u32 %v3726, 2147483648
      %v3805 = vxor.u32 %v3731, 2147483648
      %v3806 = vxor.u32 %v3734, 2147483648
      %v3807 = vxor.u32 %v3739, 2147483648
      %v3808 = vxor.u32 %v3742, 2147483648
      %v3809 = vmul.f32 %v3745, 1.442695
      %v3810 = vpow.pop %v3809
      %v3811 = vmul.f32 %v3746, 1.442695
      %v3812 = vpow.pop %v3811
      %v3813 = vmul.f32 %v3747, 1.442695
      %v3814 = vpow.pop %v3813
      %v3815 = vmul.f32 %v3748, 1.442695
      %v3816 = vpow.pop %v3815
      %v3817 = vmul.f32 %v3749, 1.442695
      %v3818 = vpow.pop %v3817
      %v3819 = vmul.f32 %v3750, 1.442695
      %v3820 = vpow.pop %v3819
      %v3821 = vmul.f32 %v3751, 1.442695
      %v3822 = vpow.pop %v3821
      %v3823 = vmul.f32 %v3752, 1.442695
      %v3824 = vpow.pop %v3823
      %v3825 = vmul.f32 %v3753, 1.442695
      %v3826 = vpow.pop %v3825
      %v3827 = vmul.f32 %v3754, 1.442695
      %v3828 = vpow.pop %v3827
      %v3829 = vmul.f32 %v3755, 1.442695
      %v3830 = vpow.pop %v3829
      %v3831 = vmul.f32 %v3756, 1.442695
      %v3832 = vpow.pop %v3831
      %v3833 = vmul.f32 %v3757, 1.442695
      %v3834 = vpow.pop %v3833
      %v3835 = vmul.f32 %v3758, 1.442695
      %v3836 = vpow.pop %v3835
      %v3837 = vmul.f32 %v3759, 1.442695
      %v3838 = vpow.pop %v3837
      %v3839 = vmul.f32 %v3760, 1.442695
      %v3840 = vpow.pop %v3839
      %v3841 = vmul.f32 %v3761, 1.442695
      %v3842 = vpow.pop %v3841
      %v3843 = vmul.f32 %v3762, 1.442695
      %v3844 = vpow.pop %v3843
      %v3845 = vmul.f32 %v3763, 1.442695
      %v3846 = vpow.pop %v3845
      %v3847 = vmul.f32 %v3764, 1.442695
      %v3848 = vpow.pop %v3847
      %v3849 = vmul.f32 %v3765, 1.442695
      %v3850 = vpow.pop %v3849
      %v3851 = vmul.f32 %v3766, 1.442695
      %v3852 = vpow.pop %v3851
      %v3853 = vmul.f32 %v3767, 1.442695
      %v3854 = vpow.pop %v3853
      %v3855 = vmul.f32 %v3768, 1.442695
      %v3856 = vpow.pop %v3855
      %v3857 = vmul.f32 %v3769, 1.442695
      %v3858 = vpow.pop %v3857
      %v3859 = vmul.f32 %v3770, 1.442695
      %v3860 = vpow.pop %v3859
      %v3861 = vmul.f32 %v3771, 1.442695
      %v3862 = vpow.pop %v3861
      %v3863 = vmul.f32 %v3772, 1.442695
      %v3864 = vpow.pop %v3863
      %v3865 = vmul.f32 %v3773, 1.442695
      %v3866 = vpow.pop %v3865
      %v3867 = vmul.f32 %v3774, 1.442695
      %v3868 = vpow.pop %v3867
      %v3869 = vmul.f32 %v3775, 1.442695
      %v3870 = vpow.pop %v3869
      %v3871 = vmul.f32 %v3776, 1.442695
      %v3872 = vpow.pop %v3871
      %v3873 = vmul.f32 %v3777, 1.442695
      %v3874 = vpow.pop %v3873
      %v3875 = vmul.f32 %v3778, 1.442695
      %v3876 = vpow.pop %v3875
      %v3877 = vmul.f32 %v3779, 1.442695
      %v3878 = vpow.pop %v3877
      %v3879 = vmul.f32 %v3780, 1.442695
      %v3880 = vpow.pop %v3879
      %v3881 = vmul.f32 %v3781, 1.442695
      %v3882 = vpow.pop %v3881
      %v3883 = vmul.f32 %v3782, 1.442695
      %v3884 = vpow.pop %v3883
      %v3885 = vmul.f32 %v3783, 1.442695
      %v3886 = vpow.pop %v3885
      %v3887 = vmul.f32 %v3784, 1.442695
      %v3888 = vpow.pop %v3887
      %v3889 = vmul.f32 %v3785, 1.442695
      %v3890 = vpow.pop %v3889
      %v3891 = vmul.f32 %v3786, 1.442695
      %v3892 = vpow.pop %v3891
      %v3893 = vmul.f32 %v3787, 1.442695
      %v3894 = vpow.pop %v3893
      %v3895 = vmul.f32 %v3788, 1.442695
      %v3896 = vpow.pop %v3895
      %v3897 = vmul.f32 %v3789, 1.442695
      %v3898 = vpow.pop %v3897
      %v3899 = vmul.f32 %v3790, 1.442695
      %v3900 = vpow.pop %v3899
      %v3901 = vmul.f32 %v3791, 1.442695
      %v3902 = vpow.pop %v3901
      %v3903 = vmul.f32 %v3792, 1.442695
      %v3904 = vpow.pop %v3903
      %v3905 = vmul.f32 %v3793, 1.442695
      %v3906 = vpow.pop %v3905
      %v3907 = vmul.f32 %v3794, 1.442695
      %v3908 = vpow.pop %v3907
      %v3909 = vmul.f32 %v3795, 1.442695
      %v3910 = vpow.pop %v3909
      %v3911 = vmul.f32 %v3796, 1.442695
      %v3912 = vpow.pop %v3911
      %v3913 = vmul.f32 %v3797, 1.442695
      %v3914 = vpow.pop %v3913
      %v3915 = vmul.f32 %v3798, 1.442695
      %v3916 = vpow.pop %v3915
      %v3917 = vmul.f32 %v3799, 1.442695
      %v3918 = vpow.pop %v3917
      %v3919 = vmul.f32 %v3800, 1.442695
      %v3920 = vpow.pop %v3919
      %v3921 = vmul.f32 %v3801, 1.442695
      %v3922 = vpow.pop %v3921
      %v3923 = vmul.f32 %v3802, 1.442695
      %v3924 = vpow.pop %v3923
      %v3925 = vmul.f32 %v3803, 1.442695
      %v3926 = vpow.pop %v3925
      %v3927 = vmul.f32 %v3804, 1.442695
      %v3928 = vpow.pop %v3927
      %v3929 = vmul.f32 %v3805, 1.442695
      %v3930 = vpow.pop %v3929
      %v3931 = vmul.f32 %v3806, 1.442695
      %v3932 = vpow.pop %v3931
      %v3933 = vmul.f32 %v3807, 1.442695
      %v3934 = vpow.pop %v3933
      %v3935 = vmul.f32 %v3808, 1.442695
      %v3936 = vpow.pop %v3935
      %v3937 = vadd.f32 %v3810, 1.0
      %v3938 = vadd.f32 %v3812, 1.0
      %v3939 = vadd.f32 %v3814, 1.0
      %v3940 = vadd.f32 %v3816, 1.0
      %v3941 = vadd.f32 %v3818, 1.0
      %v3942 = vadd.f32 %v3820, 1.0
      %v3943 = vadd.f32 %v3822, 1.0
      %v3944 = vadd.f32 %v3824, 1.0
      %v3945 = vadd.f32 %v3826, 1.0
      %v3946 = vadd.f32 %v3828, 1.0
      %v3947 = vadd.f32 %v3830, 1.0
      %v3948 = vadd.f32 %v3832, 1.0
      %v3949 = vadd.f32 %v3834, 1.0
      %v3950 = vadd.f32 %v3836, 1.0
      %v3951 = vadd.f32 %v3838, 1.0
      %v3952 = vadd.f32 %v3840, 1.0
      %v3953 = vadd.f32 %v3842, 1.0
      %v3954 = vadd.f32 %v3844, 1.0
      %v3955 = vadd.f32 %v3846, 1.0
      %v3956 = vadd.f32 %v3848, 1.0
      %v3957 = vadd.f32 %v3850, 1.0
      %v3958 = vadd.f32 %v3852, 1.0
      %v3959 = vadd.f32 %v3854, 1.0
      %v3960 = vadd.f32 %v3856, 1.0
      %v3961 = vadd.f32 %v3858, 1.0
      %v3962 = vadd.f32 %v3860, 1.0
      %v3963 = vadd.f32 %v3862, 1.0
      %v3964 = vadd.f32 %v3864, 1.0
      %v3965 = vadd.f32 %v3866, 1.0
      %v3966 = vadd.f32 %v3868, 1.0
      %v3967 = vadd.f32 %v3870, 1.0
      %v3968 = vadd.f32 %v3872, 1.0
      %v3969 = vadd.f32 %v3874, 1.0
      %v3970 = vadd.f32 %v3876, 1.0
      %v3971 = vadd.f32 %v3878, 1.0
      %v3972 = vadd.f32 %v3880, 1.0
      %v3973 = vadd.f32 %v3882, 1.0
      %v3974 = vadd.f32 %v3884, 1.0
      %v3975 = vadd.f32 %v3886, 1.0
      %v3976 = vadd.f32 %v3888, 1.0
      %v3977 = vadd.f32 %v3890, 1.0
      %v3978 = vadd.f32 %v3892, 1.0
      %v3979 = vadd.f32 %v3894, 1.0
      %v3980 = vadd.f32 %v3896, 1.0
      %v3981 = vadd.f32 %v3898, 1.0
      %v3982 = vadd.f32 %v3900, 1.0
      %v3983 = vadd.f32 %v3902, 1.0
      %v3984 = vadd.f32 %v3904, 1.0
      %v3985 = vadd.f32 %v3906, 1.0
      %v3986 = vadd.f32 %v3908, 1.0
      %v3987 = vadd.f32 %v3910, 1.0
      %v3988 = vadd.f32 %v3912, 1.0
      %v3989 = vadd.f32 %v3914, 1.0
      %v3990 = vadd.f32 %v3916, 1.0
      %v3991 = vadd.f32 %v3918, 1.0
      %v3992 = vadd.f32 %v3920, 1.0
      %v3993 = vadd.f32 %v3922, 1.0
      %v3994 = vadd.f32 %v3924, 1.0
      %v3995 = vadd.f32 %v3926, 1.0
      %v3996 = vadd.f32 %v3928, 1.0
      %v3997 = vadd.f32 %v3930, 1.0
      %v3998 = vadd.f32 %v3932, 1.0
      %v3999 = vadd.f32 %v3934, 1.0
      %v4000 = vadd.f32 %v3936, 1.0
      %v4001 = vrcp.pop %v3937
      %v4002 = vmul.f32 1.0, %v4001
      %v4003 = vrcp.pop %v3938
      %v4004 = vmul.f32 1.0, %v4003
      %v4005 = vrcp.pop %v3939
      %v4006 = vmul.f32 1.0, %v4005
      %v4007 = vrcp.pop %v3940
      %v4008 = vmul.f32 1.0, %v4007
      %v4009 = vrcp.pop %v3941
      %v4010 = vmul.f32 1.0, %v4009
      %v4011 = vrcp.pop %v3942
      %v4012 = vmul.f32 1.0, %v4011
      %v4013 = vrcp.pop %v3943
      %v4014 = vmul.f32 1.0, %v4013
      %v4015 = vrcp.pop %v3944
      %v4016 = vmul.f32 1.0, %v4015
      %v4017 = vrcp.pop %v3945
      %v4018 = vmul.f32 1.0, %v4017
      %v4019 = vrcp.pop %v3946
      %v4020 = vmul.f32 1.0, %v4019
      %v4021 = vrcp.pop %v3947
      %v4022 = vmul.f32 1.0, %v4021
      %v4023 = vrcp.pop %v3948
      %v4024 = vmul.f32 1.0, %v4023
      %v4025 = vrcp.pop %v3949
      %v4026 = vmul.f32 1.0, %v4025
      %v4027 = vrcp.pop %v3950
      %v4028 = vmul.f32 1.0, %v4027
      %v4029 = vrcp.pop %v3951
      %v4030 = vmul.f32 1.0, %v4029
      %v4031 = vrcp.pop %v3952
      %v4032 = vmul.f32 1.0, %v4031
      %v4033 = vrcp.pop %v3953
      %v4034 = vmul.f32 1.0, %v4033
      %v4035 = vrcp.pop %v3954
      %v4036 = vmul.f32 1.0, %v4035
      %v4037 = vrcp.pop %v3955
      %v4038 = vmul.f32 1.0, %v4037
      %v4039 = vrcp.pop %v3956
      %v4040 = vmul.f32 1.0, %v4039
      %v4041 = vrcp.pop %v3957
      %v4042 = vmul.f32 1.0, %v4041
      %v4043 = vrcp.pop %v3958
      %v4044 = vmul.f32 1.0, %v4043
      %v4045 = vrcp.pop %v3959
      %v4046 = vmul.f32 1.0, %v4045
      %v4047 = vrcp.pop %v3960
      %v4048 = vmul.f32 1.0, %v4047
      %v4049 = vrcp.pop %v3961
      %v4050 = vmul.f32 1.0, %v4049
      %v4051 = vrcp.pop %v3962
      %v4052 = vmul.f32 1.0, %v4051
      %v4053 = vrcp.pop %v3963
      %v4054 = vmul.f32 1.0, %v4053
      %v4055 = vrcp.pop %v3964
      %v4056 = vmul.f32 1.0, %v4055
      %v4057 = vrcp.pop %v3965
      %v4058 = vmul.f32 1.0, %v4057
      %v4059 = vrcp.pop %v3966
      %v4060 = vmul.f32 1.0, %v4059
      %v4061 = vrcp.pop %v3967
      %v4062 = vmul.f32 1.0, %v4061
      %v4063 = vrcp.pop %v3968
      %v4064 = vmul.f32 1.0, %v4063
      %v4065 = vrcp.pop %v3969
      %v4066 = vmul.f32 1.0, %v4065
      %v4067 = vrcp.pop %v3970
      %v4068 = vmul.f32 1.0, %v4067
      %v4069 = vrcp.pop %v3971
      %v4070 = vmul.f32 1.0, %v4069
      %v4071 = vrcp.pop %v3972
      %v4072 = vmul.f32 1.0, %v4071
      %v4073 = vrcp.pop %v3973
      %v4074 = vmul.f32 1.0, %v4073
      %v4075 = vrcp.pop %v3974
      %v4076 = vmul.f32 1.0, %v4075
      %v4077 = vrcp.pop %v3975
      %v4078 = vmul.f32 1.0, %v4077
      %v4079 = vrcp.pop %v3976
      %v4080 = vmul.f32 1.0, %v4079
      %v4081 = vrcp.pop %v3977
      %v4082 = vmul.f32 1.0, %v4081
      %v4083 = vrcp.pop %v3978
      %v4084 = vmul.f32 1.0, %v4083
      %v4085 = vrcp.pop %v3979
      %v4086 = vmul.f32 1.0, %v4085
      %v4087 = vrcp.pop %v3980
      %v4088 = vmul.f32 1.0, %v4087
      %v4089 = vrcp.pop %v3981
      %v4090 = vmul.f32 1.0, %v4089
      %v4091 = vrcp.pop %v3982
      %v4092 = vmul.f32 1.0, %v4091
      %v4093 = vrcp.pop %v3983
      %v4094 = vmul.f32 1.0, %v4093
      %v4095 = vrcp.pop %v3984
      %v4096 = vmul.f32 1.0, %v4095
      %v4097 = vrcp.pop %v3985
      %v4098 = vmul.f32 1.0, %v4097
      %v4099 = vrcp.pop %v3986
      %v4100 = vmul.f32 1.0, %v4099
      %v4101 = vrcp.pop %v3987
      %v4102 = vmul.f32 1.0, %v4101
      %v4103 = vrcp.pop %v3988
      %v4104 = vmul.f32 1.0, %v4103
      %v4105 = vrcp.pop %v3989
      %v4106 = vmul.f32 1.0, %v4105
      %v4107 = vrcp.pop %v3990
      %v4108 = vmul.f32 1.0, %v4107
      %v4109 = vrcp.pop %v3991
      %v4110 = vmul.f32 1.0, %v4109
      %v4111 = vrcp.pop %v3992
      %v4112 = vmul.f32 1.0, %v4111
      %v4113 = vrcp.pop %v3993
      %v4114 = vmul.f32 1.0, %v4113
      %v4115 = vrcp.pop %v3994
      %v4116 = vmul.f32 1.0, %v4115
      %v4117 = vrcp.pop %v3995
      %v4118 = vmul.f32 1.0, %v4117
      %v4119 = vrcp.pop %v3996
      %v4120 = vmul.f32 1.0, %v4119
      %v4121 = vrcp.pop %v3997
      %v4122 = vmul.f32 1.0, %v4121
      %v4123 = vrcp.pop %v3998
      %v4124 = vmul.f32 1.0, %v4123
      %v4125 = vrcp.pop %v3999
      %v4126 = vmul.f32 1.0, %v4125
      %v4127 = vrcp.pop %v4000
      %v4128 = vmul.f32 1.0, %v4127
      %v4129 = vmul.f32 %v3491, %v4002
      %v4130 = vmul.f32 %v3494, %v4004
      %v4131 = vmul.f32 %v3499, %v4006
      %v4132 = vmul.f32 %v3502, %v4008
      %v4133 = vmul.f32 %v3507, %v4010
      %v4134 = vmul.f32 %v3510, %v4012
      %v4135 = vmul.f32 %v3515, %v4014
      %v4136 = vmul.f32 %v3518, %v4016
      %v4137 = vmul.f32 %v3523, %v4018
      %v4138 = vmul.f32 %v3526, %v4020
      %v4139 = vmul.f32 %v3531, %v4022
      %v4140 = vmul.f32 %v3534, %v4024
      %v4141 = vmul.f32 %v3539, %v4026
      %v4142 = vmul.f32 %v3542, %v4028
      %v4143 = vmul.f32 %v3547, %v4030
      %v4144 = vmul.f32 %v3550, %v4032
      %v4145 = vmul.f32 %v3555, %v4034
      %v4146 = vmul.f32 %v3558, %v4036
      %v4147 = vmul.f32 %v3563, %v4038
      %v4148 = vmul.f32 %v3566, %v4040
      %v4149 = vmul.f32 %v3571, %v4042
      %v4150 = vmul.f32 %v3574, %v4044
      %v4151 = vmul.f32 %v3579, %v4046
      %v4152 = vmul.f32 %v3582, %v4048
      %v4153 = vmul.f32 %v3587, %v4050
      %v4154 = vmul.f32 %v3590, %v4052
      %v4155 = vmul.f32 %v3595, %v4054
      %v4156 = vmul.f32 %v3598, %v4056
      %v4157 = vmul.f32 %v3603, %v4058
      %v4158 = vmul.f32 %v3606, %v4060
      %v4159 = vmul.f32 %v3611, %v4062
      %v4160 = vmul.f32 %v3614, %v4064
      %v4161 = vmul.f32 %v3619, %v4066
      %v4162 = vmul.f32 %v3622, %v4068
      %v4163 = vmul.f32 %v3627, %v4070
      %v4164 = vmul.f32 %v3630, %v4072
      %v4165 = vmul.f32 %v3635, %v4074
      %v4166 = vmul.f32 %v3638, %v4076
      %v4167 = vmul.f32 %v3643, %v4078
      %v4168 = vmul.f32 %v3646, %v4080
      %v4169 = vmul.f32 %v3651, %v4082
      %v4170 = vmul.f32 %v3654, %v4084
      %v4171 = vmul.f32 %v3659, %v4086
      %v4172 = vmul.f32 %v3662, %v4088
      %v4173 = vmul.f32 %v3667, %v4090
      %v4174 = vmul.f32 %v3670, %v4092
      %v4175 = vmul.f32 %v3675, %v4094
      %v4176 = vmul.f32 %v3678, %v4096
      %v4177 = vmul.f32 %v3683, %v4098
      %v4178 = vmul.f32 %v3686, %v4100
      %v4179 = vmul.f32 %v3691, %v4102
      %v4180 = vmul.f32 %v3694, %v4104
      %v4181 = vmul.f32 %v3699, %v4106
      %v4182 = vmul.f32 %v3702, %v4108
      %v4183 = vmul.f32 %v3707, %v4110
      %v4184 = vmul.f32 %v3710, %v4112
      %v4185 = vmul.f32 %v3715, %v4114
      %v4186 = vmul.f32 %v3718, %v4116
      %v4187 = vmul.f32 %v3723, %v4118
      %v4188 = vmul.f32 %v3726, %v4120
      %v4189 = vmul.f32 %v3731, %v4122
      %v4190 = vmul.f32 %v3734, %v4124
      %v4191 = vmul.f32 %v3739, %v4126
      %v4192 = vmul.f32 %v3742, %v4128
      %v4193 = vadd.f32 %v4129, %v2449
      %v4194 = vadd.f32 %v4130, %v2450
      %v4195 = vadd.f32 %v4131, %v2451
      %v4196 = vadd.f32 %v4132, %v2452
      %v4197 = vadd.f32 %v4133, %v2453
      %v4198 = vadd.f32 %v4134, %v2454
      %v4199 = vadd.f32 %v4135, %v2455
      %v4200 = vadd.f32 %v4136, %v2456
      %v4201 = vadd.f32 %v4137, %v2457
      %v4202 = vadd.f32 %v4138, %v2458
      %v4203 = vadd.f32 %v4139, %v2459
      %v4204 = vadd.f32 %v4140, %v2460
      %v4205 = vadd.f32 %v4141, %v2461
      %v4206 = vadd.f32 %v4142, %v2462
      %v4207 = vadd.f32 %v4143, %v2463
      %v4208 = vadd.f32 %v4144, %v2464
      %v4209 = vadd.f32 %v4145, %v2465
      %v4210 = vadd.f32 %v4146, %v2466
      %v4211 = vadd.f32 %v4147, %v2467
      %v4212 = vadd.f32 %v4148, %v2468
      %v4213 = vadd.f32 %v4149, %v2469
      %v4214 = vadd.f32 %v4150, %v2470
      %v4215 = vadd.f32 %v4151, %v2471
      %v4216 = vadd.f32 %v4152, %v2472
      %v4217 = vadd.f32 %v4153, %v2473
      %v4218 = vadd.f32 %v4154, %v2474
      %v4219 = vadd.f32 %v4155, %v2475
      %v4220 = vadd.f32 %v4156, %v2476
      %v4221 = vadd.f32 %v4157, %v2477
      %v4222 = vadd.f32 %v4158, %v2478
      %v4223 = vadd.f32 %v4159, %v2479
      %v4224 = vadd.f32 %v4160, %v2480
      %v4225 = vadd.f32 %v4161, %v2481
      %v4226 = vadd.f32 %v4162, %v2482
      %v4227 = vadd.f32 %v4163, %v2483
      %v4228 = vadd.f32 %v4164, %v2484
      %v4229 = vadd.f32 %v4165, %v2485
      %v4230 = vadd.f32 %v4166, %v2486
      %v4231 = vadd.f32 %v4167, %v2487
      %v4232 = vadd.f32 %v4168, %v2488
      %v4233 = vadd.f32 %v4169, %v2489
      %v4234 = vadd.f32 %v4170, %v2490
      %v4235 = vadd.f32 %v4171, %v2491
      %v4236 = vadd.f32 %v4172, %v2492
      %v4237 = vadd.f32 %v4173, %v2493
      %v4238 = vadd.f32 %v4174, %v2494
      %v4239 = vadd.f32 %v4175, %v2495
      %v4240 = vadd.f32 %v4176, %v2496
      %v4241 = vadd.f32 %v4177, %v2497
      %v4242 = vadd.f32 %v4178, %v2498
      %v4243 = vadd.f32 %v4179, %v2499
      %v4244 = vadd.f32 %v4180, %v2500
      %v4245 = vadd.f32 %v4181, %v2501
      %v4246 = vadd.f32 %v4182, %v2502
      %v4247 = vadd.f32 %v4183, %v2503
      %v4248 = vadd.f32 %v4184, %v2504
      %v4249 = vadd.f32 %v4185, %v2505
      %v4250 = vadd.f32 %v4186, %v2506
      %v4251 = vadd.f32 %v4187, %v2507
      %v4252 = vadd.f32 %v4188, %v2508
      %v4253 = vadd.f32 %v4189, %v2509
      %v4254 = vadd.f32 %v4190, %v2510
      %v4255 = vadd.f32 %v4191, %v2511
      %v4256 = vadd.f32 %v4192, %v2512
      %v4257 = vpack.c.bf16 %v4194, %v4193
      %v4258 = vpack.c.bf16 %v4196, %v4195
      %v4259 = vpack.c.bf16 %v4198, %v4197
      %v4260 = vpack.c.bf16 %v4200, %v4199
      %v4261 = vpack.c.bf16 %v4202, %v4201
      %v4262 = vpack.c.bf16 %v4204, %v4203
      %v4263 = vpack.c.bf16 %v4206, %v4205
      %v4264 = vpack.c.bf16 %v4208, %v4207
      %v4265 = vpack.c.bf16 %v4210, %v4209
      %v4266 = vpack.c.bf16 %v4212, %v4211
      %v4267 = vpack.c.bf16 %v4214, %v4213
      %v4268 = vpack.c.bf16 %v4216, %v4215
      %v4269 = vpack.c.bf16 %v4218, %v4217
      %v4270 = vpack.c.bf16 %v4220, %v4219
      %v4271 = vpack.c.bf16 %v4222, %v4221
      %v4272 = vpack.c.bf16 %v4224, %v4223
      %v4273 = vpack.c.bf16 %v4226, %v4225
      %v4274 = vpack.c.bf16 %v4228, %v4227
      %v4275 = vpack.c.bf16 %v4230, %v4229
      %v4276 = vpack.c.bf16 %v4232, %v4231
      %v4277 = vpack.c.bf16 %v4234, %v4233
      %v4278 = vpack.c.bf16 %v4236, %v4235
      %v4279 = vpack.c.bf16 %v4238, %v4237
      %v4280 = vpack.c.bf16 %v4240, %v4239
      %v4281 = vpack.c.bf16 %v4242, %v4241
      %v4282 = vpack.c.bf16 %v4244, %v4243
      %v4283 = vpack.c.bf16 %v4246, %v4245
      %v4284 = vpack.c.bf16 %v4248, %v4247
      %v4285 = vpack.c.bf16 %v4250, %v4249
      %v4286 = vpack.c.bf16 %v4252, %v4251
      %v4287 = vpack.c.bf16 %v4254, %v4253
      %v4288 = vpack.c.bf16 %v4256, %v4255
      %v4289 = vld [vmem:[%s9] sm:$0xf]
      %v4290 = vld [vmem:[%s9 + $0x4] sm:$0xf]
      %v4291 = vld [vmem:[%s9 + $0x8] sm:$0xf]
      %v4292 = vld [vmem:[%s9 + $0xc] sm:$0xf]
      %v4293 = vld [vmem:[%s9 + $0x10] sm:$0xf]
      %v4294 = vld [vmem:[%s9 + $0x14] sm:$0xf]
      %v4295 = vld [vmem:[%s9 + $0x18] sm:$0xf]
      %v4296 = vld [vmem:[%s9 + $0x1c] sm:$0xf]
      %v4297 = vld [vmem:[%s9 + $0x20] sm:$0xf]
      %v4298 = vld [vmem:[%s9 + $0x24] sm:$0xf]
      %v4299 = vld [vmem:[%s9 + $0x28] sm:$0xf]
      %v4300 = vld [vmem:[%s9 + $0x2c] sm:$0xf]
      %v4301 = vld [vmem:[%s9 + $0x30] sm:$0xf]
      %v4302 = vld [vmem:[%s9 + $0x34] sm:$0xf]
      %v4303 = vld [vmem:[%s9 + $0x38] sm:$0xf]
      %v4304 = vld [vmem:[%s9 + $0x3c] sm:$0xf]
      %v4305 = vld [vmem:[%s10] sm:$0x1]
      %v4307 = vlaneseq
      %v4308 = vshrl.u32 %v4307, 7
      %v4309 = vsub.s32 0, %v4308
      %v4310 = vrot.slane %v4305, %v4309
      %v4328 = vunpack.c.l.b16 %v4289
      %v4329 = vunpack.c.l.b16 %v4290
      %v4330 = vunpack.c.l.b16 %v4291
      %v4331 = vunpack.c.l.b16 %v4292
      %v4332 = vunpack.c.l.b16 %v4293
      %v4333 = vunpack.c.l.b16 %v4294
      %v4334 = vunpack.c.l.b16 %v4295
      %v4335 = vunpack.c.l.b16 %v4296
      %v4336 = vunpack.c.l.b16 %v4297
      %v4337 = vunpack.c.l.b16 %v4298
      %v4338 = vunpack.c.l.b16 %v4299
      %v4339 = vunpack.c.l.b16 %v4300
      %v4340 = vunpack.c.l.b16 %v4301
      %v4341 = vunpack.c.l.b16 %v4302
      %v4342 = vunpack.c.l.b16 %v4303
      %v4343 = vunpack.c.l.b16 %v4304
      %v4344 = vpack.c.b16 %v4329, %v4328
      %v4345 = vpack.c.b16 %v4331, %v4330
      %v4346 = vpack.c.b16 %v4333, %v4332
      %v4347 = vpack.c.b16 %v4335, %v4334
      %v4348 = vpack.c.b16 %v4337, %v4336
      %v4349 = vpack.c.b16 %v4339, %v4338
      %v4350 = vpack.c.b16 %v4341, %v4340
      %v4351 = vpack.c.b16 %v4343, %v4342
      %4360 = vmatprep.subr.bf16.mxu0 0
      %4361 = vmatpush1.bf16.msra.mxu0 %v4351
      %4362 = vmatprep.subr.bf16.mxu0 0
      %4363 = vmatpush1.bf16.msra.mxu0 %v4350
      %4364 = vmatprep.subr.bf16.mxu0 0
      %4365 = vmatpush1.bf16.msra.mxu0 %v4349
      %4366 = vmatprep.subr.bf16.mxu0 0
      %4367 = vmatpush1.bf16.msra.mxu0 %v4348
      %4368 = vmatprep.subr.bf16.mxu0 0
      %4369 = vmatpush1.bf16.msra.mxu0 %v4347
      %4370 = vmatprep.subr.bf16.mxu0 0
      %4371 = vmatpush1.bf16.msra.mxu0 %v4346
      %4372 = vmatprep.subr.bf16.mxu0 0
      %4373 = vmatpush1.bf16.msra.mxu0 %v4345
      %4374 = vmatprep.subr.bf16.mxu0 0
      %4375 = vmatpush1.bf16.msra.mxu0 %v4344
      %4376 = vmatprep.subr.bf16.mxu0 0
      %4377 = vmatpush2.bf16.msra.mxu0 0
      %4378 = vmatprep.subr.bf16.mxu0 0
      %4379 = vmatpush2.bf16.msra.mxu0 0
      %4380 = vmatprep.subr.bf16.mxu0 0
      %4381 = vmatpush2.bf16.msra.mxu0 0
      %4382 = vmatprep.subr.bf16.mxu0 0
      %4383 = vmatpush2.bf16.msra.mxu0 0
      %4384 = vmatprep.subr.bf16.mxu0 0
      %4385 = vmatpush2.bf16.msra.mxu0 0
      %4386 = vmatprep.subr.bf16.mxu0 0
      %4387 = vmatpush2.bf16.msra.mxu0 0
      %4388 = vmatprep.subr.bf16.mxu0 0
      %4389 = vmatpush2.bf16.msra.mxu0 0
      %4390 = vmatprep.subr.bf16.mxu0 0
      %4391 = vmatpush2.bf16.msra.mxu0 0
      %4392 = vmatprep.mubr.bf16.mxu0 0
      %4393 = vmatmul.mubr.bf16.gmra.mxu0 %v4257
      %v4394 = vpop.f32.mrf.mxu0
      %v4395 = vadd.f32 %v4310, %v4394
      %v4396 = vpop.f32.mrf.mxu0
      %v4397 = vpop.f32.mrf.mxu0
      %v4398 = vadd.f32 %v4310, %v4397
      %v4399 = vpop.f32.mrf.mxu0
      %4400 = vmatprep.mubr.bf16.mxu0 0
      %4401 = vmatmul.mubr.bf16.gmra.mxu0 %v4258
      %v4402 = vpop.f32.mrf.mxu0
      %v4403 = vadd.f32 %v4310, %v4402
      %v4404 = vpop.f32.mrf.mxu0
      %v4405 = vpop.f32.mrf.mxu0
      %v4406 = vadd.f32 %v4310, %v4405
      %v4407 = vpop.f32.mrf.mxu0
      %4408 = vmatprep.mubr.bf16.mxu0 0
      %4409 = vmatmul.mubr.bf16.gmra.mxu0 %v4259
      %v4410 = vpop.f32.mrf.mxu0
      %v4411 = vadd.f32 %v4310, %v4410
      %v4412 = vpop.f32.mrf.mxu0
      %v4413 = vpop.f32.mrf.mxu0
      %v4414 = vadd.f32 %v4310, %v4413
      %v4415 = vpop.f32.mrf.mxu0
      %4416 = vmatprep.mubr.bf16.mxu0 0
      %4417 = vmatmul.mubr.bf16.gmra.mxu0 %v4260
      %v4418 = vpop.f32.mrf.mxu0
      %v4419 = vadd.f32 %v4310, %v4418
      %v4420 = vpop.f32.mrf.mxu0
      %v4421 = vpop.f32.mrf.mxu0
      %v4422 = vadd.f32 %v4310, %v4421
      %v4423 = vpop.f32.mrf.mxu0
      %4424 = vmatprep.mubr.bf16.mxu0 0
      %4425 = vmatmul.mubr.bf16.gmra.mxu0 %v4261
      %v4426 = vpop.f32.mrf.mxu0
      %v4427 = vadd.f32 %v4310, %v4426
      %v4428 = vpop.f32.mrf.mxu0
      %v4429 = vpop.f32.mrf.mxu0
      %v4430 = vadd.f32 %v4310, %v4429
      %v4431 = vpop.f32.mrf.mxu0
      %4432 = vmatprep.mubr.bf16.mxu0 0
      %4433 = vmatmul.mubr.bf16.gmra.mxu0 %v4262
      %v4434 = vpop.f32.mrf.mxu0
      %v4435 = vadd.f32 %v4310, %v4434
      %v4436 = vpop.f32.mrf.mxu0
      %v4437 = vpop.f32.mrf.mxu0
      %v4438 = vadd.f32 %v4310, %v4437
      %v4439 = vpop.f32.mrf.mxu0
      %4440 = vmatprep.mubr.bf16.mxu0 0
      %4441 = vmatmul.mubr.bf16.gmra.mxu0 %v4263
      %v4442 = vpop.f32.mrf.mxu0
      %v4443 = vadd.f32 %v4310, %v4442
      %v4444 = vpop.f32.mrf.mxu0
      %v4445 = vpop.f32.mrf.mxu0
      %v4446 = vadd.f32 %v4310, %v4445
      %v4447 = vpop.f32.mrf.mxu0
      %4448 = vmatprep.mubr.bf16.mxu0 0
      %4449 = vmatmul.mubr.bf16.gmra.mxu0 %v4264
      %v4450 = vpop.f32.mrf.mxu0
      %v4451 = vadd.f32 %v4310, %v4450
      %v4452 = vpop.f32.mrf.mxu0
      %v4453 = vpop.f32.mrf.mxu0
      %v4454 = vadd.f32 %v4310, %v4453
      %v4455 = vpop.f32.mrf.mxu0
      %4456 = vmatprep.mubr.bf16.mxu0 0
      %4457 = vmatmul.mubr.bf16.gmra.mxu0 %v4265
      %v4458 = vpop.f32.mrf.mxu0
      %v4459 = vadd.f32 %v4310, %v4458
      %v4460 = vpop.f32.mrf.mxu0
      %v4461 = vpop.f32.mrf.mxu0
      %v4462 = vadd.f32 %v4310, %v4461
      %v4463 = vpop.f32.mrf.mxu0
      %4464 = vmatprep.mubr.bf16.mxu0 0
      %4465 = vmatmul.mubr.bf16.gmra.mxu0 %v4266
      %v4466 = vpop.f32.mrf.mxu0
      %v4467 = vadd.f32 %v4310, %v4466
      %v4468 = vpop.f32.mrf.mxu0
      %v4469 = vpop.f32.mrf.mxu0
      %v4470 = vadd.f32 %v4310, %v4469
      %v4471 = vpop.f32.mrf.mxu0
      %4472 = vmatprep.mubr.bf16.mxu0 0
      %4473 = vmatmul.mubr.bf16.gmra.mxu0 %v4267
      %v4474 = vpop.f32.mrf.mxu0
      %v4475 = vadd.f32 %v4310, %v4474
      %v4476 = vpop.f32.mrf.mxu0
      %v4477 = vpop.f32.mrf.mxu0
      %v4478 = vadd.f32 %v4310, %v4477
      %v4479 = vpop.f32.mrf.mxu0
      %4480 = vmatprep.mubr.bf16.mxu0 0
      %4481 = vmatmul.mubr.bf16.gmra.mxu0 %v4268
      %v4482 = vpop.f32.mrf.mxu0
      %v4483 = vadd.f32 %v4310, %v4482
      %v4484 = vpop.f32.mrf.mxu0
      %v4485 = vpop.f32.mrf.mxu0
      %v4486 = vadd.f32 %v4310, %v4485
      %v4487 = vpop.f32.mrf.mxu0
      %4488 = vmatprep.mubr.bf16.mxu0 0
      %4489 = vmatmul.mubr.bf16.gmra.mxu0 %v4269
      %v4490 = vpop.f32.mrf.mxu0
      %v4491 = vadd.f32 %v4310, %v4490
      %v4492 = vpop.f32.mrf.mxu0
      %v4493 = vpop.f32.mrf.mxu0
      %v4494 = vadd.f32 %v4310, %v4493
      %v4495 = vpop.f32.mrf.mxu0
      %4496 = vmatprep.mubr.bf16.mxu0 0
      %4497 = vmatmul.mubr.bf16.gmra.mxu0 %v4270
      %v4498 = vpop.f32.mrf.mxu0
      %v4499 = vadd.f32 %v4310, %v4498
      %v4500 = vpop.f32.mrf.mxu0
      %v4501 = vpop.f32.mrf.mxu0
      %v4502 = vadd.f32 %v4310, %v4501
      %v4503 = vpop.f32.mrf.mxu0
      %4504 = vmatprep.mubr.bf16.mxu0 0
      %4505 = vmatmul.mubr.bf16.gmra.mxu0 %v4271
      %v4506 = vpop.f32.mrf.mxu0
      %v4507 = vadd.f32 %v4310, %v4506
      %v4508 = vpop.f32.mrf.mxu0
      %v4509 = vpop.f32.mrf.mxu0
      %v4510 = vadd.f32 %v4310, %v4509
      %v4511 = vpop.f32.mrf.mxu0
      %4512 = vmatprep.mubr.bf16.mxu0 0
      %4513 = vmatmul.mubr.bf16.gmra.mxu0 %v4272
      %v4514 = vpop.f32.mrf.mxu0
      %v4515 = vadd.f32 %v4310, %v4514
      %v4516 = vpop.f32.mrf.mxu0
      %v4517 = vpop.f32.mrf.mxu0
      %v4518 = vadd.f32 %v4310, %v4517
      %v4519 = vpop.f32.mrf.mxu0
      %4520 = vmatprep.mubr.bf16.mxu0 0
      %4521 = vmatmul.mubr.bf16.gmra.mxu0 %v4273
      %v4522 = vpop.f32.mrf.mxu0
      %v4523 = vadd.f32 %v4310, %v4522
      %v4524 = vpop.f32.mrf.mxu0
      %v4525 = vpop.f32.mrf.mxu0
      %v4526 = vadd.f32 %v4310, %v4525
      %v4527 = vpop.f32.mrf.mxu0
      %4528 = vmatprep.mubr.bf16.mxu0 0
      %4529 = vmatmul.mubr.bf16.gmra.mxu0 %v4274
      %v4530 = vpop.f32.mrf.mxu0
      %v4531 = vadd.f32 %v4310, %v4530
      %v4532 = vpop.f32.mrf.mxu0
      %v4533 = vpop.f32.mrf.mxu0
      %v4534 = vadd.f32 %v4310, %v4533
      %v4535 = vpop.f32.mrf.mxu0
      %4536 = vmatprep.mubr.bf16.mxu0 0
      %4537 = vmatmul.mubr.bf16.gmra.mxu0 %v4275
      %v4538 = vpop.f32.mrf.mxu0
      %v4539 = vadd.f32 %v4310, %v4538
      %v4540 = vpop.f32.mrf.mxu0
      %v4541 = vpop.f32.mrf.mxu0
      %v4542 = vadd.f32 %v4310, %v4541
      %v4543 = vpop.f32.mrf.mxu0
      %4544 = vmatprep.mubr.bf16.mxu0 0
      %4545 = vmatmul.mubr.bf16.gmra.mxu0 %v4276
      %v4546 = vpop.f32.mrf.mxu0
      %v4547 = vadd.f32 %v4310, %v4546
      %v4548 = vpop.f32.mrf.mxu0
      %v4549 = vpop.f32.mrf.mxu0
      %v4550 = vadd.f32 %v4310, %v4549
      %v4551 = vpop.f32.mrf.mxu0
      %4552 = vmatprep.mubr.bf16.mxu0 0
      %4553 = vmatmul.mubr.bf16.gmra.mxu0 %v4277
      %v4554 = vpop.f32.mrf.mxu0
      %v4555 = vadd.f32 %v4310, %v4554
      %v4556 = vpop.f32.mrf.mxu0
      %v4557 = vpop.f32.mrf.mxu0
      %v4558 = vadd.f32 %v4310, %v4557
      %v4559 = vpop.f32.mrf.mxu0
      %4560 = vmatprep.mubr.bf16.mxu0 0
      %4561 = vmatmul.mubr.bf16.gmra.mxu0 %v4278
      %v4562 = vpop.f32.mrf.mxu0
      %v4563 = vadd.f32 %v4310, %v4562
      %v4564 = vpop.f32.mrf.mxu0
      %v4565 = vpop.f32.mrf.mxu0
      %v4566 = vadd.f32 %v4310, %v4565
      %v4567 = vpop.f32.mrf.mxu0
      %4568 = vmatprep.mubr.bf16.mxu0 0
      %4569 = vmatmul.mubr.bf16.gmra.mxu0 %v4279
      %v4570 = vpop.f32.mrf.mxu0
      %v4571 = vadd.f32 %v4310, %v4570
      %v4572 = vpop.f32.mrf.mxu0
      %v4573 = vpop.f32.mrf.mxu0
      %v4574 = vadd.f32 %v4310, %v4573
      %v4575 = vpop.f32.mrf.mxu0
      %4576 = vmatprep.mubr.bf16.mxu0 0
      %4577 = vmatmul.mubr.bf16.gmra.mxu0 %v4280
      %v4578 = vpop.f32.mrf.mxu0
      %v4579 = vadd.f32 %v4310, %v4578
      %v4580 = vpop.f32.mrf.mxu0
      %v4581 = vpop.f32.mrf.mxu0
      %v4582 = vadd.f32 %v4310, %v4581
      %v4583 = vpop.f32.mrf.mxu0
      %4584 = vmatprep.mubr.bf16.mxu0 0
      %4585 = vmatmul.mubr.bf16.gmra.mxu0 %v4281
      %v4586 = vpop.f32.mrf.mxu0
      %v4587 = vadd.f32 %v4310, %v4586
      %v4588 = vpop.f32.mrf.mxu0
      %v4589 = vpop.f32.mrf.mxu0
      %v4590 = vadd.f32 %v4310, %v4589
      %v4591 = vpop.f32.mrf.mxu0
      %4592 = vmatprep.mubr.bf16.mxu0 0
      %4593 = vmatmul.mubr.bf16.gmra.mxu0 %v4282
      %v4594 = vpop.f32.mrf.mxu0
      %v4595 = vadd.f32 %v4310, %v4594
      %v4596 = vpop.f32.mrf.mxu0
      %v4597 = vpop.f32.mrf.mxu0
      %v4598 = vadd.f32 %v4310, %v4597
      %v4599 = vpop.f32.mrf.mxu0
      %4600 = vmatprep.mubr.bf16.mxu0 0
      %4601 = vmatmul.mubr.bf16.gmra.mxu0 %v4283
      %v4602 = vpop.f32.mrf.mxu0
      %v4603 = vadd.f32 %v4310, %v4602
      %v4604 = vpop.f32.mrf.mxu0
      %v4605 = vpop.f32.mrf.mxu0
      %v4606 = vadd.f32 %v4310, %v4605
      %v4607 = vpop.f32.mrf.mxu0
      %4608 = vmatprep.mubr.bf16.mxu0 0
      %4609 = vmatmul.mubr.bf16.gmra.mxu0 %v4284
      %v4610 = vpop.f32.mrf.mxu0
      %v4611 = vadd.f32 %v4310, %v4610
      %v4612 = vpop.f32.mrf.mxu0
      %v4613 = vpop.f32.mrf.mxu0
      %v4614 = vadd.f32 %v4310, %v4613
      %v4615 = vpop.f32.mrf.mxu0
      %4616 = vmatprep.mubr.bf16.mxu0 0
      %4617 = vmatmul.mubr.bf16.gmra.mxu0 %v4285
      %v4618 = vpop.f32.mrf.mxu0
      %v4619 = vadd.f32 %v4310, %v4618
      %v4620 = vpop.f32.mrf.mxu0
      %v4621 = vpop.f32.mrf.mxu0
      %v4622 = vadd.f32 %v4310, %v4621
      %v4623 = vpop.f32.mrf.mxu0
      %4624 = vmatprep.mubr.bf16.mxu0 0
      %4625 = vmatmul.mubr.bf16.gmra.mxu0 %v4286
      %v4626 = vpop.f32.mrf.mxu0
      %v4627 = vadd.f32 %v4310, %v4626
      %v4628 = vpop.f32.mrf.mxu0
      %v4629 = vpop.f32.mrf.mxu0
      %v4630 = vadd.f32 %v4310, %v4629
      %v4631 = vpop.f32.mrf.mxu0
      %4632 = vmatprep.mubr.bf16.mxu0 0
      %4633 = vmatmul.mubr.bf16.gmra.mxu0 %v4287
      %v4634 = vpop.f32.mrf.mxu0
      %v4635 = vadd.f32 %v4310, %v4634
      %v4636 = vpop.f32.mrf.mxu0
      %v4637 = vpop.f32.mrf.mxu0
      %v4638 = vadd.f32 %v4310, %v4637
      %v4639 = vpop.f32.mrf.mxu0
      %4640 = vmatprep.mubr.bf16.mxu0 0
      %4641 = vmatmul.mubr.bf16.gmra.mxu0 %v4288
      %v4642 = vpop.f32.mrf.mxu0
      %v4643 = vadd.f32 %v4310, %v4642
      %v4644 = vpop.f32.mrf.mxu0
      %v4645 = vpop.f32.mrf.mxu0
      %v4646 = vadd.f32 %v4310, %v4645
      %v4647 = vpop.f32.mrf.mxu0
      %4648 = vdwg.mxu0
      %v4649 = vxor.u32 %v4395, 2147483648
      %v4650 = vxor.u32 %v4398, 2147483648
      %v4651 = vxor.u32 %v4403, 2147483648
      %v4652 = vxor.u32 %v4406, 2147483648
      %v4653 = vxor.u32 %v4411, 2147483648
      %v4654 = vxor.u32 %v4414, 2147483648
      %v4655 = vxor.u32 %v4419, 2147483648
      %v4656 = vxor.u32 %v4422, 2147483648
      %v4657 = vxor.u32 %v4427, 2147483648
      %v4658 = vxor.u32 %v4430, 2147483648
      %v4659 = vxor.u32 %v4435, 2147483648
      %v4660 = vxor.u32 %v4438, 2147483648
      %v4661 = vxor.u32 %v4443, 2147483648
      %v4662 = vxor.u32 %v4446, 2147483648
      %v4663 = vxor.u32 %v4451, 2147483648
      %v4664 = vxor.u32 %v4454, 2147483648
      %v4665 = vxor.u32 %v4459, 2147483648
      %v4666 = vxor.u32 %v4462, 2147483648
      %v4667 = vxor.u32 %v4467, 2147483648
      %v4668 = vxor.u32 %v4470, 2147483648
      %v4669 = vxor.u32 %v4475, 2147483648
      %v4670 = vxor.u32 %v4478, 2147483648
      %v4671 = vxor.u32 %v4483, 2147483648
      %v4672 = vxor.u32 %v4486, 2147483648
      %v4673 = vxor.u32 %v4491, 2147483648
      %v4674 = vxor.u32 %v4494, 2147483648
      %v4675 = vxor.u32 %v4499, 2147483648
      %v4676 = vxor.u32 %v4502, 2147483648
      %v4677 = vxor.u32 %v4507, 2147483648
      %v4678 = vxor.u32 %v4510, 2147483648
      %v4679 = vxor.u32 %v4515, 2147483648
      %v4680 = vxor.u32 %v4518, 2147483648
      %v4681 = vxor.u32 %v4523, 2147483648
      %v4682 = vxor.u32 %v4526, 2147483648
      %v4683 = vxor.u32 %v4531, 2147483648
      %v4684 = vxor.u32 %v4534, 2147483648
      %v4685 = vxor.u32 %v4539, 2147483648
      %v4686 = vxor.u32 %v4542, 2147483648
      %v4687 = vxor.u32 %v4547, 2147483648
      %v4688 = vxor.u32 %v4550, 2147483648
      %v4689 = vxor.u32 %v4555, 2147483648
      %v4690 = vxor.u32 %v4558, 2147483648
      %v4691 = vxor.u32 %v4563, 2147483648
      %v4692 = vxor.u32 %v4566, 2147483648
      %v4693 = vxor.u32 %v4571, 2147483648
      %v4694 = vxor.u32 %v4574, 2147483648
      %v4695 = vxor.u32 %v4579, 2147483648
      %v4696 = vxor.u32 %v4582, 2147483648
      %v4697 = vxor.u32 %v4587, 2147483648
      %v4698 = vxor.u32 %v4590, 2147483648
      %v4699 = vxor.u32 %v4595, 2147483648
      %v4700 = vxor.u32 %v4598, 2147483648
      %v4701 = vxor.u32 %v4603, 2147483648
      %v4702 = vxor.u32 %v4606, 2147483648
      %v4703 = vxor.u32 %v4611, 2147483648
      %v4704 = vxor.u32 %v4614, 2147483648
      %v4705 = vxor.u32 %v4619, 2147483648
      %v4706 = vxor.u32 %v4622, 2147483648
      %v4707 = vxor.u32 %v4627, 2147483648
      %v4708 = vxor.u32 %v4630, 2147483648
      %v4709 = vxor.u32 %v4635, 2147483648
      %v4710 = vxor.u32 %v4638, 2147483648
      %v4711 = vxor.u32 %v4643, 2147483648
      %v4712 = vxor.u32 %v4646, 2147483648
      %v4713 = vmul.f32 %v4649, 1.442695
      %v4714 = vpow.pop %v4713
      %v4715 = vmul.f32 %v4650, 1.442695
      %v4716 = vpow.pop %v4715
      %v4717 = vmul.f32 %v4651, 1.442695
      %v4718 = vpow.pop %v4717
      %v4719 = vmul.f32 %v4652, 1.442695
      %v4720 = vpow.pop %v4719
      %v4721 = vmul.f32 %v4653, 1.442695
      %v4722 = vpow.pop %v4721
      %v4723 = vmul.f32 %v4654, 1.442695
      %v4724 = vpow.pop %v4723
      %v4725 = vmul.f32 %v4655, 1.442695
      %v4726 = vpow.pop %v4725
      %v4727 = vmul.f32 %v4656, 1.442695
      %v4728 = vpow.pop %v4727
      %v4729 = vmul.f32 %v4657, 1.442695
      %v4730 = vpow.pop %v4729
      %v4731 = vmul.f32 %v4658, 1.442695
      %v4732 = vpow.pop %v4731
      %v4733 = vmul.f32 %v4659, 1.442695
      %v4734 = vpow.pop %v4733
      %v4735 = vmul.f32 %v4660, 1.442695
      %v4736 = vpow.pop %v4735
      %v4737 = vmul.f32 %v4661, 1.442695
      %v4738 = vpow.pop %v4737
      %v4739 = vmul.f32 %v4662, 1.442695
      %v4740 = vpow.pop %v4739
      %v4741 = vmul.f32 %v4663, 1.442695
      %v4742 = vpow.pop %v4741
      %v4743 = vmul.f32 %v4664, 1.442695
      %v4744 = vpow.pop %v4743
      %v4745 = vmul.f32 %v4665, 1.442695
      %v4746 = vpow.pop %v4745
      %v4747 = vmul.f32 %v4666, 1.442695
      %v4748 = vpow.pop %v4747
      %v4749 = vmul.f32 %v4667, 1.442695
      %v4750 = vpow.pop %v4749
      %v4751 = vmul.f32 %v4668, 1.442695
      %v4752 = vpow.pop %v4751
      %v4753 = vmul.f32 %v4669, 1.442695
      %v4754 = vpow.pop %v4753
      %v4755 = vmul.f32 %v4670, 1.442695
      %v4756 = vpow.pop %v4755
      %v4757 = vmul.f32 %v4671, 1.442695
      %v4758 = vpow.pop %v4757
      %v4759 = vmul.f32 %v4672, 1.442695
      %v4760 = vpow.pop %v4759
      %v4761 = vmul.f32 %v4673, 1.442695
      %v4762 = vpow.pop %v4761
      %v4763 = vmul.f32 %v4674, 1.442695
      %v4764 = vpow.pop %v4763
      %v4765 = vmul.f32 %v4675, 1.442695
      %v4766 = vpow.pop %v4765
      %v4767 = vmul.f32 %v4676, 1.442695
      %v4768 = vpow.pop %v4767
      %v4769 = vmul.f32 %v4677, 1.442695
      %v4770 = vpow.pop %v4769
      %v4771 = vmul.f32 %v4678, 1.442695
      %v4772 = vpow.pop %v4771
      %v4773 = vmul.f32 %v4679, 1.442695
      %v4774 = vpow.pop %v4773
      %v4775 = vmul.f32 %v4680, 1.442695
      %v4776 = vpow.pop %v4775
      %v4777 = vmul.f32 %v4681, 1.442695
      %v4778 = vpow.pop %v4777
      %v4779 = vmul.f32 %v4682, 1.442695
      %v4780 = vpow.pop %v4779
      %v4781 = vmul.f32 %v4683, 1.442695
      %v4782 = vpow.pop %v4781
      %v4783 = vmul.f32 %v4684, 1.442695
      %v4784 = vpow.pop %v4783
      %v4785 = vmul.f32 %v4685, 1.442695
      %v4786 = vpow.pop %v4785
      %v4787 = vmul.f32 %v4686, 1.442695
      %v4788 = vpow.pop %v4787
      %v4789 = vmul.f32 %v4687, 1.442695
      %v4790 = vpow.pop %v4789
      %v4791 = vmul.f32 %v4688, 1.442695
      %v4792 = vpow.pop %v4791
      %v4793 = vmul.f32 %v4689, 1.442695
      %v4794 = vpow.pop %v4793
      %v4795 = vmul.f32 %v4690, 1.442695
      %v4796 = vpow.pop %v4795
      %v4797 = vmul.f32 %v4691, 1.442695
      %v4798 = vpow.pop %v4797
      %v4799 = vmul.f32 %v4692, 1.442695
      %v4800 = vpow.pop %v4799
      %v4801 = vmul.f32 %v4693, 1.442695
      %v4802 = vpow.pop %v4801
      %v4803 = vmul.f32 %v4694, 1.442695
      %v4804 = vpow.pop %v4803
      %v4805 = vmul.f32 %v4695, 1.442695
      %v4806 = vpow.pop %v4805
      %v4807 = vmul.f32 %v4696, 1.442695
      %v4808 = vpow.pop %v4807
      %v4809 = vmul.f32 %v4697, 1.442695
      %v4810 = vpow.pop %v4809
      %v4811 = vmul.f32 %v4698, 1.442695
      %v4812 = vpow.pop %v4811
      %v4813 = vmul.f32 %v4699, 1.442695
      %v4814 = vpow.pop %v4813
      %v4815 = vmul.f32 %v4700, 1.442695
      %v4816 = vpow.pop %v4815
      %v4817 = vmul.f32 %v4701, 1.442695
      %v4818 = vpow.pop %v4817
      %v4819 = vmul.f32 %v4702, 1.442695
      %v4820 = vpow.pop %v4819
      %v4821 = vmul.f32 %v4703, 1.442695
      %v4822 = vpow.pop %v4821
      %v4823 = vmul.f32 %v4704, 1.442695
      %v4824 = vpow.pop %v4823
      %v4825 = vmul.f32 %v4705, 1.442695
      %v4826 = vpow.pop %v4825
      %v4827 = vmul.f32 %v4706, 1.442695
      %v4828 = vpow.pop %v4827
      %v4829 = vmul.f32 %v4707, 1.442695
      %v4830 = vpow.pop %v4829
      %v4831 = vmul.f32 %v4708, 1.442695
      %v4832 = vpow.pop %v4831
      %v4833 = vmul.f32 %v4709, 1.442695
      %v4834 = vpow.pop %v4833
      %v4835 = vmul.f32 %v4710, 1.442695
      %v4836 = vpow.pop %v4835
      %v4837 = vmul.f32 %v4711, 1.442695
      %v4838 = vpow.pop %v4837
      %v4839 = vmul.f32 %v4712, 1.442695
      %v4840 = vpow.pop %v4839
      %v4841 = vadd.f32 %v4714, 1.0
      %v4842 = vadd.f32 %v4716, 1.0
      %v4843 = vadd.f32 %v4718, 1.0
      %v4844 = vadd.f32 %v4720, 1.0
      %v4845 = vadd.f32 %v4722, 1.0
      %v4846 = vadd.f32 %v4724, 1.0
      %v4847 = vadd.f32 %v4726, 1.0
      %v4848 = vadd.f32 %v4728, 1.0
      %v4849 = vadd.f32 %v4730, 1.0
      %v4850 = vadd.f32 %v4732, 1.0
      %v4851 = vadd.f32 %v4734, 1.0
      %v4852 = vadd.f32 %v4736, 1.0
      %v4853 = vadd.f32 %v4738, 1.0
      %v4854 = vadd.f32 %v4740, 1.0
      %v4855 = vadd.f32 %v4742, 1.0
      %v4856 = vadd.f32 %v4744, 1.0
      %v4857 = vadd.f32 %v4746, 1.0
      %v4858 = vadd.f32 %v4748, 1.0
      %v4859 = vadd.f32 %v4750, 1.0
      %v4860 = vadd.f32 %v4752, 1.0
      %v4861 = vadd.f32 %v4754, 1.0
      %v4862 = vadd.f32 %v4756, 1.0
      %v4863 = vadd.f32 %v4758, 1.0
      %v4864 = vadd.f32 %v4760, 1.0
      %v4865 = vadd.f32 %v4762, 1.0
      %v4866 = vadd.f32 %v4764, 1.0
      %v4867 = vadd.f32 %v4766, 1.0
      %v4868 = vadd.f32 %v4768, 1.0
      %v4869 = vadd.f32 %v4770, 1.0
      %v4870 = vadd.f32 %v4772, 1.0
      %v4871 = vadd.f32 %v4774, 1.0
      %v4872 = vadd.f32 %v4776, 1.0
      %v4873 = vadd.f32 %v4778, 1.0
      %v4874 = vadd.f32 %v4780, 1.0
      %v4875 = vadd.f32 %v4782, 1.0
      %v4876 = vadd.f32 %v4784, 1.0
      %v4877 = vadd.f32 %v4786, 1.0
      %v4878 = vadd.f32 %v4788, 1.0
      %v4879 = vadd.f32 %v4790, 1.0
      %v4880 = vadd.f32 %v4792, 1.0
      %v4881 = vadd.f32 %v4794, 1.0
      %v4882 = vadd.f32 %v4796, 1.0
      %v4883 = vadd.f32 %v4798, 1.0
      %v4884 = vadd.f32 %v4800, 1.0
      %v4885 = vadd.f32 %v4802, 1.0
      %v4886 = vadd.f32 %v4804, 1.0
      %v4887 = vadd.f32 %v4806, 1.0
      %v4888 = vadd.f32 %v4808, 1.0
      %v4889 = vadd.f32 %v4810, 1.0
      %v4890 = vadd.f32 %v4812, 1.0
      %v4891 = vadd.f32 %v4814, 1.0
      %v4892 = vadd.f32 %v4816, 1.0
      %v4893 = vadd.f32 %v4818, 1.0
      %v4894 = vadd.f32 %v4820, 1.0
      %v4895 = vadd.f32 %v4822, 1.0
      %v4896 = vadd.f32 %v4824, 1.0
      %v4897 = vadd.f32 %v4826, 1.0
      %v4898 = vadd.f32 %v4828, 1.0
      %v4899 = vadd.f32 %v4830, 1.0
      %v4900 = vadd.f32 %v4832, 1.0
      %v4901 = vadd.f32 %v4834, 1.0
      %v4902 = vadd.f32 %v4836, 1.0
      %v4903 = vadd.f32 %v4838, 1.0
      %v4904 = vadd.f32 %v4840, 1.0
      %v4905 = vrcp.pop %v4841
      %v4906 = vmul.f32 1.0, %v4905
      %v4907 = vrcp.pop %v4842
      %v4908 = vmul.f32 1.0, %v4907
      %v4909 = vrcp.pop %v4843
      %v4910 = vmul.f32 1.0, %v4909
      %v4911 = vrcp.pop %v4844
      %v4912 = vmul.f32 1.0, %v4911
      %v4913 = vrcp.pop %v4845
      %v4914 = vmul.f32 1.0, %v4913
      %v4915 = vrcp.pop %v4846
      %v4916 = vmul.f32 1.0, %v4915
      %v4917 = vrcp.pop %v4847
      %v4918 = vmul.f32 1.0, %v4917
      %v4919 = vrcp.pop %v4848
      %v4920 = vmul.f32 1.0, %v4919
      %v4921 = vrcp.pop %v4849
      %v4922 = vmul.f32 1.0, %v4921
      %v4923 = vrcp.pop %v4850
      %v4924 = vmul.f32 1.0, %v4923
      %v4925 = vrcp.pop %v4851
      %v4926 = vmul.f32 1.0, %v4925
      %v4927 = vrcp.pop %v4852
      %v4928 = vmul.f32 1.0, %v4927
      %v4929 = vrcp.pop %v4853
      %v4930 = vmul.f32 1.0, %v4929
      %v4931 = vrcp.pop %v4854
      %v4932 = vmul.f32 1.0, %v4931
      %v4933 = vrcp.pop %v4855
      %v4934 = vmul.f32 1.0, %v4933
      %v4935 = vrcp.pop %v4856
      %v4936 = vmul.f32 1.0, %v4935
      %v4937 = vrcp.pop %v4857
      %v4938 = vmul.f32 1.0, %v4937
      %v4939 = vrcp.pop %v4858
      %v4940 = vmul.f32 1.0, %v4939
      %v4941 = vrcp.pop %v4859
      %v4942 = vmul.f32 1.0, %v4941
      %v4943 = vrcp.pop %v4860
      %v4944 = vmul.f32 1.0, %v4943
      %v4945 = vrcp.pop %v4861
      %v4946 = vmul.f32 1.0, %v4945
      %v4947 = vrcp.pop %v4862
      %v4948 = vmul.f32 1.0, %v4947
      %v4949 = vrcp.pop %v4863
      %v4950 = vmul.f32 1.0, %v4949
      %v4951 = vrcp.pop %v4864
      %v4952 = vmul.f32 1.0, %v4951
      %v4953 = vrcp.pop %v4865
      %v4954 = vmul.f32 1.0, %v4953
      %v4955 = vrcp.pop %v4866
      %v4956 = vmul.f32 1.0, %v4955
      %v4957 = vrcp.pop %v4867
      %v4958 = vmul.f32 1.0, %v4957
      %v4959 = vrcp.pop %v4868
      %v4960 = vmul.f32 1.0, %v4959
      %v4961 = vrcp.pop %v4869
      %v4962 = vmul.f32 1.0, %v4961
      %v4963 = vrcp.pop %v4870
      %v4964 = vmul.f32 1.0, %v4963
      %v4965 = vrcp.pop %v4871
      %v4966 = vmul.f32 1.0, %v4965
      %v4967 = vrcp.pop %v4872
      %v4968 = vmul.f32 1.0, %v4967
      %v4969 = vrcp.pop %v4873
      %v4970 = vmul.f32 1.0, %v4969
      %v4971 = vrcp.pop %v4874
      %v4972 = vmul.f32 1.0, %v4971
      %v4973 = vrcp.pop %v4875
      %v4974 = vmul.f32 1.0, %v4973
      %v4975 = vrcp.pop %v4876
      %v4976 = vmul.f32 1.0, %v4975
      %v4977 = vrcp.pop %v4877
      %v4978 = vmul.f32 1.0, %v4977
      %v4979 = vrcp.pop %v4878
      %v4980 = vmul.f32 1.0, %v4979
      %v4981 = vrcp.pop %v4879
      %v4982 = vmul.f32 1.0, %v4981
      %v4983 = vrcp.pop %v4880
      %v4984 = vmul.f32 1.0, %v4983
      %v4985 = vrcp.pop %v4881
      %v4986 = vmul.f32 1.0, %v4985
      %v4987 = vrcp.pop %v4882
      %v4988 = vmul.f32 1.0, %v4987
      %v4989 = vrcp.pop %v4883
      %v4990 = vmul.f32 1.0, %v4989
      %v4991 = vrcp.pop %v4884
      %v4992 = vmul.f32 1.0, %v4991
      %v4993 = vrcp.pop %v4885
      %v4994 = vmul.f32 1.0, %v4993
      %v4995 = vrcp.pop %v4886
      %v4996 = vmul.f32 1.0, %v4995
      %v4997 = vrcp.pop %v4887
      %v4998 = vmul.f32 1.0, %v4997
      %v4999 = vrcp.pop %v4888
      %v5000 = vmul.f32 1.0, %v4999
      %v5001 = vrcp.pop %v4889
      %v5002 = vmul.f32 1.0, %v5001
      %v5003 = vrcp.pop %v4890
      %v5004 = vmul.f32 1.0, %v5003
      %v5005 = vrcp.pop %v4891
      %v5006 = vmul.f32 1.0, %v5005
      %v5007 = vrcp.pop %v4892
      %v5008 = vmul.f32 1.0, %v5007
      %v5009 = vrcp.pop %v4893
      %v5010 = vmul.f32 1.0, %v5009
      %v5011 = vrcp.pop %v4894
      %v5012 = vmul.f32 1.0, %v5011
      %v5013 = vrcp.pop %v4895
      %v5014 = vmul.f32 1.0, %v5013
      %v5015 = vrcp.pop %v4896
      %v5016 = vmul.f32 1.0, %v5015
      %v5017 = vrcp.pop %v4897
      %v5018 = vmul.f32 1.0, %v5017
      %v5019 = vrcp.pop %v4898
      %v5020 = vmul.f32 1.0, %v5019
      %v5021 = vrcp.pop %v4899
      %v5022 = vmul.f32 1.0, %v5021
      %v5023 = vrcp.pop %v4900
      %v5024 = vmul.f32 1.0, %v5023
      %v5025 = vrcp.pop %v4901
      %v5026 = vmul.f32 1.0, %v5025
      %v5027 = vrcp.pop %v4902
      %v5028 = vmul.f32 1.0, %v5027
      %v5029 = vrcp.pop %v4903
      %v5030 = vmul.f32 1.0, %v5029
      %v5031 = vrcp.pop %v4904
      %v5032 = vmul.f32 1.0, %v5031
      %v5033 = vmul.f32 %v4395, %v4906
      %v5034 = vmul.f32 %v4398, %v4908
      %v5035 = vmul.f32 %v4403, %v4910
      %v5036 = vmul.f32 %v4406, %v4912
      %v5037 = vmul.f32 %v4411, %v4914
      %v5038 = vmul.f32 %v4414, %v4916
      %v5039 = vmul.f32 %v4419, %v4918
      %v5040 = vmul.f32 %v4422, %v4920
      %v5041 = vmul.f32 %v4427, %v4922
      %v5042 = vmul.f32 %v4430, %v4924
      %v5043 = vmul.f32 %v4435, %v4926
      %v5044 = vmul.f32 %v4438, %v4928
      %v5045 = vmul.f32 %v4443, %v4930
      %v5046 = vmul.f32 %v4446, %v4932
      %v5047 = vmul.f32 %v4451, %v4934
      %v5048 = vmul.f32 %v4454, %v4936
      %v5049 = vmul.f32 %v4459, %v4938
      %v5050 = vmul.f32 %v4462, %v4940
      %v5051 = vmul.f32 %v4467, %v4942
      %v5052 = vmul.f32 %v4470, %v4944
      %v5053 = vmul.f32 %v4475, %v4946
      %v5054 = vmul.f32 %v4478, %v4948
      %v5055 = vmul.f32 %v4483, %v4950
      %v5056 = vmul.f32 %v4486, %v4952
      %v5057 = vmul.f32 %v4491, %v4954
      %v5058 = vmul.f32 %v4494, %v4956
      %v5059 = vmul.f32 %v4499, %v4958
      %v5060 = vmul.f32 %v4502, %v4960
      %v5061 = vmul.f32 %v4507, %v4962
      %v5062 = vmul.f32 %v4510, %v4964
      %v5063 = vmul.f32 %v4515, %v4966
      %v5064 = vmul.f32 %v4518, %v4968
      %v5065 = vmul.f32 %v4523, %v4970
      %v5066 = vmul.f32 %v4526, %v4972
      %v5067 = vmul.f32 %v4531, %v4974
      %v5068 = vmul.f32 %v4534, %v4976
      %v5069 = vmul.f32 %v4539, %v4978
      %v5070 = vmul.f32 %v4542, %v4980
      %v5071 = vmul.f32 %v4547, %v4982
      %v5072 = vmul.f32 %v4550, %v4984
      %v5073 = vmul.f32 %v4555, %v4986
      %v5074 = vmul.f32 %v4558, %v4988
      %v5075 = vmul.f32 %v4563, %v4990
      %v5076 = vmul.f32 %v4566, %v4992
      %v5077 = vmul.f32 %v4571, %v4994
      %v5078 = vmul.f32 %v4574, %v4996
      %v5079 = vmul.f32 %v4579, %v4998
      %v5080 = vmul.f32 %v4582, %v5000
      %v5081 = vmul.f32 %v4587, %v5002
      %v5082 = vmul.f32 %v4590, %v5004
      %v5083 = vmul.f32 %v4595, %v5006
      %v5084 = vmul.f32 %v4598, %v5008
      %v5085 = vmul.f32 %v4603, %v5010
      %v5086 = vmul.f32 %v4606, %v5012
      %v5087 = vmul.f32 %v4611, %v5014
      %v5088 = vmul.f32 %v4614, %v5016
      %v5089 = vmul.f32 %v4619, %v5018
      %v5090 = vmul.f32 %v4622, %v5020
      %v5091 = vmul.f32 %v4627, %v5022
      %v5092 = vmul.f32 %v4630, %v5024
      %v5093 = vmul.f32 %v4635, %v5026
      %v5094 = vmul.f32 %v4638, %v5028
      %v5095 = vmul.f32 %v4643, %v5030
      %v5096 = vmul.f32 %v4646, %v5032
      %v5097 = vpack.c.bf16 %v5034, %v5033
      %v5098 = vpack.c.bf16 %v5036, %v5035
      %v5099 = vpack.c.bf16 %v5038, %v5037
      %v5100 = vpack.c.bf16 %v5040, %v5039
      %v5101 = vpack.c.bf16 %v5042, %v5041
      %v5102 = vpack.c.bf16 %v5044, %v5043
      %v5103 = vpack.c.bf16 %v5046, %v5045
      %v5104 = vpack.c.bf16 %v5048, %v5047
      %v5105 = vpack.c.bf16 %v5050, %v5049
      %v5106 = vpack.c.bf16 %v5052, %v5051
      %v5107 = vpack.c.bf16 %v5054, %v5053
      %v5108 = vpack.c.bf16 %v5056, %v5055
      %v5109 = vpack.c.bf16 %v5058, %v5057
      %v5110 = vpack.c.bf16 %v5060, %v5059
      %v5111 = vpack.c.bf16 %v5062, %v5061
      %v5112 = vpack.c.bf16 %v5064, %v5063
      %v5113 = vpack.c.bf16 %v5066, %v5065
      %v5114 = vpack.c.bf16 %v5068, %v5067
      %v5115 = vpack.c.bf16 %v5070, %v5069
      %v5116 = vpack.c.bf16 %v5072, %v5071
      %v5117 = vpack.c.bf16 %v5074, %v5073
      %v5118 = vpack.c.bf16 %v5076, %v5075
      %v5119 = vpack.c.bf16 %v5078, %v5077
      %v5120 = vpack.c.bf16 %v5080, %v5079
      %v5121 = vpack.c.bf16 %v5082, %v5081
      %v5122 = vpack.c.bf16 %v5084, %v5083
      %v5123 = vpack.c.bf16 %v5086, %v5085
      %v5124 = vpack.c.bf16 %v5088, %v5087
      %v5125 = vpack.c.bf16 %v5090, %v5089
      %v5126 = vpack.c.bf16 %v5092, %v5091
      %v5127 = vpack.c.bf16 %v5094, %v5093
      %v5128 = vpack.c.bf16 %v5096, %v5095
      %v5129 = vld [vmem:[%s11] sm:$0xf]
      %v5130 = vld [vmem:[%s11 + $0x4] sm:$0xf]
      %v5131 = vld [vmem:[%s11 + $0x8] sm:$0xf]
      %v5132 = vld [vmem:[%s11 + $0xc] sm:$0xf]
      %v5133 = vld [vmem:[%s11 + $0x10] sm:$0xf]
      %v5134 = vld [vmem:[%s11 + $0x14] sm:$0xf]
      %v5135 = vld [vmem:[%s11 + $0x18] sm:$0xf]
      %v5136 = vld [vmem:[%s11 + $0x1c] sm:$0xf]
      %v5137 = vld [vmem:[%s11 + $0x20] sm:$0xf]
      %v5138 = vld [vmem:[%s11 + $0x24] sm:$0xf]
      %v5139 = vld [vmem:[%s11 + $0x28] sm:$0xf]
      %v5140 = vld [vmem:[%s11 + $0x2c] sm:$0xf]
      %v5141 = vld [vmem:[%s11 + $0x30] sm:$0xf]
      %v5142 = vld [vmem:[%s11 + $0x34] sm:$0xf]
      %v5143 = vld [vmem:[%s11 + $0x38] sm:$0xf]
      %v5144 = vld [vmem:[%s11 + $0x3c] sm:$0xf]
      %v5145 = vld [vmem:[%s12] sm:$0x1]
      %v5147 = vlaneseq
      %v5148 = vshrl.u32 %v5147, 7
      %v5149 = vsub.s32 0, %v5148
      %v5150 = vrot.slane %v5145, %v5149
      %v5168 = vunpack.c.l.b16 %v5129
      %v5169 = vunpack.c.l.b16 %v5130
      %v5170 = vunpack.c.l.b16 %v5131
      %v5171 = vunpack.c.l.b16 %v5132
      %v5172 = vunpack.c.l.b16 %v5133
      %v5173 = vunpack.c.l.b16 %v5134
      %v5174 = vunpack.c.l.b16 %v5135
      %v5175 = vunpack.c.l.b16 %v5136
      %v5176 = vunpack.c.l.b16 %v5137
      %v5177 = vunpack.c.l.b16 %v5138
      %v5178 = vunpack.c.l.b16 %v5139
      %v5179 = vunpack.c.l.b16 %v5140
      %v5180 = vunpack.c.l.b16 %v5141
      %v5181 = vunpack.c.l.b16 %v5142
      %v5182 = vunpack.c.l.b16 %v5143
      %v5183 = vunpack.c.l.b16 %v5144
      %v5184 = vpack.c.b16 %v5169, %v5168
      %v5185 = vpack.c.b16 %v5171, %v5170
      %v5186 = vpack.c.b16 %v5173, %v5172
      %v5187 = vpack.c.b16 %v5175, %v5174
      %v5188 = vpack.c.b16 %v5177, %v5176
      %v5189 = vpack.c.b16 %v5179, %v5178
      %v5190 = vpack.c.b16 %v5181, %v5180
      %v5191 = vpack.c.b16 %v5183, %v5182
      %5200 = vmatprep.subr.bf16.mxu0 0
      %5201 = vmatpush1.bf16.msra.mxu0 %v5191
      %5202 = vmatprep.subr.bf16.mxu0 0
      %5203 = vmatpush1.bf16.msra.mxu0 %v5190
      %5204 = vmatprep.subr.bf16.mxu0 0
      %5205 = vmatpush1.bf16.msra.mxu0 %v5189
      %5206 = vmatprep.subr.bf16.mxu0 0
      %5207 = vmatpush1.bf16.msra.mxu0 %v5188
      %5208 = vmatprep.subr.bf16.mxu0 0
      %5209 = vmatpush1.bf16.msra.mxu0 %v5187
      %5210 = vmatprep.subr.bf16.mxu0 0
      %5211 = vmatpush1.bf16.msra.mxu0 %v5186
      %5212 = vmatprep.subr.bf16.mxu0 0
      %5213 = vmatpush1.bf16.msra.mxu0 %v5185
      %5214 = vmatprep.subr.bf16.mxu0 0
      %5215 = vmatpush1.bf16.msra.mxu0 %v5184
      %5216 = vmatprep.subr.bf16.mxu0 0
      %5217 = vmatpush2.bf16.msra.mxu0 0
      %5218 = vmatprep.subr.bf16.mxu0 0
      %5219 = vmatpush2.bf16.msra.mxu0 0
      %5220 = vmatprep.subr.bf16.mxu0 0
      %5221 = vmatpush2.bf16.msra.mxu0 0
      %5222 = vmatprep.subr.bf16.mxu0 0
      %5223 = vmatpush2.bf16.msra.mxu0 0
      %5224 = vmatprep.subr.bf16.mxu0 0
      %5225 = vmatpush2.bf16.msra.mxu0 0
      %5226 = vmatprep.subr.bf16.mxu0 0
      %5227 = vmatpush2.bf16.msra.mxu0 0
      %5228 = vmatprep.subr.bf16.mxu0 0
      %5229 = vmatpush2.bf16.msra.mxu0 0
      %5230 = vmatprep.subr.bf16.mxu0 0
      %5231 = vmatpush2.bf16.msra.mxu0 0
      %5232 = vmatprep.mubr.bf16.mxu0 0
      %5233 = vmatmul.mubr.bf16.gmra.mxu0 %v5097
      %v5234 = vpop.f32.mrf.mxu0
      %v5235 = vadd.f32 %v5150, %v5234
      %v5236 = vpop.f32.mrf.mxu0
      %v5237 = vpop.f32.mrf.mxu0
      %v5238 = vadd.f32 %v5150, %v5237
      %v5239 = vpop.f32.mrf.mxu0
      %5240 = vmatprep.mubr.bf16.mxu0 0
      %5241 = vmatmul.mubr.bf16.gmra.mxu0 %v5098
      %v5242 = vpop.f32.mrf.mxu0
      %v5243 = vadd.f32 %v5150, %v5242
      %v5244 = vpop.f32.mrf.mxu0
      %v5245 = vpop.f32.mrf.mxu0
      %v5246 = vadd.f32 %v5150, %v5245
      %v5247 = vpop.f32.mrf.mxu0
      %5248 = vmatprep.mubr.bf16.mxu0 0
      %5249 = vmatmul.mubr.bf16.gmra.mxu0 %v5099
      %v5250 = vpop.f32.mrf.mxu0
      %v5251 = vadd.f32 %v5150, %v5250
      %v5252 = vpop.f32.mrf.mxu0
      %v5253 = vpop.f32.mrf.mxu0
      %v5254 = vadd.f32 %v5150, %v5253
      %v5255 = vpop.f32.mrf.mxu0
      %5256 = vmatprep.mubr.bf16.mxu0 0
      %5257 = vmatmul.mubr.bf16.gmra.mxu0 %v5100
      %v5258 = vpop.f32.mrf.mxu0
      %v5259 = vadd.f32 %v5150, %v5258
      %v5260 = vpop.f32.mrf.mxu0
      %v5261 = vpop.f32.mrf.mxu0
      %v5262 = vadd.f32 %v5150, %v5261
      %v5263 = vpop.f32.mrf.mxu0
      %5264 = vmatprep.mubr.bf16.mxu0 0
      %5265 = vmatmul.mubr.bf16.gmra.mxu0 %v5101
      %v5266 = vpop.f32.mrf.mxu0
      %v5267 = vadd.f32 %v5150, %v5266
      %v5268 = vpop.f32.mrf.mxu0
      %v5269 = vpop.f32.mrf.mxu0
      %v5270 = vadd.f32 %v5150, %v5269
      %v5271 = vpop.f32.mrf.mxu0
      %5272 = vmatprep.mubr.bf16.mxu0 0
      %5273 = vmatmul.mubr.bf16.gmra.mxu0 %v5102
      %v5274 = vpop.f32.mrf.mxu0
      %v5275 = vadd.f32 %v5150, %v5274
      %v5276 = vpop.f32.mrf.mxu0
      %v5277 = vpop.f32.mrf.mxu0
      %v5278 = vadd.f32 %v5150, %v5277
      %v5279 = vpop.f32.mrf.mxu0
      %5280 = vmatprep.mubr.bf16.mxu0 0
      %5281 = vmatmul.mubr.bf16.gmra.mxu0 %v5103
      %v5282 = vpop.f32.mrf.mxu0
      %v5283 = vadd.f32 %v5150, %v5282
      %v5284 = vpop.f32.mrf.mxu0
      %v5285 = vpop.f32.mrf.mxu0
      %v5286 = vadd.f32 %v5150, %v5285
      %v5287 = vpop.f32.mrf.mxu0
      %5288 = vmatprep.mubr.bf16.mxu0 0
      %5289 = vmatmul.mubr.bf16.gmra.mxu0 %v5104
      %v5290 = vpop.f32.mrf.mxu0
      %v5291 = vadd.f32 %v5150, %v5290
      %v5292 = vpop.f32.mrf.mxu0
      %v5293 = vpop.f32.mrf.mxu0
      %v5294 = vadd.f32 %v5150, %v5293
      %v5295 = vpop.f32.mrf.mxu0
      %5296 = vmatprep.mubr.bf16.mxu0 0
      %5297 = vmatmul.mubr.bf16.gmra.mxu0 %v5105
      %v5298 = vpop.f32.mrf.mxu0
      %v5299 = vadd.f32 %v5150, %v5298
      %v5300 = vpop.f32.mrf.mxu0
      %v5301 = vpop.f32.mrf.mxu0
      %v5302 = vadd.f32 %v5150, %v5301
      %v5303 = vpop.f32.mrf.mxu0
      %5304 = vmatprep.mubr.bf16.mxu0 0
      %5305 = vmatmul.mubr.bf16.gmra.mxu0 %v5106
      %v5306 = vpop.f32.mrf.mxu0
      %v5307 = vadd.f32 %v5150, %v5306
      %v5308 = vpop.f32.mrf.mxu0
      %v5309 = vpop.f32.mrf.mxu0
      %v5310 = vadd.f32 %v5150, %v5309
      %v5311 = vpop.f32.mrf.mxu0
      %5312 = vmatprep.mubr.bf16.mxu0 0
      %5313 = vmatmul.mubr.bf16.gmra.mxu0 %v5107
      %v5314 = vpop.f32.mrf.mxu0
      %v5315 = vadd.f32 %v5150, %v5314
      %v5316 = vpop.f32.mrf.mxu0
      %v5317 = vpop.f32.mrf.mxu0
      %v5318 = vadd.f32 %v5150, %v5317
      %v5319 = vpop.f32.mrf.mxu0
      %5320 = vmatprep.mubr.bf16.mxu0 0
      %5321 = vmatmul.mubr.bf16.gmra.mxu0 %v5108
      %v5322 = vpop.f32.mrf.mxu0
      %v5323 = vadd.f32 %v5150, %v5322
      %v5324 = vpop.f32.mrf.mxu0
      %v5325 = vpop.f32.mrf.mxu0
      %v5326 = vadd.f32 %v5150, %v5325
      %v5327 = vpop.f32.mrf.mxu0
      %5328 = vmatprep.mubr.bf16.mxu0 0
      %5329 = vmatmul.mubr.bf16.gmra.mxu0 %v5109
      %v5330 = vpop.f32.mrf.mxu0
      %v5331 = vadd.f32 %v5150, %v5330
      %v5332 = vpop.f32.mrf.mxu0
      %v5333 = vpop.f32.mrf.mxu0
      %v5334 = vadd.f32 %v5150, %v5333
      %v5335 = vpop.f32.mrf.mxu0
      %5336 = vmatprep.mubr.bf16.mxu0 0
      %5337 = vmatmul.mubr.bf16.gmra.mxu0 %v5110
      %v5338 = vpop.f32.mrf.mxu0
      %v5339 = vadd.f32 %v5150, %v5338
      %v5340 = vpop.f32.mrf.mxu0
      %v5341 = vpop.f32.mrf.mxu0
      %v5342 = vadd.f32 %v5150, %v5341
      %v5343 = vpop.f32.mrf.mxu0
      %5344 = vmatprep.mubr.bf16.mxu0 0
      %5345 = vmatmul.mubr.bf16.gmra.mxu0 %v5111
      %v5346 = vpop.f32.mrf.mxu0
      %v5347 = vadd.f32 %v5150, %v5346
      %v5348 = vpop.f32.mrf.mxu0
      %v5349 = vpop.f32.mrf.mxu0
      %v5350 = vadd.f32 %v5150, %v5349
      %v5351 = vpop.f32.mrf.mxu0
      %5352 = vmatprep.mubr.bf16.mxu0 0
      %5353 = vmatmul.mubr.bf16.gmra.mxu0 %v5112
      %v5354 = vpop.f32.mrf.mxu0
      %v5355 = vadd.f32 %v5150, %v5354
      %v5356 = vpop.f32.mrf.mxu0
      %v5357 = vpop.f32.mrf.mxu0
      %v5358 = vadd.f32 %v5150, %v5357
      %v5359 = vpop.f32.mrf.mxu0
      %5360 = vmatprep.mubr.bf16.mxu0 0
      %5361 = vmatmul.mubr.bf16.gmra.mxu0 %v5113
      %v5362 = vpop.f32.mrf.mxu0
      %v5363 = vadd.f32 %v5150, %v5362
      %v5364 = vpop.f32.mrf.mxu0
      %v5365 = vpop.f32.mrf.mxu0
      %v5366 = vadd.f32 %v5150, %v5365
      %v5367 = vpop.f32.mrf.mxu0
      %5368 = vmatprep.mubr.bf16.mxu0 0
      %5369 = vmatmul.mubr.bf16.gmra.mxu0 %v5114
      %v5370 = vpop.f32.mrf.mxu0
      %v5371 = vadd.f32 %v5150, %v5370
      %v5372 = vpop.f32.mrf.mxu0
      %v5373 = vpop.f32.mrf.mxu0
      %v5374 = vadd.f32 %v5150, %v5373
      %v5375 = vpop.f32.mrf.mxu0
      %5376 = vmatprep.mubr.bf16.mxu0 0
      %5377 = vmatmul.mubr.bf16.gmra.mxu0 %v5115
      %v5378 = vpop.f32.mrf.mxu0
      %v5379 = vadd.f32 %v5150, %v5378
      %v5380 = vpop.f32.mrf.mxu0
      %v5381 = vpop.f32.mrf.mxu0
      %v5382 = vadd.f32 %v5150, %v5381
      %v5383 = vpop.f32.mrf.mxu0
      %5384 = vmatprep.mubr.bf16.mxu0 0
      %5385 = vmatmul.mubr.bf16.gmra.mxu0 %v5116
      %v5386 = vpop.f32.mrf.mxu0
      %v5387 = vadd.f32 %v5150, %v5386
      %v5388 = vpop.f32.mrf.mxu0
      %v5389 = vpop.f32.mrf.mxu0
      %v5390 = vadd.f32 %v5150, %v5389
      %v5391 = vpop.f32.mrf.mxu0
      %5392 = vmatprep.mubr.bf16.mxu0 0
      %5393 = vmatmul.mubr.bf16.gmra.mxu0 %v5117
      %v5394 = vpop.f32.mrf.mxu0
      %v5395 = vadd.f32 %v5150, %v5394
      %v5396 = vpop.f32.mrf.mxu0
      %v5397 = vpop.f32.mrf.mxu0
      %v5398 = vadd.f32 %v5150, %v5397
      %v5399 = vpop.f32.mrf.mxu0
      %5400 = vmatprep.mubr.bf16.mxu0 0
      %5401 = vmatmul.mubr.bf16.gmra.mxu0 %v5118
      %v5402 = vpop.f32.mrf.mxu0
      %v5403 = vadd.f32 %v5150, %v5402
      %v5404 = vpop.f32.mrf.mxu0
      %v5405 = vpop.f32.mrf.mxu0
      %v5406 = vadd.f32 %v5150, %v5405
      %v5407 = vpop.f32.mrf.mxu0
      %5408 = vmatprep.mubr.bf16.mxu0 0
      %5409 = vmatmul.mubr.bf16.gmra.mxu0 %v5119
      %v5410 = vpop.f32.mrf.mxu0
      %v5411 = vadd.f32 %v5150, %v5410
      %v5412 = vpop.f32.mrf.mxu0
      %v5413 = vpop.f32.mrf.mxu0
      %v5414 = vadd.f32 %v5150, %v5413
      %v5415 = vpop.f32.mrf.mxu0
      %5416 = vmatprep.mubr.bf16.mxu0 0
      %5417 = vmatmul.mubr.bf16.gmra.mxu0 %v5120
      %v5418 = vpop.f32.mrf.mxu0
      %v5419 = vadd.f32 %v5150, %v5418
      %v5420 = vpop.f32.mrf.mxu0
      %v5421 = vpop.f32.mrf.mxu0
      %v5422 = vadd.f32 %v5150, %v5421
      %v5423 = vpop.f32.mrf.mxu0
      %5424 = vmatprep.mubr.bf16.mxu0 0
      %5425 = vmatmul.mubr.bf16.gmra.mxu0 %v5121
      %v5426 = vpop.f32.mrf.mxu0
      %v5427 = vadd.f32 %v5150, %v5426
      %v5428 = vpop.f32.mrf.mxu0
      %v5429 = vpop.f32.mrf.mxu0
      %v5430 = vadd.f32 %v5150, %v5429
      %v5431 = vpop.f32.mrf.mxu0
      %5432 = vmatprep.mubr.bf16.mxu0 0
      %5433 = vmatmul.mubr.bf16.gmra.mxu0 %v5122
      %v5434 = vpop.f32.mrf.mxu0
      %v5435 = vadd.f32 %v5150, %v5434
      %v5436 = vpop.f32.mrf.mxu0
      %v5437 = vpop.f32.mrf.mxu0
      %v5438 = vadd.f32 %v5150, %v5437
      %v5439 = vpop.f32.mrf.mxu0
      %5440 = vmatprep.mubr.bf16.mxu0 0
      %5441 = vmatmul.mubr.bf16.gmra.mxu0 %v5123
      %v5442 = vpop.f32.mrf.mxu0
      %v5443 = vadd.f32 %v5150, %v5442
      %v5444 = vpop.f32.mrf.mxu0
      %v5445 = vpop.f32.mrf.mxu0
      %v5446 = vadd.f32 %v5150, %v5445
      %v5447 = vpop.f32.mrf.mxu0
      %5448 = vmatprep.mubr.bf16.mxu0 0
      %5449 = vmatmul.mubr.bf16.gmra.mxu0 %v5124
      %v5450 = vpop.f32.mrf.mxu0
      %v5451 = vadd.f32 %v5150, %v5450
      %v5452 = vpop.f32.mrf.mxu0
      %v5453 = vpop.f32.mrf.mxu0
      %v5454 = vadd.f32 %v5150, %v5453
      %v5455 = vpop.f32.mrf.mxu0
      %5456 = vmatprep.mubr.bf16.mxu0 0
      %5457 = vmatmul.mubr.bf16.gmra.mxu0 %v5125
      %v5458 = vpop.f32.mrf.mxu0
      %v5459 = vadd.f32 %v5150, %v5458
      %v5460 = vpop.f32.mrf.mxu0
      %v5461 = vpop.f32.mrf.mxu0
      %v5462 = vadd.f32 %v5150, %v5461
      %v5463 = vpop.f32.mrf.mxu0
      %5464 = vmatprep.mubr.bf16.mxu0 0
      %5465 = vmatmul.mubr.bf16.gmra.mxu0 %v5126
      %v5466 = vpop.f32.mrf.mxu0
      %v5467 = vadd.f32 %v5150, %v5466
      %v5468 = vpop.f32.mrf.mxu0
      %v5469 = vpop.f32.mrf.mxu0
      %v5470 = vadd.f32 %v5150, %v5469
      %v5471 = vpop.f32.mrf.mxu0
      %5472 = vmatprep.mubr.bf16.mxu0 0
      %5473 = vmatmul.mubr.bf16.gmra.mxu0 %v5127
      %v5474 = vpop.f32.mrf.mxu0
      %v5475 = vadd.f32 %v5150, %v5474
      %v5476 = vpop.f32.mrf.mxu0
      %v5477 = vpop.f32.mrf.mxu0
      %v5478 = vadd.f32 %v5150, %v5477
      %v5479 = vpop.f32.mrf.mxu0
      %5480 = vmatprep.mubr.bf16.mxu0 0
      %5481 = vmatmul.mubr.bf16.gmra.mxu0 %v5128
      %v5482 = vpop.f32.mrf.mxu0
      %v5483 = vadd.f32 %v5150, %v5482
      %v5484 = vpop.f32.mrf.mxu0
      %v5485 = vpop.f32.mrf.mxu0
      %v5486 = vadd.f32 %v5150, %v5485
      %v5487 = vpop.f32.mrf.mxu0
      %5488 = vdwg.mxu0
      %v5489 = vxor.u32 %v5235, 2147483648
      %v5490 = vxor.u32 %v5238, 2147483648
      %v5491 = vxor.u32 %v5243, 2147483648
      %v5492 = vxor.u32 %v5246, 2147483648
      %v5493 = vxor.u32 %v5251, 2147483648
      %v5494 = vxor.u32 %v5254, 2147483648
      %v5495 = vxor.u32 %v5259, 2147483648
      %v5496 = vxor.u32 %v5262, 2147483648
      %v5497 = vxor.u32 %v5267, 2147483648
      %v5498 = vxor.u32 %v5270, 2147483648
      %v5499 = vxor.u32 %v5275, 2147483648
      %v5500 = vxor.u32 %v5278, 2147483648
      %v5501 = vxor.u32 %v5283, 2147483648
      %v5502 = vxor.u32 %v5286, 2147483648
      %v5503 = vxor.u32 %v5291, 2147483648
      %v5504 = vxor.u32 %v5294, 2147483648
      %v5505 = vxor.u32 %v5299, 2147483648
      %v5506 = vxor.u32 %v5302, 2147483648
      %v5507 = vxor.u32 %v5307, 2147483648
      %v5508 = vxor.u32 %v5310, 2147483648
      %v5509 = vxor.u32 %v5315, 2147483648
      %v5510 = vxor.u32 %v5318, 2147483648
      %v5511 = vxor.u32 %v5323, 2147483648
      %v5512 = vxor.u32 %v5326, 2147483648
      %v5513 = vxor.u32 %v5331, 2147483648
      %v5514 = vxor.u32 %v5334, 2147483648
      %v5515 = vxor.u32 %v5339, 2147483648
      %v5516 = vxor.u32 %v5342, 2147483648
      %v5517 = vxor.u32 %v5347, 2147483648
      %v5518 = vxor.u32 %v5350, 2147483648
      %v5519 = vxor.u32 %v5355, 2147483648
      %v5520 = vxor.u32 %v5358, 2147483648
      %v5521 = vxor.u32 %v5363, 2147483648
      %v5522 = vxor.u32 %v5366, 2147483648
      %v5523 = vxor.u32 %v5371, 2147483648
      %v5524 = vxor.u32 %v5374, 2147483648
      %v5525 = vxor.u32 %v5379, 2147483648
      %v5526 = vxor.u32 %v5382, 2147483648
      %v5527 = vxor.u32 %v5387, 2147483648
      %v5528 = vxor.u32 %v5390, 2147483648
      %v5529 = vxor.u32 %v5395, 2147483648
      %v5530 = vxor.u32 %v5398, 2147483648
      %v5531 = vxor.u32 %v5403, 2147483648
      %v5532 = vxor.u32 %v5406, 2147483648
      %v5533 = vxor.u32 %v5411, 2147483648
      %v5534 = vxor.u32 %v5414, 2147483648
      %v5535 = vxor.u32 %v5419, 2147483648
      %v5536 = vxor.u32 %v5422, 2147483648
      %v5537 = vxor.u32 %v5427, 2147483648
      %v5538 = vxor.u32 %v5430, 2147483648
      %v5539 = vxor.u32 %v5435, 2147483648
      %v5540 = vxor.u32 %v5438, 2147483648
      %v5541 = vxor.u32 %v5443, 2147483648
      %v5542 = vxor.u32 %v5446, 2147483648
      %v5543 = vxor.u32 %v5451, 2147483648
      %v5544 = vxor.u32 %v5454, 2147483648
      %v5545 = vxor.u32 %v5459, 2147483648
      %v5546 = vxor.u32 %v5462, 2147483648
      %v5547 = vxor.u32 %v5467, 2147483648
      %v5548 = vxor.u32 %v5470, 2147483648
      %v5549 = vxor.u32 %v5475, 2147483648
      %v5550 = vxor.u32 %v5478, 2147483648
      %v5551 = vxor.u32 %v5483, 2147483648
      %v5552 = vxor.u32 %v5486, 2147483648
      %v5553 = vmul.f32 %v5489, 1.442695
      %v5554 = vpow.pop %v5553
      %v5555 = vmul.f32 %v5490, 1.442695
      %v5556 = vpow.pop %v5555
      %v5557 = vmul.f32 %v5491, 1.442695
      %v5558 = vpow.pop %v5557
      %v5559 = vmul.f32 %v5492, 1.442695
      %v5560 = vpow.pop %v5559
      %v5561 = vmul.f32 %v5493, 1.442695
      %v5562 = vpow.pop %v5561
      %v5563 = vmul.f32 %v5494, 1.442695
      %v5564 = vpow.pop %v5563
      %v5565 = vmul.f32 %v5495, 1.442695
      %v5566 = vpow.pop %v5565
      %v5567 = vmul.f32 %v5496, 1.442695
      %v5568 = vpow.pop %v5567
      %v5569 = vmul.f32 %v5497, 1.442695
      %v5570 = vpow.pop %v5569
      %v5571 = vmul.f32 %v5498, 1.442695
      %v5572 = vpow.pop %v5571
      %v5573 = vmul.f32 %v5499, 1.442695
      %v5574 = vpow.pop %v5573
      %v5575 = vmul.f32 %v5500, 1.442695
      %v5576 = vpow.pop %v5575
      %v5577 = vmul.f32 %v5501, 1.442695
      %v5578 = vpow.pop %v5577
      %v5579 = vmul.f32 %v5502, 1.442695
      %v5580 = vpow.pop %v5579
      %v5581 = vmul.f32 %v5503, 1.442695
      %v5582 = vpow.pop %v5581
      %v5583 = vmul.f32 %v5504, 1.442695
      %v5584 = vpow.pop %v5583
      %v5585 = vmul.f32 %v5505, 1.442695
      %v5586 = vpow.pop %v5585
      %v5587 = vmul.f32 %v5506, 1.442695
      %v5588 = vpow.pop %v5587
      %v5589 = vmul.f32 %v5507, 1.442695
      %v5590 = vpow.pop %v5589
      %v5591 = vmul.f32 %v5508, 1.442695
      %v5592 = vpow.pop %v5591
      %v5593 = vmul.f32 %v5509, 1.442695
      %v5594 = vpow.pop %v5593
      %v5595 = vmul.f32 %v5510, 1.442695
      %v5596 = vpow.pop %v5595
      %v5597 = vmul.f32 %v5511, 1.442695
      %v5598 = vpow.pop %v5597
      %v5599 = vmul.f32 %v5512, 1.442695
      %v5600 = vpow.pop %v5599
      %v5601 = vmul.f32 %v5513, 1.442695
      %v5602 = vpow.pop %v5601
      %v5603 = vmul.f32 %v5514, 1.442695
      %v5604 = vpow.pop %v5603
      %v5605 = vmul.f32 %v5515, 1.442695
      %v5606 = vpow.pop %v5605
      %v5607 = vmul.f32 %v5516, 1.442695
      %v5608 = vpow.pop %v5607
      %v5609 = vmul.f32 %v5517, 1.442695
      %v5610 = vpow.pop %v5609
      %v5611 = vmul.f32 %v5518, 1.442695
      %v5612 = vpow.pop %v5611
      %v5613 = vmul.f32 %v5519, 1.442695
      %v5614 = vpow.pop %v5613
      %v5615 = vmul.f32 %v5520, 1.442695
      %v5616 = vpow.pop %v5615
      %v5617 = vmul.f32 %v5521, 1.442695
      %v5618 = vpow.pop %v5617
      %v5619 = vmul.f32 %v5522, 1.442695
      %v5620 = vpow.pop %v5619
      %v5621 = vmul.f32 %v5523, 1.442695
      %v5622 = vpow.pop %v5621
      %v5623 = vmul.f32 %v5524, 1.442695
      %v5624 = vpow.pop %v5623
      %v5625 = vmul.f32 %v5525, 1.442695
      %v5626 = vpow.pop %v5625
      %v5627 = vmul.f32 %v5526, 1.442695
      %v5628 = vpow.pop %v5627
      %v5629 = vmul.f32 %v5527, 1.442695
      %v5630 = vpow.pop %v5629
      %v5631 = vmul.f32 %v5528, 1.442695
      %v5632 = vpow.pop %v5631
      %v5633 = vmul.f32 %v5529, 1.442695
      %v5634 = vpow.pop %v5633
      %v5635 = vmul.f32 %v5530, 1.442695
      %v5636 = vpow.pop %v5635
      %v5637 = vmul.f32 %v5531, 1.442695
      %v5638 = vpow.pop %v5637
      %v5639 = vmul.f32 %v5532, 1.442695
      %v5640 = vpow.pop %v5639
      %v5641 = vmul.f32 %v5533, 1.442695
      %v5642 = vpow.pop %v5641
      %v5643 = vmul.f32 %v5534, 1.442695
      %v5644 = vpow.pop %v5643
      %v5645 = vmul.f32 %v5535, 1.442695
      %v5646 = vpow.pop %v5645
      %v5647 = vmul.f32 %v5536, 1.442695
      %v5648 = vpow.pop %v5647
      %v5649 = vmul.f32 %v5537, 1.442695
      %v5650 = vpow.pop %v5649
      %v5651 = vmul.f32 %v5538, 1.442695
      %v5652 = vpow.pop %v5651
      %v5653 = vmul.f32 %v5539, 1.442695
      %v5654 = vpow.pop %v5653
      %v5655 = vmul.f32 %v5540, 1.442695
      %v5656 = vpow.pop %v5655
      %v5657 = vmul.f32 %v5541, 1.442695
      %v5658 = vpow.pop %v5657
      %v5659 = vmul.f32 %v5542, 1.442695
      %v5660 = vpow.pop %v5659
      %v5661 = vmul.f32 %v5543, 1.442695
      %v5662 = vpow.pop %v5661
      %v5663 = vmul.f32 %v5544, 1.442695
      %v5664 = vpow.pop %v5663
      %v5665 = vmul.f32 %v5545, 1.442695
      %v5666 = vpow.pop %v5665
      %v5667 = vmul.f32 %v5546, 1.442695
      %v5668 = vpow.pop %v5667
      %v5669 = vmul.f32 %v5547, 1.442695
      %v5670 = vpow.pop %v5669
      %v5671 = vmul.f32 %v5548, 1.442695
      %v5672 = vpow.pop %v5671
      %v5673 = vmul.f32 %v5549, 1.442695
      %v5674 = vpow.pop %v5673
      %v5675 = vmul.f32 %v5550, 1.442695
      %v5676 = vpow.pop %v5675
      %v5677 = vmul.f32 %v5551, 1.442695
      %v5678 = vpow.pop %v5677
      %v5679 = vmul.f32 %v5552, 1.442695
      %v5680 = vpow.pop %v5679
      %v5681 = vadd.f32 %v5554, 1.0
      %v5682 = vadd.f32 %v5556, 1.0
      %v5683 = vadd.f32 %v5558, 1.0
      %v5684 = vadd.f32 %v5560, 1.0
      %v5685 = vadd.f32 %v5562, 1.0
      %v5686 = vadd.f32 %v5564, 1.0
      %v5687 = vadd.f32 %v5566, 1.0
      %v5688 = vadd.f32 %v5568, 1.0
      %v5689 = vadd.f32 %v5570, 1.0
      %v5690 = vadd.f32 %v5572, 1.0
      %v5691 = vadd.f32 %v5574, 1.0
      %v5692 = vadd.f32 %v5576, 1.0
      %v5693 = vadd.f32 %v5578, 1.0
      %v5694 = vadd.f32 %v5580, 1.0
      %v5695 = vadd.f32 %v5582, 1.0
      %v5696 = vadd.f32 %v5584, 1.0
      %v5697 = vadd.f32 %v5586, 1.0
      %v5698 = vadd.f32 %v5588, 1.0
      %v5699 = vadd.f32 %v5590, 1.0
      %v5700 = vadd.f32 %v5592, 1.0
      %v5701 = vadd.f32 %v5594, 1.0
      %v5702 = vadd.f32 %v5596, 1.0
      %v5703 = vadd.f32 %v5598, 1.0
      %v5704 = vadd.f32 %v5600, 1.0
      %v5705 = vadd.f32 %v5602, 1.0
      %v5706 = vadd.f32 %v5604, 1.0
      %v5707 = vadd.f32 %v5606, 1.0
      %v5708 = vadd.f32 %v5608, 1.0
      %v5709 = vadd.f32 %v5610, 1.0
      %v5710 = vadd.f32 %v5612, 1.0
      %v5711 = vadd.f32 %v5614, 1.0
      %v5712 = vadd.f32 %v5616, 1.0
      %v5713 = vadd.f32 %v5618, 1.0
      %v5714 = vadd.f32 %v5620, 1.0
      %v5715 = vadd.f32 %v5622, 1.0
      %v5716 = vadd.f32 %v5624, 1.0
      %v5717 = vadd.f32 %v5626, 1.0
      %v5718 = vadd.f32 %v5628, 1.0
      %v5719 = vadd.f32 %v5630, 1.0
      %v5720 = vadd.f32 %v5632, 1.0
      %v5721 = vadd.f32 %v5634, 1.0
      %v5722 = vadd.f32 %v5636, 1.0
      %v5723 = vadd.f32 %v5638, 1.0
      %v5724 = vadd.f32 %v5640, 1.0
      %v5725 = vadd.f32 %v5642, 1.0
      %v5726 = vadd.f32 %v5644, 1.0
      %v5727 = vadd.f32 %v5646, 1.0
      %v5728 = vadd.f32 %v5648, 1.0
      %v5729 = vadd.f32 %v5650, 1.0
      %v5730 = vadd.f32 %v5652, 1.0
      %v5731 = vadd.f32 %v5654, 1.0
      %v5732 = vadd.f32 %v5656, 1.0
      %v5733 = vadd.f32 %v5658, 1.0
      %v5734 = vadd.f32 %v5660, 1.0
      %v5735 = vadd.f32 %v5662, 1.0
      %v5736 = vadd.f32 %v5664, 1.0
      %v5737 = vadd.f32 %v5666, 1.0
      %v5738 = vadd.f32 %v5668, 1.0
      %v5739 = vadd.f32 %v5670, 1.0
      %v5740 = vadd.f32 %v5672, 1.0
      %v5741 = vadd.f32 %v5674, 1.0
      %v5742 = vadd.f32 %v5676, 1.0
      %v5743 = vadd.f32 %v5678, 1.0
      %v5744 = vadd.f32 %v5680, 1.0
      %v5745 = vrcp.pop %v5681
      %v5746 = vmul.f32 1.0, %v5745
      %v5747 = vrcp.pop %v5682
      %v5748 = vmul.f32 1.0, %v5747
      %v5749 = vrcp.pop %v5683
      %v5750 = vmul.f32 1.0, %v5749
      %v5751 = vrcp.pop %v5684
      %v5752 = vmul.f32 1.0, %v5751
      %v5753 = vrcp.pop %v5685
      %v5754 = vmul.f32 1.0, %v5753
      %v5755 = vrcp.pop %v5686
      %v5756 = vmul.f32 1.0, %v5755
      %v5757 = vrcp.pop %v5687
      %v5758 = vmul.f32 1.0, %v5757
      %v5759 = vrcp.pop %v5688
      %v5760 = vmul.f32 1.0, %v5759
      %v5761 = vrcp.pop %v5689
      %v5762 = vmul.f32 1.0, %v5761
      %v5763 = vrcp.pop %v5690
      %v5764 = vmul.f32 1.0, %v5763
      %v5765 = vrcp.pop %v5691
      %v5766 = vmul.f32 1.0, %v5765
      %v5767 = vrcp.pop %v5692
      %v5768 = vmul.f32 1.0, %v5767
      %v5769 = vrcp.pop %v5693
      %v5770 = vmul.f32 1.0, %v5769
      %v5771 = vrcp.pop %v5694
      %v5772 = vmul.f32 1.0, %v5771
      %v5773 = vrcp.pop %v5695
      %v5774 = vmul.f32 1.0, %v5773
      %v5775 = vrcp.pop %v5696
      %v5776 = vmul.f32 1.0, %v5775
      %v5777 = vrcp.pop %v5697
      %v5778 = vmul.f32 1.0, %v5777
      %v5779 = vrcp.pop %v5698
      %v5780 = vmul.f32 1.0, %v5779
      %v5781 = vrcp.pop %v5699
      %v5782 = vmul.f32 1.0, %v5781
      %v5783 = vrcp.pop %v5700
      %v5784 = vmul.f32 1.0, %v5783
      %v5785 = vrcp.pop %v5701
      %v5786 = vmul.f32 1.0, %v5785
      %v5787 = vrcp.pop %v5702
      %v5788 = vmul.f32 1.0, %v5787
      %v5789 = vrcp.pop %v5703
      %v5790 = vmul.f32 1.0, %v5789
      %v5791 = vrcp.pop %v5704
      %v5792 = vmul.f32 1.0, %v5791
      %v5793 = vrcp.pop %v5705
      %v5794 = vmul.f32 1.0, %v5793
      %v5795 = vrcp.pop %v5706
      %v5796 = vmul.f32 1.0, %v5795
      %v5797 = vrcp.pop %v5707
      %v5798 = vmul.f32 1.0, %v5797
      %v5799 = vrcp.pop %v5708
      %v5800 = vmul.f32 1.0, %v5799
      %v5801 = vrcp.pop %v5709
      %v5802 = vmul.f32 1.0, %v5801
      %v5803 = vrcp.pop %v5710
      %v5804 = vmul.f32 1.0, %v5803
      %v5805 = vrcp.pop %v5711
      %v5806 = vmul.f32 1.0, %v5805
      %v5807 = vrcp.pop %v5712
      %v5808 = vmul.f32 1.0, %v5807
      %v5809 = vrcp.pop %v5713
      %v5810 = vmul.f32 1.0, %v5809
      %v5811 = vrcp.pop %v5714
      %v5812 = vmul.f32 1.0, %v5811
      %v5813 = vrcp.pop %v5715
      %v5814 = vmul.f32 1.0, %v5813
      %v5815 = vrcp.pop %v5716
      %v5816 = vmul.f32 1.0, %v5815
      %v5817 = vrcp.pop %v5717
      %v5818 = vmul.f32 1.0, %v5817
      %v5819 = vrcp.pop %v5718
      %v5820 = vmul.f32 1.0, %v5819
      %v5821 = vrcp.pop %v5719
      %v5822 = vmul.f32 1.0, %v5821
      %v5823 = vrcp.pop %v5720
      %v5824 = vmul.f32 1.0, %v5823
      %v5825 = vrcp.pop %v5721
      %v5826 = vmul.f32 1.0, %v5825
      %v5827 = vrcp.pop %v5722
      %v5828 = vmul.f32 1.0, %v5827
      %v5829 = vrcp.pop %v5723
      %v5830 = vmul.f32 1.0, %v5829
      %v5831 = vrcp.pop %v5724
      %v5832 = vmul.f32 1.0, %v5831
      %v5833 = vrcp.pop %v5725
      %v5834 = vmul.f32 1.0, %v5833
      %v5835 = vrcp.pop %v5726
      %v5836 = vmul.f32 1.0, %v5835
      %v5837 = vrcp.pop %v5727
      %v5838 = vmul.f32 1.0, %v5837
      %v5839 = vrcp.pop %v5728
      %v5840 = vmul.f32 1.0, %v5839
      %v5841 = vrcp.pop %v5729
      %v5842 = vmul.f32 1.0, %v5841
      %v5843 = vrcp.pop %v5730
      %v5844 = vmul.f32 1.0, %v5843
      %v5845 = vrcp.pop %v5731
      %v5846 = vmul.f32 1.0, %v5845
      %v5847 = vrcp.pop %v5732
      %v5848 = vmul.f32 1.0, %v5847
      %v5849 = vrcp.pop %v5733
      %v5850 = vmul.f32 1.0, %v5849
      %v5851 = vrcp.pop %v5734
      %v5852 = vmul.f32 1.0, %v5851
      %v5853 = vrcp.pop %v5735
      %v5854 = vmul.f32 1.0, %v5853
      %v5855 = vrcp.pop %v5736
      %v5856 = vmul.f32 1.0, %v5855
      %v5857 = vrcp.pop %v5737
      %v5858 = vmul.f32 1.0, %v5857
      %v5859 = vrcp.pop %v5738
      %v5860 = vmul.f32 1.0, %v5859
      %v5861 = vrcp.pop %v5739
      %v5862 = vmul.f32 1.0, %v5861
      %v5863 = vrcp.pop %v5740
      %v5864 = vmul.f32 1.0, %v5863
      %v5865 = vrcp.pop %v5741
      %v5866 = vmul.f32 1.0, %v5865
      %v5867 = vrcp.pop %v5742
      %v5868 = vmul.f32 1.0, %v5867
      %v5869 = vrcp.pop %v5743
      %v5870 = vmul.f32 1.0, %v5869
      %v5871 = vrcp.pop %v5744
      %v5872 = vmul.f32 1.0, %v5871
      %v5873 = vmul.f32 %v5235, %v5746
      %v5874 = vmul.f32 %v5238, %v5748
      %v5875 = vmul.f32 %v5243, %v5750
      %v5876 = vmul.f32 %v5246, %v5752
      %v5877 = vmul.f32 %v5251, %v5754
      %v5878 = vmul.f32 %v5254, %v5756
      %v5879 = vmul.f32 %v5259, %v5758
      %v5880 = vmul.f32 %v5262, %v5760
      %v5881 = vmul.f32 %v5267, %v5762
      %v5882 = vmul.f32 %v5270, %v5764
      %v5883 = vmul.f32 %v5275, %v5766
      %v5884 = vmul.f32 %v5278, %v5768
      %v5885 = vmul.f32 %v5283, %v5770
      %v5886 = vmul.f32 %v5286, %v5772
      %v5887 = vmul.f32 %v5291, %v5774
      %v5888 = vmul.f32 %v5294, %v5776
      %v5889 = vmul.f32 %v5299, %v5778
      %v5890 = vmul.f32 %v5302, %v5780
      %v5891 = vmul.f32 %v5307, %v5782
      %v5892 = vmul.f32 %v5310, %v5784
      %v5893 = vmul.f32 %v5315, %v5786
      %v5894 = vmul.f32 %v5318, %v5788
      %v5895 = vmul.f32 %v5323, %v5790
      %v5896 = vmul.f32 %v5326, %v5792
      %v5897 = vmul.f32 %v5331, %v5794
      %v5898 = vmul.f32 %v5334, %v5796
      %v5899 = vmul.f32 %v5339, %v5798
      %v5900 = vmul.f32 %v5342, %v5800
      %v5901 = vmul.f32 %v5347, %v5802
      %v5902 = vmul.f32 %v5350, %v5804
      %v5903 = vmul.f32 %v5355, %v5806
      %v5904 = vmul.f32 %v5358, %v5808
      %v5905 = vmul.f32 %v5363, %v5810
      %v5906 = vmul.f32 %v5366, %v5812
      %v5907 = vmul.f32 %v5371, %v5814
      %v5908 = vmul.f32 %v5374, %v5816
      %v5909 = vmul.f32 %v5379, %v5818
      %v5910 = vmul.f32 %v5382, %v5820
      %v5911 = vmul.f32 %v5387, %v5822
      %v5912 = vmul.f32 %v5390, %v5824
      %v5913 = vmul.f32 %v5395, %v5826
      %v5914 = vmul.f32 %v5398, %v5828
      %v5915 = vmul.f32 %v5403, %v5830
      %v5916 = vmul.f32 %v5406, %v5832
      %v5917 = vmul.f32 %v5411, %v5834
      %v5918 = vmul.f32 %v5414, %v5836
      %v5919 = vmul.f32 %v5419, %v5838
      %v5920 = vmul.f32 %v5422, %v5840
      %v5921 = vmul.f32 %v5427, %v5842
      %v5922 = vmul.f32 %v5430, %v5844
      %v5923 = vmul.f32 %v5435, %v5846
      %v5924 = vmul.f32 %v5438, %v5848
      %v5925 = vmul.f32 %v5443, %v5850
      %v5926 = vmul.f32 %v5446, %v5852
      %v5927 = vmul.f32 %v5451, %v5854
      %v5928 = vmul.f32 %v5454, %v5856
      %v5929 = vmul.f32 %v5459, %v5858
      %v5930 = vmul.f32 %v5462, %v5860
      %v5931 = vmul.f32 %v5467, %v5862
      %v5932 = vmul.f32 %v5470, %v5864
      %v5933 = vmul.f32 %v5475, %v5866
      %v5934 = vmul.f32 %v5478, %v5868
      %v5935 = vmul.f32 %v5483, %v5870
      %v5936 = vmul.f32 %v5486, %v5872
      %v5937 = vadd.f32 %v5873, %v4193
      %v5938 = vadd.f32 %v5874, %v4194
      %v5939 = vadd.f32 %v5875, %v4195
      %v5940 = vadd.f32 %v5876, %v4196
      %v5941 = vadd.f32 %v5877, %v4197
      %v5942 = vadd.f32 %v5878, %v4198
      %v5943 = vadd.f32 %v5879, %v4199
      %v5944 = vadd.f32 %v5880, %v4200
      %v5945 = vadd.f32 %v5881, %v4201
      %v5946 = vadd.f32 %v5882, %v4202
      %v5947 = vadd.f32 %v5883, %v4203
      %v5948 = vadd.f32 %v5884, %v4204
      %v5949 = vadd.f32 %v5885, %v4205
      %v5950 = vadd.f32 %v5886, %v4206
      %v5951 = vadd.f32 %v5887, %v4207
      %v5952 = vadd.f32 %v5888, %v4208
      %v5953 = vadd.f32 %v5889, %v4209
      %v5954 = vadd.f32 %v5890, %v4210
      %v5955 = vadd.f32 %v5891, %v4211
      %v5956 = vadd.f32 %v5892, %v4212
      %v5957 = vadd.f32 %v5893, %v4213
      %v5958 = vadd.f32 %v5894, %v4214
      %v5959 = vadd.f32 %v5895, %v4215
      %v5960 = vadd.f32 %v5896, %v4216
      %v5961 = vadd.f32 %v5897, %v4217
      %v5962 = vadd.f32 %v5898, %v4218
      %v5963 = vadd.f32 %v5899, %v4219
      %v5964 = vadd.f32 %v5900, %v4220
      %v5965 = vadd.f32 %v5901, %v4221
      %v5966 = vadd.f32 %v5902, %v4222
      %v5967 = vadd.f32 %v5903, %v4223
      %v5968 = vadd.f32 %v5904, %v4224
      %v5969 = vadd.f32 %v5905, %v4225
      %v5970 = vadd.f32 %v5906, %v4226
      %v5971 = vadd.f32 %v5907, %v4227
      %v5972 = vadd.f32 %v5908, %v4228
      %v5973 = vadd.f32 %v5909, %v4229
      %v5974 = vadd.f32 %v5910, %v4230
      %v5975 = vadd.f32 %v5911, %v4231
      %v5976 = vadd.f32 %v5912, %v4232
      %v5977 = vadd.f32 %v5913, %v4233
      %v5978 = vadd.f32 %v5914, %v4234
      %v5979 = vadd.f32 %v5915, %v4235
      %v5980 = vadd.f32 %v5916, %v4236
      %v5981 = vadd.f32 %v5917, %v4237
      %v5982 = vadd.f32 %v5918, %v4238
      %v5983 = vadd.f32 %v5919, %v4239
      %v5984 = vadd.f32 %v5920, %v4240
      %v5985 = vadd.f32 %v5921, %v4241
      %v5986 = vadd.f32 %v5922, %v4242
      %v5987 = vadd.f32 %v5923, %v4243
      %v5988 = vadd.f32 %v5924, %v4244
      %v5989 = vadd.f32 %v5925, %v4245
      %v5990 = vadd.f32 %v5926, %v4246
      %v5991 = vadd.f32 %v5927, %v4247
      %v5992 = vadd.f32 %v5928, %v4248
      %v5993 = vadd.f32 %v5929, %v4249
      %v5994 = vadd.f32 %v5930, %v4250
      %v5995 = vadd.f32 %v5931, %v4251
      %v5996 = vadd.f32 %v5932, %v4252
      %v5997 = vadd.f32 %v5933, %v4253
      %v5998 = vadd.f32 %v5934, %v4254
      %v5999 = vadd.f32 %v5935, %v4255
      %v6000 = vadd.f32 %v5936, %v4256
      %v6001 = vld [vmem:[%s13] sm:$0x1]
      %v6003 = vlaneseq
      %v6004 = vshrl.u32 %v6003, 7
      %v6005 = vsub.s32 0, %v6004
      %v6006 = vrot.slane %v6001, %v6005
      %v6008 = vmul.f32 %v5937, %v6006
      %v6009 = vmul.f32 %v5938, %v6006
      %v6010 = vmul.f32 %v5939, %v6006
      %v6011 = vmul.f32 %v5940, %v6006
      %v6012 = vmul.f32 %v5941, %v6006
      %v6013 = vmul.f32 %v5942, %v6006
      %v6014 = vmul.f32 %v5943, %v6006
      %v6015 = vmul.f32 %v5944, %v6006
      %v6016 = vmul.f32 %v5945, %v6006
      %v6017 = vmul.f32 %v5946, %v6006
      %v6018 = vmul.f32 %v5947, %v6006
      %v6019 = vmul.f32 %v5948, %v6006
      %v6020 = vmul.f32 %v5949, %v6006
      %v6021 = vmul.f32 %v5950, %v6006
      %v6022 = vmul.f32 %v5951, %v6006
      %v6023 = vmul.f32 %v5952, %v6006
      %v6024 = vmul.f32 %v5953, %v6006
      %v6025 = vmul.f32 %v5954, %v6006
      %v6026 = vmul.f32 %v5955, %v6006
      %v6027 = vmul.f32 %v5956, %v6006
      %v6028 = vmul.f32 %v5957, %v6006
      %v6029 = vmul.f32 %v5958, %v6006
      %v6030 = vmul.f32 %v5959, %v6006
      %v6031 = vmul.f32 %v5960, %v6006
      %v6032 = vmul.f32 %v5961, %v6006
      %v6033 = vmul.f32 %v5962, %v6006
      %v6034 = vmul.f32 %v5963, %v6006
      %v6035 = vmul.f32 %v5964, %v6006
      %v6036 = vmul.f32 %v5965, %v6006
      %v6037 = vmul.f32 %v5966, %v6006
      %v6038 = vmul.f32 %v5967, %v6006
      %v6039 = vmul.f32 %v5968, %v6006
      %v6040 = vmul.f32 %v5969, %v6006
      %v6041 = vmul.f32 %v5970, %v6006
      %v6042 = vmul.f32 %v5971, %v6006
      %v6043 = vmul.f32 %v5972, %v6006
      %v6044 = vmul.f32 %v5973, %v6006
      %v6045 = vmul.f32 %v5974, %v6006
      %v6046 = vmul.f32 %v5975, %v6006
      %v6047 = vmul.f32 %v5976, %v6006
      %v6048 = vmul.f32 %v5977, %v6006
      %v6049 = vmul.f32 %v5978, %v6006
      %v6050 = vmul.f32 %v5979, %v6006
      %v6051 = vmul.f32 %v5980, %v6006
      %v6052 = vmul.f32 %v5981, %v6006
      %v6053 = vmul.f32 %v5982, %v6006
      %v6054 = vmul.f32 %v5983, %v6006
      %v6055 = vmul.f32 %v5984, %v6006
      %v6056 = vmul.f32 %v5985, %v6006
      %v6057 = vmul.f32 %v5986, %v6006
      %v6058 = vmul.f32 %v5987, %v6006
      %v6059 = vmul.f32 %v5988, %v6006
      %v6060 = vmul.f32 %v5989, %v6006
      %v6061 = vmul.f32 %v5990, %v6006
      %v6062 = vmul.f32 %v5991, %v6006
      %v6063 = vmul.f32 %v5992, %v6006
      %v6064 = vmul.f32 %v5993, %v6006
      %v6065 = vmul.f32 %v5994, %v6006
      %v6066 = vmul.f32 %v5995, %v6006
      %v6067 = vmul.f32 %v5996, %v6006
      %v6068 = vmul.f32 %v5997, %v6006
      %v6069 = vmul.f32 %v5998, %v6006
      %v6070 = vmul.f32 %v5999, %v6006
      %v6071 = vmul.f32 %v6000, %v6006
      %6072 = vadd.xlane.f32.xlu0 %v6008
      %v6073 = vpop.xlane.xlu0 %6072
      %6074 = vadd.xlane.f32.xlu0 %v6009
      %v6075 = vpop.xlane.xlu0 %6074
      %6076 = vadd.xlane.f32.xlu0 %v6010
      %v6077 = vpop.xlane.xlu0 %6076
      %6078 = vadd.xlane.f32.xlu0 %v6011
      %v6079 = vpop.xlane.xlu0 %6078
      %6080 = vadd.xlane.f32.xlu0 %v6012
      %v6081 = vpop.xlane.xlu0 %6080
      %6082 = vadd.xlane.f32.xlu0 %v6013
      %v6083 = vpop.xlane.xlu0 %6082
      %6084 = vadd.xlane.f32.xlu0 %v6014
      %v6085 = vpop.xlane.xlu0 %6084
      %6086 = vadd.xlane.f32.xlu0 %v6015
      %v6087 = vpop.xlane.xlu0 %6086
      %6088 = vadd.xlane.f32.xlu0 %v6016
      %v6089 = vpop.xlane.xlu0 %6088
      %6090 = vadd.xlane.f32.xlu0 %v6017
      %v6091 = vpop.xlane.xlu0 %6090
      %6092 = vadd.xlane.f32.xlu0 %v6018
      %v6093 = vpop.xlane.xlu0 %6092
      %6094 = vadd.xlane.f32.xlu0 %v6019
      %v6095 = vpop.xlane.xlu0 %6094
      %6096 = vadd.xlane.f32.xlu0 %v6020
      %v6097 = vpop.xlane.xlu0 %6096
      %6098 = vadd.xlane.f32.xlu0 %v6021
      %v6099 = vpop.xlane.xlu0 %6098
      %6100 = vadd.xlane.f32.xlu0 %v6022
      %v6101 = vpop.xlane.xlu0 %6100
      %6102 = vadd.xlane.f32.xlu0 %v6023
      %v6103 = vpop.xlane.xlu0 %6102
      %6104 = vadd.xlane.f32.xlu0 %v6024
      %v6105 = vpop.xlane.xlu0 %6104
      %6106 = vadd.xlane.f32.xlu0 %v6025
      %v6107 = vpop.xlane.xlu0 %6106
      %6108 = vadd.xlane.f32.xlu0 %v6026
      %v6109 = vpop.xlane.xlu0 %6108
      %6110 = vadd.xlane.f32.xlu0 %v6027
      %v6111 = vpop.xlane.xlu0 %6110
      %6112 = vadd.xlane.f32.xlu0 %v6028
      %v6113 = vpop.xlane.xlu0 %6112
      %6114 = vadd.xlane.f32.xlu0 %v6029
      %v6115 = vpop.xlane.xlu0 %6114
      %6116 = vadd.xlane.f32.xlu0 %v6030
      %v6117 = vpop.xlane.xlu0 %6116
      %6118 = vadd.xlane.f32.xlu0 %v6031
      %v6119 = vpop.xlane.xlu0 %6118
      %6120 = vadd.xlane.f32.xlu0 %v6032
      %v6121 = vpop.xlane.xlu0 %6120
      %6122 = vadd.xlane.f32.xlu0 %v6033
      %v6123 = vpop.xlane.xlu0 %6122
      %6124 = vadd.xlane.f32.xlu0 %v6034
      %v6125 = vpop.xlane.xlu0 %6124
      %6126 = vadd.xlane.f32.xlu0 %v6035
      %v6127 = vpop.xlane.xlu0 %6126
      %6128 = vadd.xlane.f32.xlu0 %v6036
      %v6129 = vpop.xlane.xlu0 %6128
      %6130 = vadd.xlane.f32.xlu0 %v6037
      %v6131 = vpop.xlane.xlu0 %6130
      %6132 = vadd.xlane.f32.xlu0 %v6038
      %v6133 = vpop.xlane.xlu0 %6132
      %6134 = vadd.xlane.f32.xlu0 %v6039
      %v6135 = vpop.xlane.xlu0 %6134
      %6136 = vadd.xlane.f32.xlu0 %v6040
      %v6137 = vpop.xlane.xlu0 %6136
      %6138 = vadd.xlane.f32.xlu0 %v6041
      %v6139 = vpop.xlane.xlu0 %6138
      %6140 = vadd.xlane.f32.xlu0 %v6042
      %v6141 = vpop.xlane.xlu0 %6140
      %6142 = vadd.xlane.f32.xlu0 %v6043
      %v6143 = vpop.xlane.xlu0 %6142
      %6144 = vadd.xlane.f32.xlu0 %v6044
      %v6145 = vpop.xlane.xlu0 %6144
      %6146 = vadd.xlane.f32.xlu0 %v6045
      %v6147 = vpop.xlane.xlu0 %6146
      %6148 = vadd.xlane.f32.xlu0 %v6046
      %v6149 = vpop.xlane.xlu0 %6148
      %6150 = vadd.xlane.f32.xlu0 %v6047
      %v6151 = vpop.xlane.xlu0 %6150
      %6152 = vadd.xlane.f32.xlu0 %v6048
      %v6153 = vpop.xlane.xlu0 %6152
      %6154 = vadd.xlane.f32.xlu0 %v6049
      %v6155 = vpop.xlane.xlu0 %6154
      %6156 = vadd.xlane.f32.xlu0 %v6050
      %v6157 = vpop.xlane.xlu0 %6156
      %6158 = vadd.xlane.f32.xlu0 %v6051
      %v6159 = vpop.xlane.xlu0 %6158
      %6160 = vadd.xlane.f32.xlu0 %v6052
      %v6161 = vpop.xlane.xlu0 %6160
      %6162 = vadd.xlane.f32.xlu0 %v6053
      %v6163 = vpop.xlane.xlu0 %6162
      %6164 = vadd.xlane.f32.xlu0 %v6054
      %v6165 = vpop.xlane.xlu0 %6164
      %6166 = vadd.xlane.f32.xlu0 %v6055
      %v6167 = vpop.xlane.xlu0 %6166
      %6168 = vadd.xlane.f32.xlu0 %v6056
      %v6169 = vpop.xlane.xlu0 %6168
      %6170 = vadd.xlane.f32.xlu0 %v6057
      %v6171 = vpop.xlane.xlu0 %6170
      %6172 = vadd.xlane.f32.xlu0 %v6058
      %v6173 = vpop.xlane.xlu0 %6172
      %6174 = vadd.xlane.f32.xlu0 %v6059
      %v6175 = vpop.xlane.xlu0 %6174
      %6176 = vadd.xlane.f32.xlu0 %v6060
      %v6177 = vpop.xlane.xlu0 %6176
      %6178 = vadd.xlane.f32.xlu0 %v6061
      %v6179 = vpop.xlane.xlu0 %6178
      %6180 = vadd.xlane.f32.xlu0 %v6062
      %v6181 = vpop.xlane.xlu0 %6180
      %6182 = vadd.xlane.f32.xlu0 %v6063
      %v6183 = vpop.xlane.xlu0 %6182
      %6184 = vadd.xlane.f32.xlu0 %v6064
      %v6185 = vpop.xlane.xlu0 %6184
      %6186 = vadd.xlane.f32.xlu0 %v6065
      %v6187 = vpop.xlane.xlu0 %6186
      %6188 = vadd.xlane.f32.xlu0 %v6066
      %v6189 = vpop.xlane.xlu0 %6188
      %6190 = vadd.xlane.f32.xlu0 %v6067
      %v6191 = vpop.xlane.xlu0 %6190
      %6192 = vadd.xlane.f32.xlu0 %v6068
      %v6193 = vpop.xlane.xlu0 %6192
      %6194 = vadd.xlane.f32.xlu0 %v6069
      %v6195 = vpop.xlane.xlu0 %6194
      %6196 = vadd.xlane.f32.xlu0 %v6070
      %v6197 = vpop.xlane.xlu0 %6196
      %6198 = vadd.xlane.f32.xlu0 %v6071
      %v6199 = vpop.xlane.xlu0 %6198
      %vm6200 = vcmask 7168
      %6201 = vst.msk [vmem:[%s469] sm:$0xff] %vm6200, %v6073
      %6202 = vst.msk [vmem:[%s469 + $0x8] sm:$0xff] %vm6200, %v6075
      %6203 = vst.msk [vmem:[%s469 + $0x10] sm:$0xff] %vm6200, %v6077
      %6204 = vst.msk [vmem:[%s469 + $0x18] sm:$0xff] %vm6200, %v6079
      %6205 = vst.msk [vmem:[%s469 + $0x20] sm:$0xff] %vm6200, %v6081
      %6206 = vst.msk [vmem:[%s469 + $0x28] sm:$0xff] %vm6200, %v6083
      %6207 = vst.msk [vmem:[%s469 + $0x30] sm:$0xff] %vm6200, %v6085
      %6208 = vst.msk [vmem:[%s469 + $0x38] sm:$0xff] %vm6200, %v6087
      %6209 = vst.msk [vmem:[%s469 + $0x40] sm:$0xff] %vm6200, %v6089
      %6210 = vst.msk [vmem:[%s469 + $0x48] sm:$0xff] %vm6200, %v6091
      %6211 = vst.msk [vmem:[%s469 + $0x50] sm:$0xff] %vm6200, %v6093
      %6212 = vst.msk [vmem:[%s469 + $0x58] sm:$0xff] %vm6200, %v6095
      %6213 = vst.msk [vmem:[%s469 + $0x60] sm:$0xff] %vm6200, %v6097
      %6214 = vst.msk [vmem:[%s469 + $0x68] sm:$0xff] %vm6200, %v6099
      %6215 = vst.msk [vmem:[%s469 + $0x70] sm:$0xff] %vm6200, %v6101
      %6216 = vst.msk [vmem:[%s469 + $0x78] sm:$0xff] %vm6200, %v6103
      %6217 = vst.msk [vmem:[%s469 + $0x80] sm:$0xff] %vm6200, %v6105
      %6218 = vst.msk [vmem:[%s469 + $0x88] sm:$0xff] %vm6200, %v6107
      %6219 = vst.msk [vmem:[%s469 + $0x90] sm:$0xff] %vm6200, %v6109
      %6220 = vst.msk [vmem:[%s469 + $0x98] sm:$0xff] %vm6200, %v6111
      %6221 = vst.msk [vmem:[%s469 + $0xa0] sm:$0xff] %vm6200, %v6113
      %6222 = vst.msk [vmem:[%s469 + $0xa8] sm:$0xff] %vm6200, %v6115
      %6223 = vst.msk [vmem:[%s469 + $0xb0] sm:$0xff] %vm6200, %v6117
      %6224 = vst.msk [vmem:[%s469 + $0xb8] sm:$0xff] %vm6200, %v6119
      %6225 = vst.msk [vmem:[%s469 + $0xc0] sm:$0xff] %vm6200, %v6121
      %6226 = vst.msk [vmem:[%s469 + $0xc8] sm:$0xff] %vm6200, %v6123
      %6227 = vst.msk [vmem:[%s469 + $0xd0] sm:$0xff] %vm6200, %v6125
      %6228 = vst.msk [vmem:[%s469 + $0xd8] sm:$0xff] %vm6200, %v6127
      %6229 = vst.msk [vmem:[%s469 + $0xe0] sm:$0xff] %vm6200, %v6129
      %6230 = vst.msk [vmem:[%s469 + $0xe8] sm:$0xff] %vm6200, %v6131
      %6231 = vst.msk [vmem:[%s469 + $0xf0] sm:$0xff] %vm6200, %v6133
      %6232 = vst.msk [vmem:[%s469 + $0xf8] sm:$0xff] %vm6200, %v6135
      %6233 = vst.msk [vmem:[%s469 + $0x100] sm:$0xff] %vm6200, %v6137
      %6234 = vst.msk [vmem:[%s469 + $0x108] sm:$0xff] %vm6200, %v6139
      %6235 = vst.msk [vmem:[%s469 + $0x110] sm:$0xff] %vm6200, %v6141
      %6236 = vst.msk [vmem:[%s469 + $0x118] sm:$0xff] %vm6200, %v6143
      %6237 = vst.msk [vmem:[%s469 + $0x120] sm:$0xff] %vm6200, %v6145
      %6238 = vst.msk [vmem:[%s469 + $0x128] sm:$0xff] %vm6200, %v6147
      %6239 = vst.msk [vmem:[%s469 + $0x130] sm:$0xff] %vm6200, %v6149
      %6240 = vst.msk [vmem:[%s469 + $0x138] sm:$0xff] %vm6200, %v6151
      %6241 = vst.msk [vmem:[%s469 + $0x140] sm:$0xff] %vm6200, %v6153
      %6242 = vst.msk [vmem:[%s469 + $0x148] sm:$0xff] %vm6200, %v6155
      %6243 = vst.msk [vmem:[%s469 + $0x150] sm:$0xff] %vm6200, %v6157
      %6244 = vst.msk [vmem:[%s469 + $0x158] sm:$0xff] %vm6200, %v6159
      %6245 = vst.msk [vmem:[%s469 + $0x160] sm:$0xff] %vm6200, %v6161
      %6246 = vst.msk [vmem:[%s469 + $0x168] sm:$0xff] %vm6200, %v6163
      %6247 = vst.msk [vmem:[%s469 + $0x170] sm:$0xff] %vm6200, %v6165
      %6248 = vst.msk [vmem:[%s469 + $0x178] sm:$0xff] %vm6200, %v6167
      %6249 = vst.msk [vmem:[%s469 + $0x180] sm:$0xff] %vm6200, %v6169
      %6250 = vst.msk [vmem:[%s469 + $0x188] sm:$0xff] %vm6200, %v6171
      %6251 = vst.msk [vmem:[%s469 + $0x190] sm:$0xff] %vm6200, %v6173
      %6252 = vst.msk [vmem:[%s469 + $0x198] sm:$0xff] %vm6200, %v6175
      %6253 = vst.msk [vmem:[%s469 + $0x1a0] sm:$0xff] %vm6200, %v6177
      %6254 = vst.msk [vmem:[%s469 + $0x1a8] sm:$0xff] %vm6200, %v6179
      %6255 = vst.msk [vmem:[%s469 + $0x1b0] sm:$0xff] %vm6200, %v6181
      %6256 = vst.msk [vmem:[%s469 + $0x1b8] sm:$0xff] %vm6200, %v6183
      %6257 = vst.msk [vmem:[%s469 + $0x1c0] sm:$0xff] %vm6200, %v6185
      %6258 = vst.msk [vmem:[%s469 + $0x1c8] sm:$0xff] %vm6200, %v6187
      %6259 = vst.msk [vmem:[%s469 + $0x1d0] sm:$0xff] %vm6200, %v6189
      %6260 = vst.msk [vmem:[%s469 + $0x1d8] sm:$0xff] %vm6200, %v6191
      %6261 = vst.msk [vmem:[%s469 + $0x1e0] sm:$0xff] %vm6200, %v6193
      %6262 = vst.msk [vmem:[%s469 + $0x1e8] sm:$0xff] %vm6200, %v6195
      %6263 = vst.msk [vmem:[%s469 + $0x1f0] sm:$0xff] %vm6200, %v6197
      %6264 = vst.msk [vmem:[%s469 + $0x1f8] sm:$0xff] %vm6200, %v6199
      %s6265 = smul.u32 64, %s25
      %p6266 = scmp.lt.s32.totalorder %s6265, 127
      %s6267 = scalar_select %p6266, %s6265, 127
      %s6268 = smul.addr %s6267, 8
      %s6269 = scalar_lea.vmem %s14, %s6268
      // Predicated region
      $region77: #{tpu_custom_call.1} parent=75 // pred_check
        %p6270 = pneg %p342
      $region78: #{tpu_custom_call.1} parent=75 // pred_check_branch
        %6272 = sbr.rel (%p6270) target = $region80
      $region79: #{tpu_custom_call.1} parent=75 // pred_region
        %s6273 = smul.u32 64, %s25
      $region80: #{tpu_custom_call.1} parent=75 // pred_fallthru
        _
    $region76: #{tpu_custom_call.1} parent=5 // pred_fallthru
      _
    %p6274 = scmp.le.s32.totalorder 2, %s20
    // Predicated region
    $region81: #{tpu_custom_call.1} parent=5 // pred_check
      %p6275 = pneg %p6274
    $region82: #{tpu_custom_call.1} parent=5 // pred_check_branch
      %6277 = sbr.rel (%p6275) target = $region84
    $region83: #{tpu_custom_call.1} parent=5 // pred_region
      %s6278 = ssub.s32 %s20, 2
      // Predicated region
      $region85: #{tpu_custom_call.1} parent=83 // pred_check
        %p6279 = pneg %p348
      $region86: #{tpu_custom_call.1} parent=83 // pred_check_branch
        %6281 = sbr.rel (%p6279) target = $region88
      $region87: #{tpu_custom_call.1} parent=83 // pred_region
        %s6282 = smul.u32 64, %s26
        %p6283 = scmp.lt.s32.totalorder %s6282, 127
        %s6284 = scalar_select %p6283, %s6282, 127
        %s6285 = smul.addr %s6284, 8
        %s6286 = scalar_lea.vmem %s14, %s6285
      $region88: #{tpu_custom_call.1} parent=83 // pred_fallthru
        _
    $region84: #{tpu_custom_call.1} parent=5 // pred_fallthru
      _
  $region6: #{tpu_custom_call.1} parent=0 // loop_footer
    %s24 = sadd.s32 1, %s20
  $region7: #{tpu_custom_call.1} parent=0 // loop_footer_branch
    %19 = sbr.rel target = $region3
  $region8: #{tpu_custom_call.1} parent=0 // loop_exit
    _

</llo_original>
